<compile_context>
chip_gen: v6e
topology: v6e:2x2x1
jax: 0.10.0
libtpu: 0.0.40
codegen_flags: <defaults>
</compile_context>

<pallas_src>
import functools
import math

import jax
import jax.numpy as jnp
from jax import lax
from jax.experimental import pallas as pl
from jax.experimental.pallas import tpu as pltpu


def _round_up(x, m):
    return (x + m - 1) // m * m


def _choose_row_pitch(H, W):
    """Smallest row pitch >= W+1 such that H*pitch % 128 == 0.

    Keeping the flattened spatial axis a multiple of 128 lanes makes every lane-roll
    and the output store operate on a fully lane-aligned (unmasked) slab.
    """
    step = 128 // math.gcd(H, 128)
    return _round_up(W + 1, step)


# ----------------------------- fused Pallas kernel ---------------------------------
def _conv3x3(x, w_ref, b_ref, q_idx, *, P, d_list):
    """3x3 / pad=1 conv as 9 lane-rolled matmuls with chained accumulation.

    x      : (Cin, P)  activation in flattened row space (junk columns are zero)
    w_ref  : (9, Cout, Cin) folded conv weights, tap t = kh*3 + kw
    b_ref  : (Cout, 1) folded BN bias
    q_idx  : (1, P) int32 lane iota
    returns: (Cout, P) f32 pre-activation
    """
    acc = None
    for t, d in enumerate(d_list):
        if d == 0:
            win = x
        else:
            # win[:, q] = x[:, q + d] if 0 <= q + d < P else 0  (the zero padding ring)
            win = pltpu.roll(x, shift=(-d) % P, axis=1)
            if d > 0:
                win = jnp.where(q_idx < P - d, win, 0)
            else:
                win = jnp.where(q_idx >= -d, win, 0)
        part = jnp.dot(w_ref[t], win, preferred_element_type=jnp.float32)
        acc = part if acc is None else acc + part   # single chained accumulator
    return acc + b_ref[...]                         # bias folded into the epilogue


def _fused_kernel(x_ref, w1_ref, b1_ref, w2_ref, b2_ref, o_ref, *, H, W, Wp):
    """Two fused conv3x3(pad=1) + folded-BN + ReLU layers for one image.

    x_ref : (Cin, P) channels-major input, rows of pitch Wp, junk columns zeroed
    o_ref : (C2, P)  layer-2 output in the same flattened row space (lane-dense)
    """
    P = H * Wp
    # tap offset (in flattened row space) relative to the output position
    d_list = [(kh - 1) * Wp + (kw - 1) for kh in range(3) for kw in range(3)]
    q_idx = lax.broadcasted_iota(jnp.int32, (1, P), 1)

    # ---- layer 1 ----
    x = x_ref[...]
    y1 = jnp.maximum(_conv3x3(x, w1_ref, b1_ref, q_idx, P=P, d_list=d_list), 0.0)

    # Zero the junk columns (col >= W): they are exactly the zero padding ring that
    # layer 2 needs.  col = q mod Wp, computed in f32 (floor trick) to avoid integer
    # div/rem on the VPU.
    qf = q_idx.astype(jnp.float32)
    col = qf - jnp.floor((qf + 0.5) * (1.0 / Wp)) * Wp
    y1 = jnp.where(col < W - 0.5, y1, 0.0).astype(x.dtype)

    # ---- layer 2 (y1 never leaves VMEM/vregs) ----
    y2 = jnp.maximum(_conv3x3(y1, w2_ref, b2_ref, q_idx, P=P, d_list=d_list), 0.0)
    o_ref[...] = y2.astype(o_ref.dtype)


# --------------------------------- wrapper ------------------------------------------
def _fold_bn_into_conv(w_hwio, conv_bias, gamma, beta, mean, var, eps=1e-5):
    """Fold eval-mode BN into the conv: returns (w_taps (9, Cout, Cin), bias (Cout, 1))."""
    scale = gamma / jnp.sqrt(var + eps)                  # (Cout,)
    w_folded = w_hwio * scale                            # broadcast over Cout axis
    bias = beta + (conv_bias - mean) * scale             # (Cout,)
    kh, kw, cin, cout = w_hwio.shape
    w_taps = jnp.transpose(w_folded, (0, 1, 3, 2)).reshape(kh * kw, cout, cin)
    return w_taps.astype(jnp.float32), bias.reshape(cout, 1).astype(jnp.float32)


def _stacked2block_forward(x_nchw, params, *, mxu_dtype):
    N, Cin, H, W = x_nchw.shape
    w1t, b1 = _fold_bn_into_conv(*params["layer1"])
    w2t, b2 = _fold_bn_into_conv(*params["layer2"])
    C1, C2 = w1t.shape[1], w2t.shape[1]

    Wp = _choose_row_pitch(H, W)          # e.g. 24 for W=16, H=16  ->  P = 384
    P = H * Wp

    # NCHW -> channels-major flattened rows (N, Cin, P); the (Wp - W) pad columns are
    # zero and double as the left/right conv padding ring.  Cast here for the bf16 path.
    x_rows = jnp.pad(x_nchw, ((0, 0), (0, 0), (0, 0), (0, Wp - W)))
    x_rows = x_rows.reshape(N, Cin, P).astype(mxu_dtype)

    kernel = functools.partial(_fused_kernel, H=H, W=W, Wp=Wp)

    out_flat = pl.pallas_call(
        kernel,
        out_shape=jax.ShapeDtypeStruct((N, C2, P), jnp.float32),
        grid_spec=pltpu.PrefetchScalarGridSpec(
            num_scalar_prefetch=0,
            grid=(N,),
            in_specs=[
                pl.BlockSpec((None, Cin, P), lambda n: (n, 0, 0)),
                pl.BlockSpec((9, C1, Cin), lambda n: (0, 0, 0)),
                pl.BlockSpec((C1, 1), lambda n: (0, 0)),
                pl.BlockSpec((9, C2, C1), lambda n: (0, 0, 0)),
                pl.BlockSpec((C2, 1), lambda n: (0, 0)),
            ],
            out_specs=pl.BlockSpec((None, C2, P), lambda n: (n, 0, 0)),
        ),
        compiler_params=pltpu.CompilerParams(
            dimension_semantics=("parallel",)),
    )(x_rows, w1t.astype(mxu_dtype), b1, w2t.astype(mxu_dtype), b2)

    # (N, C2, P) -> (N, C2, H, Wp) -> crop junk columns -> already NCHW.
    return out_flat.reshape(N, C2, H, Wp)[:, :, :, :W]


stacked2block_forward_f32 = jax.jit(
    functools.partial(_stacked2block_forward, mxu_dtype=jnp.float32))
stacked2block_forward_bf16 = jax.jit(
    functools.partial(_stacked2block_forward, mxu_dtype=jnp.bfloat16))


# ----------------------------- pure-JAX reference ------------------------------------
def _reference_layer(x_nhwc, w_hwio, conv_bias, gamma, beta, mean, var, eps=1e-5):
    y = lax.conv_general_dilated(
        x_nhwc.astype(jnp.float32), w_hwio.astype(jnp.float32),
        window_strides=(1, 1), padding=((1, 1), (1, 1)),
        dimension_numbers=("NHWC", "HWIO", "NHWC"))
    y = y + conv_bias
    y = (y - mean) / jnp.sqrt(var + eps) * gamma + beta
    return jnp.maximum(y, 0.0)


def reference_forward(x_nchw, params):
    x = jnp.transpose(x_nchw, (0, 2, 3, 1))
    x = _reference_layer(x, *params["layer1"])
    x = _reference_layer(x, *params["layer2"])
    return jnp.transpose(x, (0, 3, 1, 2))


# ------------------------------- param init ------------------------------------------
def init_params(key, in_channels, out_channels):
    def layer(key, cin, cout):
        ks = jax.random.split(key, 6)
        fan_in = cin * 9
        w = jax.random.normal(ks[0], (3, 3, cin, cout), jnp.float32) / jnp.sqrt(fan_in)
        b = 0.05 * jax.random.normal(ks[1], (cout,), jnp.float32)
        gamma = 1.0 + 0.1 * jax.random.normal(ks[2], (cout,), jnp.float32)
        beta = 0.1 * jax.random.normal(ks[3], (cout,), jnp.float32)
        mean = 0.1 * jax.random.normal(ks[4], (cout,), jnp.float32)
        var = 1.0 + 0.1 * jax.random.uniform(ks[5], (cout,), jnp.float32)
        return (w, b, gamma, beta, mean, var)

    k1, k2 = jax.random.split(key)
    return {
        "layer1": layer(k1, in_channels, out_channels),
        "layer2": layer(k2, out_channels, out_channels),
    }


# ----------------------------------- main ---------------------------------------------
if __name__ == "__main__":
    key = jax.random.PRNGKey(0)
    kx, kp = jax.random.split(key)

    N, Cin, H, W = 2, 4, 16, 16
    Cout = 8
    x = jax.random.normal(kx, (N, Cin, H, W), jnp.float32)
    params = init_params(kp, Cin, Cout)

    ref = reference_forward(x, params)

    # f32 MXU operands: tight check against the XLA conv reference.
    out = jax.block_until_ready(stacked2block_forward_f32(x, params))
    assert out.shape == (N, Cout, H, W), out.shape
    err = float(jnp.max(jnp.abs(out - ref)))
    assert err < 2e-3, f"f32 path max |err| = {err}"

    # bf16 MXU operands (f32 accumulation): perf path for v6e/v7x, looser tolerance.
    out_bf16 = jax.block_until_ready(stacked2block_forward_bf16(x, params))
    err_bf16 = float(jnp.max(jnp.abs(out_bf16 - ref)))
    assert err_bf16 < 5e-2, f"bf16 path max |err| = {err_bf16}"

    print("KERNEL_OK")
</pallas_src>

<mosaic_0001>
module attributes {stable_mosaic.version = 11 : i64} {
  func.func @_fused_kernel(%arg0: i32, %arg1: memref<1x4x384xf32, #tpu.memory_space<vmem>>, %arg2: memref<9x8x4xf32, #tpu.memory_space<vmem>>, %arg3: memref<8x1xf32, #tpu.memory_space<vmem>>, %arg4: memref<9x8x8xf32, #tpu.memory_space<vmem>>, %arg5: memref<8x1xf32, #tpu.memory_space<vmem>>, %arg6: memref<1x8x384xf32, #tpu.memory_space<vmem>>) attributes {dimension_semantics = [#tpu.dimension_semantics<parallel>], iteration_bounds = array<i64: 2>, scalar_prefetch = 0 : i64, scratch_operands = 0 : i64, tpu.core_type = #tpu.core_type<tc>, window_params = [{transform_indices = @transform_0, window_bounds = array<i64: 1, 4, 384>}, {pipeline_mode = #tpu.pipeline_mode<synchronous>, transform_indices = @transform_1, window_bounds = array<i64: 9, 8, 4>}, {pipeline_mode = #tpu.pipeline_mode<synchronous>, transform_indices = @transform_2, window_bounds = array<i64: 8, 1>}, {pipeline_mode = #tpu.pipeline_mode<synchronous>, transform_indices = @transform_3, window_bounds = array<i64: 9, 8, 8>}, {pipeline_mode = #tpu.pipeline_mode<synchronous>, transform_indices = @transform_4, window_bounds = array<i64: 8, 1>}, {transform_indices = @transform_5, window_bounds = array<i64: 1, 8, 384>}]} {
    %0 = tpu.iota {dimensions = array<i32: 1>} : vector<1x384xi32>
    %c0 = arith.constant 0 : index
    %c0_0 = arith.constant 0 : index
    %c0_1 = arith.constant 0 : index
    %1 = vector.load %arg1[%c0, %c0_0, %c0_1] : memref<1x4x384xf32, #tpu.memory_space<vmem>>, vector<1x4x384xf32>
    %2 = vector.shape_cast %1 : vector<1x4x384xf32> to vector<4x384xf32>
    %c25_i32 = arith.constant 25 : i32
    %3 = tpu.dynamic_rotate %2 by %c25_i32 dim 1 : vector<4x384xf32>, i32 -> vector<4x384xf32>
    %c25_i32_2 = arith.constant 25 : i32
    %4 = vector.broadcast %c25_i32_2 : i32 to vector<1x384xi32>
    %5 = arith.cmpi sge, %0, %4 : vector<1x384xi32>
    %c0_i32 = arith.constant 0 : i32
    %6 = arith.sitofp %c0_i32 : i32 to f32
    %7 = vector.shape_cast %5 : vector<1x384xi1> to vector<1x384xi1>
    %8 = vector.broadcast %7 : vector<1x384xi1> to vector<4x384xi1>
    %9 = vector.broadcast %6 : f32 to vector<4x384xf32>
    %10 = arith.select %8, %3, %9 : vector<4x384xi1>, vector<4x384xf32>
    %c0_3 = arith.constant 0 : index
    %c0_4 = arith.constant 0 : index
    %c0_5 = arith.constant 0 : index
    %11 = vector.load %arg2[%c0_3, %c0_4, %c0_5] : memref<9x8x4xf32, #tpu.memory_space<vmem>>, vector<1x8x4xf32>
    %12 = vector.shape_cast %11 : vector<1x8x4xf32> to vector<8x4xf32>
    %cst = arith.constant dense<0.000000e+00> : vector<8x384xf32>
    %13 = tpu.matmul %12, %10, %cst {dimension_numbers = #tpu.dot_dimension_numbers<[1], [0], [0], [1], [0, 0, 1, 1], [], []>} : vector<8x4xf32>, vector<4x384xf32>, vector<8x384xf32> -> vector<8x384xf32>
    %c24_i32 = arith.constant 24 : i32
    %14 = tpu.dynamic_rotate %2 by %c24_i32 dim 1 : vector<4x384xf32>, i32 -> vector<4x384xf32>
    %c24_i32_6 = arith.constant 24 : i32
    %15 = vector.broadcast %c24_i32_6 : i32 to vector<1x384xi32>
    %16 = arith.cmpi sge, %0, %15 : vector<1x384xi32>
    %c0_i32_7 = arith.constant 0 : i32
    %17 = arith.sitofp %c0_i32_7 : i32 to f32
    %18 = vector.shape_cast %16 : vector<1x384xi1> to vector<1x384xi1>
    %19 = vector.broadcast %18 : vector<1x384xi1> to vector<4x384xi1>
    %20 = vector.broadcast %17 : f32 to vector<4x384xf32>
    %21 = arith.select %19, %14, %20 : vector<4x384xi1>, vector<4x384xf32>
    %c1 = arith.constant 1 : index
    %c0_8 = arith.constant 0 : index
    %c0_9 = arith.constant 0 : index
    %22 = vector.load %arg2[%c1, %c0_8, %c0_9] : memref<9x8x4xf32, #tpu.memory_space<vmem>>, vector<1x8x4xf32>
    %23 = vector.shape_cast %22 : vector<1x8x4xf32> to vector<8x4xf32>
    %cst_10 = arith.constant dense<0.000000e+00> : vector<8x384xf32>
    %24 = tpu.matmul %23, %21, %cst_10 {dimension_numbers = #tpu.dot_dimension_numbers<[1], [0], [0], [1], [0, 0, 1, 1], [], []>} : vector<8x4xf32>, vector<4x384xf32>, vector<8x384xf32> -> vector<8x384xf32>
    %25 = arith.addf %13, %24 : vector<8x384xf32>
    %c23_i32 = arith.constant 23 : i32
    %26 = tpu.dynamic_rotate %2 by %c23_i32 dim 1 : vector<4x384xf32>, i32 -> vector<4x384xf32>
    %c23_i32_11 = arith.constant 23 : i32
    %27 = vector.broadcast %c23_i32_11 : i32 to vector<1x384xi32>
    %28 = arith.cmpi sge, %0, %27 : vector<1x384xi32>
    %c0_i32_12 = arith.constant 0 : i32
    %29 = arith.sitofp %c0_i32_12 : i32 to f32
    %30 = vector.shape_cast %28 : vector<1x384xi1> to vector<1x384xi1>
    %31 = vector.broadcast %30 : vector<1x384xi1> to vector<4x384xi1>
    %32 = vector.broadcast %29 : f32 to vector<4x384xf32>
    %33 = arith.select %31, %26, %32 : vector<4x384xi1>, vector<4x384xf32>
    %c2 = arith.constant 2 : index
    %c0_13 = arith.constant 0 : index
    %c0_14 = arith.constant 0 : index
    %34 = vector.load %arg2[%c2, %c0_13, %c0_14] : memref<9x8x4xf32, #tpu.memory_space<vmem>>, vector<1x8x4xf32>
    %35 = vector.shape_cast %34 : vector<1x8x4xf32> to vector<8x4xf32>
    %cst_15 = arith.constant dense<0.000000e+00> : vector<8x384xf32>
    %36 = tpu.matmul %35, %33, %cst_15 {dimension_numbers = #tpu.dot_dimension_numbers<[1], [0], [0], [1], [0, 0, 1, 1], [], []>} : vector<8x4xf32>, vector<4x384xf32>, vector<8x384xf32> -> vector<8x384xf32>
    %37 = arith.addf %25, %36 : vector<8x384xf32>
    %c1_i32 = arith.constant 1 : i32
    %38 = tpu.dynamic_rotate %2 by %c1_i32 dim 1 : vector<4x384xf32>, i32 -> vector<4x384xf32>
    %c1_i32_16 = arith.constant 1 : i32
    %39 = vector.broadcast %c1_i32_16 : i32 to vector<1x384xi32>
    %40 = arith.cmpi sge, %0, %39 : vector<1x384xi32>
    %c0_i32_17 = arith.constant 0 : i32
    %41 = arith.sitofp %c0_i32_17 : i32 to f32
    %42 = vector.shape_cast %40 : vector<1x384xi1> to vector<1x384xi1>
    %43 = vector.broadcast %42 : vector<1x384xi1> to vector<4x384xi1>
    %44 = vector.broadcast %41 : f32 to vector<4x384xf32>
    %45 = arith.select %43, %38, %44 : vector<4x384xi1>, vector<4x384xf32>
    %c3 = arith.constant 3 : index
    %c0_18 = arith.constant 0 : index
    %c0_19 = arith.constant 0 : index
    %46 = vector.load %arg2[%c3, %c0_18, %c0_19] : memref<9x8x4xf32, #tpu.memory_space<vmem>>, vector<1x8x4xf32>
    %47 = vector.shape_cast %46 : vector<1x8x4xf32> to vector<8x4xf32>
    %cst_20 = arith.constant dense<0.000000e+00> : vector<8x384xf32>
    %48 = tpu.matmul %47, %45, %cst_20 {dimension_numbers = #tpu.dot_dimension_numbers<[1], [0], [0], [1], [0, 0, 1, 1], [], []>} : vector<8x4xf32>, vector<4x384xf32>, vector<8x384xf32> -> vector<8x384xf32>
    %49 = arith.addf %37, %48 : vector<8x384xf32>
    %c4 = arith.constant 4 : index
    %c0_21 = arith.constant 0 : index
    %c0_22 = arith.constant 0 : index
    %50 = vector.load %arg2[%c4, %c0_21, %c0_22] : memref<9x8x4xf32, #tpu.memory_space<vmem>>, vector<1x8x4xf32>
    %51 = vector.shape_cast %50 : vector<1x8x4xf32> to vector<8x4xf32>
    %cst_23 = arith.constant dense<0.000000e+00> : vector<8x384xf32>
    %52 = tpu.matmul %51, %2, %cst_23 {dimension_numbers = #tpu.dot_dimension_numbers<[1], [0], [0], [1], [0, 0, 1, 1], [], []>} : vector<8x4xf32>, vector<4x384xf32>, vector<8x384xf32> -> vector<8x384xf32>
    %53 = arith.addf %49, %52 : vector<8x384xf32>
    %c383_i32 = arith.constant 383 : i32
    %54 = tpu.dynamic_rotate %2 by %c383_i32 dim 1 : vector<4x384xf32>, i32 -> vector<4x384xf32>
    %c383_i32_24 = arith.constant 383 : i32
    %55 = vector.broadcast %c383_i32_24 : i32 to vector<1x384xi32>
    %56 = arith.cmpi slt, %0, %55 : vector<1x384xi32>
    %c0_i32_25 = arith.constant 0 : i32
    %57 = arith.sitofp %c0_i32_25 : i32 to f32
    %58 = vector.shape_cast %56 : vector<1x384xi1> to vector<1x384xi1>
    %59 = vector.broadcast %58 : vector<1x384xi1> to vector<4x384xi1>
    %60 = vector.broadcast %57 : f32 to vector<4x384xf32>
    %61 = arith.select %59, %54, %60 : vector<4x384xi1>, vector<4x384xf32>
    %c5 = arith.constant 5 : index
    %c0_26 = arith.constant 0 : index
    %c0_27 = arith.constant 0 : index
    %62 = vector.load %arg2[%c5, %c0_26, %c0_27] : memref<9x8x4xf32, #tpu.memory_space<vmem>>, vector<1x8x4xf32>
    %63 = vector.shape_cast %62 : vector<1x8x4xf32> to vector<8x4xf32>
    %cst_28 = arith.constant dense<0.000000e+00> : vector<8x384xf32>
    %64 = tpu.matmul %63, %61, %cst_28 {dimension_numbers = #tpu.dot_dimension_numbers<[1], [0], [0], [1], [0, 0, 1, 1], [], []>} : vector<8x4xf32>, vector<4x384xf32>, vector<8x384xf32> -> vector<8x384xf32>
    %65 = arith.addf %53, %64 : vector<8x384xf32>
    %c361_i32 = arith.constant 361 : i32
    %66 = tpu.dynamic_rotate %2 by %c361_i32 dim 1 : vector<4x384xf32>, i32 -> vector<4x384xf32>
    %c361_i32_29 = arith.constant 361 : i32
    %67 = vector.broadcast %c361_i32_29 : i32 to vector<1x384xi32>
    %68 = arith.cmpi slt, %0, %67 : vector<1x384xi32>
    %c0_i32_30 = arith.constant 0 : i32
    %69 = arith.sitofp %c0_i32_30 : i32 to f32
    %70 = vector.shape_cast %68 : vector<1x384xi1> to vector<1x384xi1>
    %71 = vector.broadcast %70 : vector<1x384xi1> to vector<4x384xi1>
    %72 = vector.broadcast %69 : f32 to vector<4x384xf32>
    %73 = arith.select %71, %66, %72 : vector<4x384xi1>, vector<4x384xf32>
    %c6 = arith.constant 6 : index
    %c0_31 = arith.constant 0 : index
    %c0_32 = arith.constant 0 : index
    %74 = vector.load %arg2[%c6, %c0_31, %c0_32] : memref<9x8x4xf32, #tpu.memory_space<vmem>>, vector<1x8x4xf32>
    %75 = vector.shape_cast %74 : vector<1x8x4xf32> to vector<8x4xf32>
    %cst_33 = arith.constant dense<0.000000e+00> : vector<8x384xf32>
    %76 = tpu.matmul %75, %73, %cst_33 {dimension_numbers = #tpu.dot_dimension_numbers<[1], [0], [0], [1], [0, 0, 1, 1], [], []>} : vector<8x4xf32>, vector<4x384xf32>, vector<8x384xf32> -> vector<8x384xf32>
    %77 = arith.addf %65, %76 : vector<8x384xf32>
    %c360_i32 = arith.constant 360 : i32
    %78 = tpu.dynamic_rotate %2 by %c360_i32 dim 1 : vector<4x384xf32>, i32 -> vector<4x384xf32>
    %c360_i32_34 = arith.constant 360 : i32
    %79 = vector.broadcast %c360_i32_34 : i32 to vector<1x384xi32>
    %80 = arith.cmpi slt, %0, %79 : vector<1x384xi32>
    %c0_i32_35 = arith.constant 0 : i32
    %81 = arith.sitofp %c0_i32_35 : i32 to f32
    %82 = vector.shape_cast %80 : vector<1x384xi1> to vector<1x384xi1>
    %83 = vector.broadcast %82 : vector<1x384xi1> to vector<4x384xi1>
    %84 = vector.broadcast %81 : f32 to vector<4x384xf32>
    %85 = arith.select %83, %78, %84 : vector<4x384xi1>, vector<4x384xf32>
    %c7 = arith.constant 7 : index
    %c0_36 = arith.constant 0 : index
    %c0_37 = arith.constant 0 : index
    %86 = vector.load %arg2[%c7, %c0_36, %c0_37] : memref<9x8x4xf32, #tpu.memory_space<vmem>>, vector<1x8x4xf32>
    %87 = vector.shape_cast %86 : vector<1x8x4xf32> to vector<8x4xf32>
    %cst_38 = arith.constant dense<0.000000e+00> : vector<8x384xf32>
    %88 = tpu.matmul %87, %85, %cst_38 {dimension_numbers = #tpu.dot_dimension_numbers<[1], [0], [0], [1], [0, 0, 1, 1], [], []>} : vector<8x4xf32>, vector<4x384xf32>, vector<8x384xf32> -> vector<8x384xf32>
    %89 = arith.addf %77, %88 : vector<8x384xf32>
    %c359_i32 = arith.constant 359 : i32
    %90 = tpu.dynamic_rotate %2 by %c359_i32 dim 1 : vector<4x384xf32>, i32 -> vector<4x384xf32>
    %c359_i32_39 = arith.constant 359 : i32
    %91 = vector.broadcast %c359_i32_39 : i32 to vector<1x384xi32>
    %92 = arith.cmpi slt, %0, %91 : vector<1x384xi32>
    %c0_i32_40 = arith.constant 0 : i32
    %93 = arith.sitofp %c0_i32_40 : i32 to f32
    %94 = vector.shape_cast %92 : vector<1x384xi1> to vector<1x384xi1>
    %95 = vector.broadcast %94 : vector<1x384xi1> to vector<4x384xi1>
    %96 = vector.broadcast %93 : f32 to vector<4x384xf32>
    %97 = arith.select %95, %90, %96 : vector<4x384xi1>, vector<4x384xf32>
    %c8 = arith.constant 8 : index
    %c0_41 = arith.constant 0 : index
    %c0_42 = arith.constant 0 : index
    %98 = vector.load %arg2[%c8, %c0_41, %c0_42] : memref<9x8x4xf32, #tpu.memory_space<vmem>>, vector<1x8x4xf32>
    %99 = vector.shape_cast %98 : vector<1x8x4xf32> to vector<8x4xf32>
    %cst_43 = arith.constant dense<0.000000e+00> : vector<8x384xf32>
    %100 = tpu.matmul %99, %97, %cst_43 {dimension_numbers = #tpu.dot_dimension_numbers<[1], [0], [0], [1], [0, 0, 1, 1], [], []>} : vector<8x4xf32>, vector<4x384xf32>, vector<8x384xf32> -> vector<8x384xf32>
    %101 = arith.addf %89, %100 : vector<8x384xf32>
    %c0_44 = arith.constant 0 : index
    %c0_45 = arith.constant 0 : index
    %102 = vector.load %arg3[%c0_44, %c0_45] : memref<8x1xf32, #tpu.memory_space<vmem>>, vector<8x1xf32>
    %103 = vector.broadcast %102 : vector<8x1xf32> to vector<8x384xf32>
    %104 = arith.addf %101, %103 : vector<8x384xf32>
    %cst_46 = arith.constant 0.000000e+00 : f32
    %105 = vector.broadcast %cst_46 : f32 to vector<8x384xf32>
    %106 = arith.maximumf %104, %105 : vector<8x384xf32>
    %107 = arith.sitofp %0 : vector<1x384xi32> to vector<1x384xf32>
    %cst_47 = arith.constant 5.000000e-01 : f32
    %108 = vector.broadcast %cst_47 : f32 to vector<1x384xf32>
    %109 = arith.addf %107, %108 : vector<1x384xf32>
    %cst_48 = arith.constant 0.0416666679 : f32
    %110 = vector.broadcast %cst_48 : f32 to vector<1x384xf32>
    %111 = arith.mulf %109, %110 : vector<1x384xf32>
    %112 = math.floor %111 : vector<1x384xf32>
    %cst_49 = arith.constant 2.400000e+01 : f32
    %113 = vector.broadcast %cst_49 : f32 to vector<1x384xf32>
    %114 = arith.mulf %112, %113 : vector<1x384xf32>
    %115 = arith.subf %107, %114 : vector<1x384xf32>
    %cst_50 = arith.constant 1.550000e+01 : f32
    %116 = vector.broadcast %cst_50 : f32 to vector<1x384xf32>
    %117 = arith.cmpf olt, %115, %116 : vector<1x384xf32>
    %cst_51 = arith.constant 0.000000e+00 : f32
    %118 = vector.shape_cast %117 : vector<1x384xi1> to vector<1x384xi1>
    %119 = vector.broadcast %118 : vector<1x384xi1> to vector<8x384xi1>
    %120 = vector.broadcast %cst_51 : f32 to vector<8x384xf32>
    %121 = arith.select %119, %106, %120 : vector<8x384xi1>, vector<8x384xf32>
    %c25_i32_52 = arith.constant 25 : i32
    %122 = tpu.dynamic_rotate %121 by %c25_i32_52 dim 1 : vector<8x384xf32>, i32 -> vector<8x384xf32>
    %c25_i32_53 = arith.constant 25 : i32
    %123 = vector.broadcast %c25_i32_53 : i32 to vector<1x384xi32>
    %124 = arith.cmpi sge, %0, %123 : vector<1x384xi32>
    %c0_i32_54 = arith.constant 0 : i32
    %125 = arith.sitofp %c0_i32_54 : i32 to f32
    %126 = vector.shape_cast %124 : vector<1x384xi1> to vector<1x384xi1>
    %127 = vector.broadcast %126 : vector<1x384xi1> to vector<8x384xi1>
    %128 = vector.broadcast %125 : f32 to vector<8x384xf32>
    %129 = arith.select %127, %122, %128 : vector<8x384xi1>, vector<8x384xf32>
    %c0_55 = arith.constant 0 : index
    %c0_56 = arith.constant 0 : index
    %c0_57 = arith.constant 0 : index
    %130 = vector.load %arg4[%c0_55, %c0_56, %c0_57] : memref<9x8x8xf32, #tpu.memory_space<vmem>>, vector<1x8x8xf32>
    %131 = vector.shape_cast %130 : vector<1x8x8xf32> to vector<8x8xf32>
    %cst_58 = arith.constant dense<0.000000e+00> : vector<8x384xf32>
    %132 = tpu.matmul %131, %129, %cst_58 {dimension_numbers = #tpu.dot_dimension_numbers<[1], [0], [0], [1], [0, 0, 1, 1], [], []>} : vector<8x8xf32>, vector<8x384xf32>, vector<8x384xf32> -> vector<8x384xf32>
    %c24_i32_59 = arith.constant 24 : i32
    %133 = tpu.dynamic_rotate %121 by %c24_i32_59 dim 1 : vector<8x384xf32>, i32 -> vector<8x384xf32>
    %c24_i32_60 = arith.constant 24 : i32
    %134 = vector.broadcast %c24_i32_60 : i32 to vector<1x384xi32>
    %135 = arith.cmpi sge, %0, %134 : vector<1x384xi32>
    %c0_i32_61 = arith.constant 0 : i32
    %136 = arith.sitofp %c0_i32_61 : i32 to f32
    %137 = vector.shape_cast %135 : vector<1x384xi1> to vector<1x384xi1>
    %138 = vector.broadcast %137 : vector<1x384xi1> to vector<8x384xi1>
    %139 = vector.broadcast %136 : f32 to vector<8x384xf32>
    %140 = arith.select %138, %133, %139 : vector<8x384xi1>, vector<8x384xf32>
    %c1_62 = arith.constant 1 : index
    %c0_63 = arith.constant 0 : index
    %c0_64 = arith.constant 0 : index
    %141 = vector.load %arg4[%c1_62, %c0_63, %c0_64] : memref<9x8x8xf32, #tpu.memory_space<vmem>>, vector<1x8x8xf32>
    %142 = vector.shape_cast %141 : vector<1x8x8xf32> to vector<8x8xf32>
    %cst_65 = arith.constant dense<0.000000e+00> : vector<8x384xf32>
    %143 = tpu.matmul %142, %140, %cst_65 {dimension_numbers = #tpu.dot_dimension_numbers<[1], [0], [0], [1], [0, 0, 1, 1], [], []>} : vector<8x8xf32>, vector<8x384xf32>, vector<8x384xf32> -> vector<8x384xf32>
    %144 = arith.addf %132, %143 : vector<8x384xf32>
    %c23_i32_66 = arith.constant 23 : i32
    %145 = tpu.dynamic_rotate %121 by %c23_i32_66 dim 1 : vector<8x384xf32>, i32 -> vector<8x384xf32>
    %c23_i32_67 = arith.constant 23 : i32
    %146 = vector.broadcast %c23_i32_67 : i32 to vector<1x384xi32>
    %147 = arith.cmpi sge, %0, %146 : vector<1x384xi32>
    %c0_i32_68 = arith.constant 0 : i32
    %148 = arith.sitofp %c0_i32_68 : i32 to f32
    %149 = vector.shape_cast %147 : vector<1x384xi1> to vector<1x384xi1>
    %150 = vector.broadcast %149 : vector<1x384xi1> to vector<8x384xi1>
    %151 = vector.broadcast %148 : f32 to vector<8x384xf32>
    %152 = arith.select %150, %145, %151 : vector<8x384xi1>, vector<8x384xf32>
    %c2_69 = arith.constant 2 : index
    %c0_70 = arith.constant 0 : index
    %c0_71 = arith.constant 0 : index
    %153 = vector.load %arg4[%c2_69, %c0_70, %c0_71] : memref<9x8x8xf32, #tpu.memory_space<vmem>>, vector<1x8x8xf32>
    %154 = vector.shape_cast %153 : vector<1x8x8xf32> to vector<8x8xf32>
    %cst_72 = arith.constant dense<0.000000e+00> : vector<8x384xf32>
    %155 = tpu.matmul %154, %152, %cst_72 {dimension_numbers = #tpu.dot_dimension_numbers<[1], [0], [0], [1], [0, 0, 1, 1], [], []>} : vector<8x8xf32>, vector<8x384xf32>, vector<8x384xf32> -> vector<8x384xf32>
    %156 = arith.addf %144, %155 : vector<8x384xf32>
    %c1_i32_73 = arith.constant 1 : i32
    %157 = tpu.dynamic_rotate %121 by %c1_i32_73 dim 1 : vector<8x384xf32>, i32 -> vector<8x384xf32>
    %c1_i32_74 = arith.constant 1 : i32
    %158 = vector.broadcast %c1_i32_74 : i32 to vector<1x384xi32>
    %159 = arith.cmpi sge, %0, %158 : vector<1x384xi32>
    %c0_i32_75 = arith.constant 0 : i32
    %160 = arith.sitofp %c0_i32_75 : i32 to f32
    %161 = vector.shape_cast %159 : vector<1x384xi1> to vector<1x384xi1>
    %162 = vector.broadcast %161 : vector<1x384xi1> to vector<8x384xi1>
    %163 = vector.broadcast %160 : f32 to vector<8x384xf32>
    %164 = arith.select %162, %157, %163 : vector<8x384xi1>, vector<8x384xf32>
    %c3_76 = arith.constant 3 : index
    %c0_77 = arith.constant 0 : index
    %c0_78 = arith.constant 0 : index
    %165 = vector.load %arg4[%c3_76, %c0_77, %c0_78] : memref<9x8x8xf32, #tpu.memory_space<vmem>>, vector<1x8x8xf32>
    %166 = vector.shape_cast %165 : vector<1x8x8xf32> to vector<8x8xf32>
    %cst_79 = arith.constant dense<0.000000e+00> : vector<8x384xf32>
    %167 = tpu.matmul %166, %164, %cst_79 {dimension_numbers = #tpu.dot_dimension_numbers<[1], [0], [0], [1], [0, 0, 1, 1], [], []>} : vector<8x8xf32>, vector<8x384xf32>, vector<8x384xf32> -> vector<8x384xf32>
    %168 = arith.addf %156, %167 : vector<8x384xf32>
    %c4_80 = arith.constant 4 : index
    %c0_81 = arith.constant 0 : index
    %c0_82 = arith.constant 0 : index
    %169 = vector.load %arg4[%c4_80, %c0_81, %c0_82] : memref<9x8x8xf32, #tpu.memory_space<vmem>>, vector<1x8x8xf32>
    %170 = vector.shape_cast %169 : vector<1x8x8xf32> to vector<8x8xf32>
    %cst_83 = arith.constant dense<0.000000e+00> : vector<8x384xf32>
    %171 = tpu.matmul %170, %121, %cst_83 {dimension_numbers = #tpu.dot_dimension_numbers<[1], [0], [0], [1], [0, 0, 1, 1], [], []>} : vector<8x8xf32>, vector<8x384xf32>, vector<8x384xf32> -> vector<8x384xf32>
    %172 = arith.addf %168, %171 : vector<8x384xf32>
    %c383_i32_84 = arith.constant 383 : i32
    %173 = tpu.dynamic_rotate %121 by %c383_i32_84 dim 1 : vector<8x384xf32>, i32 -> vector<8x384xf32>
    %c383_i32_85 = arith.constant 383 : i32
    %174 = vector.broadcast %c383_i32_85 : i32 to vector<1x384xi32>
    %175 = arith.cmpi slt, %0, %174 : vector<1x384xi32>
    %c0_i32_86 = arith.constant 0 : i32
    %176 = arith.sitofp %c0_i32_86 : i32 to f32
    %177 = vector.shape_cast %175 : vector<1x384xi1> to vector<1x384xi1>
    %178 = vector.broadcast %177 : vector<1x384xi1> to vector<8x384xi1>
    %179 = vector.broadcast %176 : f32 to vector<8x384xf32>
    %180 = arith.select %178, %173, %179 : vector<8x384xi1>, vector<8x384xf32>
    %c5_87 = arith.constant 5 : index
    %c0_88 = arith.constant 0 : index
    %c0_89 = arith.constant 0 : index
    %181 = vector.load %arg4[%c5_87, %c0_88, %c0_89] : memref<9x8x8xf32, #tpu.memory_space<vmem>>, vector<1x8x8xf32>
    %182 = vector.shape_cast %181 : vector<1x8x8xf32> to vector<8x8xf32>
    %cst_90 = arith.constant dense<0.000000e+00> : vector<8x384xf32>
    %183 = tpu.matmul %182, %180, %cst_90 {dimension_numbers = #tpu.dot_dimension_numbers<[1], [0], [0], [1], [0, 0, 1, 1], [], []>} : vector<8x8xf32>, vector<8x384xf32>, vector<8x384xf32> -> vector<8x384xf32>
    %184 = arith.addf %172, %183 : vector<8x384xf32>
    %c361_i32_91 = arith.constant 361 : i32
    %185 = tpu.dynamic_rotate %121 by %c361_i32_91 dim 1 : vector<8x384xf32>, i32 -> vector<8x384xf32>
    %c361_i32_92 = arith.constant 361 : i32
    %186 = vector.broadcast %c361_i32_92 : i32 to vector<1x384xi32>
    %187 = arith.cmpi slt, %0, %186 : vector<1x384xi32>
    %c0_i32_93 = arith.constant 0 : i32
    %188 = arith.sitofp %c0_i32_93 : i32 to f32
    %189 = vector.shape_cast %187 : vector<1x384xi1> to vector<1x384xi1>
    %190 = vector.broadcast %189 : vector<1x384xi1> to vector<8x384xi1>
    %191 = vector.broadcast %188 : f32 to vector<8x384xf32>
    %192 = arith.select %190, %185, %191 : vector<8x384xi1>, vector<8x384xf32>
    %c6_94 = arith.constant 6 : index
    %c0_95 = arith.constant 0 : index
    %c0_96 = arith.constant 0 : index
    %193 = vector.load %arg4[%c6_94, %c0_95, %c0_96] : memref<9x8x8xf32, #tpu.memory_space<vmem>>, vector<1x8x8xf32>
    %194 = vector.shape_cast %193 : vector<1x8x8xf32> to vector<8x8xf32>
    %cst_97 = arith.constant dense<0.000000e+00> : vector<8x384xf32>
    %195 = tpu.matmul %194, %192, %cst_97 {dimension_numbers = #tpu.dot_dimension_numbers<[1], [0], [0], [1], [0, 0, 1, 1], [], []>} : vector<8x8xf32>, vector<8x384xf32>, vector<8x384xf32> -> vector<8x384xf32>
    %196 = arith.addf %184, %195 : vector<8x384xf32>
    %c360_i32_98 = arith.constant 360 : i32
    %197 = tpu.dynamic_rotate %121 by %c360_i32_98 dim 1 : vector<8x384xf32>, i32 -> vector<8x384xf32>
    %c360_i32_99 = arith.constant 360 : i32
    %198 = vector.broadcast %c360_i32_99 : i32 to vector<1x384xi32>
    %199 = arith.cmpi slt, %0, %198 : vector<1x384xi32>
    %c0_i32_100 = arith.constant 0 : i32
    %200 = arith.sitofp %c0_i32_100 : i32 to f32
    %201 = vector.shape_cast %199 : vector<1x384xi1> to vector<1x384xi1>
    %202 = vector.broadcast %201 : vector<1x384xi1> to vector<8x384xi1>
    %203 = vector.broadcast %200 : f32 to vector<8x384xf32>
    %204 = arith.select %202, %197, %203 : vector<8x384xi1>, vector<8x384xf32>
    %c7_101 = arith.constant 7 : index
    %c0_102 = arith.constant 0 : index
    %c0_103 = arith.constant 0 : index
    %205 = vector.load %arg4[%c7_101, %c0_102, %c0_103] : memref<9x8x8xf32, #tpu.memory_space<vmem>>, vector<1x8x8xf32>
    %206 = vector.shape_cast %205 : vector<1x8x8xf32> to vector<8x8xf32>
    %cst_104 = arith.constant dense<0.000000e+00> : vector<8x384xf32>
    %207 = tpu.matmul %206, %204, %cst_104 {dimension_numbers = #tpu.dot_dimension_numbers<[1], [0], [0], [1], [0, 0, 1, 1], [], []>} : vector<8x8xf32>, vector<8x384xf32>, vector<8x384xf32> -> vector<8x384xf32>
    %208 = arith.addf %196, %207 : vector<8x384xf32>
    %c359_i32_105 = arith.constant 359 : i32
    %209 = tpu.dynamic_rotate %121 by %c359_i32_105 dim 1 : vector<8x384xf32>, i32 -> vector<8x384xf32>
    %c359_i32_106 = arith.constant 359 : i32
    %210 = vector.broadcast %c359_i32_106 : i32 to vector<1x384xi32>
    %211 = arith.cmpi slt, %0, %210 : vector<1x384xi32>
    %c0_i32_107 = arith.constant 0 : i32
    %212 = arith.sitofp %c0_i32_107 : i32 to f32
    %213 = vector.shape_cast %211 : vector<1x384xi1> to vector<1x384xi1>
    %214 = vector.broadcast %213 : vector<1x384xi1> to vector<8x384xi1>
    %215 = vector.broadcast %212 : f32 to vector<8x384xf32>
    %216 = arith.select %214, %209, %215 : vector<8x384xi1>, vector<8x384xf32>
    %c8_108 = arith.constant 8 : index
    %c0_109 = arith.constant 0 : index
    %c0_110 = arith.constant 0 : index
    %217 = vector.load %arg4[%c8_108, %c0_109, %c0_110] : memref<9x8x8xf32, #tpu.memory_space<vmem>>, vector<1x8x8xf32>
    %218 = vector.shape_cast %217 : vector<1x8x8xf32> to vector<8x8xf32>
    %cst_111 = arith.constant dense<0.000000e+00> : vector<8x384xf32>
    %219 = tpu.matmul %218, %216, %cst_111 {dimension_numbers = #tpu.dot_dimension_numbers<[1], [0], [0], [1], [0, 0, 1, 1], [], []>} : vector<8x8xf32>, vector<8x384xf32>, vector<8x384xf32> -> vector<8x384xf32>
    %220 = arith.addf %208, %219 : vector<8x384xf32>
    %c0_112 = arith.constant 0 : index
    %c0_113 = arith.constant 0 : index
    %221 = vector.load %arg5[%c0_112, %c0_113] : memref<8x1xf32, #tpu.memory_space<vmem>>, vector<8x1xf32>
    %222 = vector.broadcast %221 : vector<8x1xf32> to vector<8x384xf32>
    %223 = arith.addf %220, %222 : vector<8x384xf32>
    %cst_114 = arith.constant 0.000000e+00 : f32
    %224 = vector.broadcast %cst_114 : f32 to vector<8x384xf32>
    %225 = arith.maximumf %223, %224 : vector<8x384xf32>
    %c0_115 = arith.constant 0 : index
    %c0_116 = arith.constant 0 : index
    %c0_117 = arith.constant 0 : index
    %226 = vector.load %arg6[%c0_115, %c0_116, %c0_117] : memref<1x8x384xf32, #tpu.memory_space<vmem>>, vector<1x8x384xf32>
    %227 = vector.shape_cast %226 : vector<1x8x384xf32> to vector<8x384xf32>
    %228 = vector.shape_cast %225 : vector<8x384xf32> to vector<1x8x384xf32>
    tpu.vector_store %arg6[%c0_115, %c0_116, %c0_117], %228 {strides = array<i32>} : memref<1x8x384xf32, #tpu.memory_space<vmem>>, vector<1x8x384xf32>,
    return
  }
  func.func @transform_0(%arg0: i32) -> (i32, i32, i32) {
    %c0_i32 = arith.constant 0 : i32
    %c0_i32_0 = arith.constant 0 : i32
    %c0_i32_1 = arith.constant 0 : i32
    return %arg0, %c0_i32, %c0_i32_0 : i32, i32, i32
  }
  func.func @transform_1(%arg0: i32) -> (i32, i32, i32) {
    %c0_i32 = arith.constant 0 : i32
    %c0_i32_0 = arith.constant 0 : i32
    %c0_i32_1 = arith.constant 0 : i32
    %c0_i32_2 = arith.constant 0 : i32
    return %c0_i32, %c0_i32_0, %c0_i32_1 : i32, i32, i32
  }
  func.func @transform_2(%arg0: i32) -> (i32, i32) {
    %c0_i32 = arith.constant 0 : i32
    %c0_i32_0 = arith.constant 0 : i32
    %c0_i32_1 = arith.constant 0 : i32
    return %c0_i32, %c0_i32_0 : i32, i32
  }
  func.func @transform_3(%arg0: i32) -> (i32, i32, i32) {
    %c0_i32 = arith.constant 0 : i32
    %c0_i32_0 = arith.constant 0 : i32
    %c0_i32_1 = arith.constant 0 : i32
    %c0_i32_2 = arith.constant 0 : i32
    return %c0_i32, %c0_i32_0, %c0_i32_1 : i32, i32, i32
  }
  func.func @transform_4(%arg0: i32) -> (i32, i32) {
    %c0_i32 = arith.constant 0 : i32
    %c0_i32_0 = arith.constant 0 : i32
    %c0_i32_1 = arith.constant 0 : i32
    return %c0_i32, %c0_i32_0 : i32, i32
  }
  func.func @transform_5(%arg0: i32) -> (i32, i32, i32) {
    %c0_i32 = arith.constant 0 : i32
    %c0_i32_0 = arith.constant 0 : i32
    %c0_i32_1 = arith.constant 0 : i32
    return %arg0, %c0_i32, %c0_i32_0 : i32, i32, i32
  }
}

</mosaic_0001>

<llo_original>
// kernel: _stacked2block_forward.1
$region0: #{_stacked2block_forward.1}
  #allocation0 [shape = 'u32[]', space=smem, size = 0x4, offset = 0x4, fixed_abs, tag = 'smem constant byte address 0x4 - core index']
  #allocation1 [shape = 'u32[144,128]{1,0:T(1,128)}', space=vmem, size = 0x12000, scoped, tag = 'internal scratch']
  %s0 = inlined_call_operand.vmem [shape: f32[2,4,384], index: 0, kind: input, shape index: {}]
  %s1 = inlined_call_operand.vmem [shape: f32[9,8,4], index: 1, kind: input, shape index: {}]
  %s2 = inlined_call_operand.vmem [shape: f32[8,1], index: 2, kind: input, shape index: {}]
  %s3 = inlined_call_operand.vmem [shape: f32[9,8,8], index: 3, kind: input, shape index: {}]
  %s4 = inlined_call_operand.vmem [shape: f32[8,1], index: 4, kind: input, shape index: {}]
  %s5 = inlined_call_operand.vmem [shape: f32[2,8,384], index: 5, kind: output, shape index: {}]
  %s6 = sld [smem:[#allocation0]]
  $region53: #{_stacked2block_forward.1} parent=0
    _
  %s8 = ssub.s32 1, %s6
  %s9 = scalar_select 0, %s8, %s6
  loop: start=0, step=1, limit=4
  $region2: #{_stacked2block_forward.1} parent=0 // loop_pre_header
    _
  $region3: #{_stacked2block_forward.1} parent=0 // loop_header
    %s11 = sphi 0, %s15
    %p12 = scmp.ge.s32.totalorder %s11, 4
    %s21 = sphi 0, %s23
    %s24 = sphi 0, %s21
    %s25 = sphi 0, %s24
    %s41 = sphi 0, %s25
    %s45 = sphi 0, %s45
    %s47 = sphi 0, %s45
    %s48 = sphi 0, %s47
    %s62 = sphi 0, %s48
    %s66 = sphi 0, %s66
    %s68 = sphi 0, %s66
    %s69 = sphi 0, %s68
    %s83 = sphi 0, %s69
    %s87 = sphi 0, %s87
    %s89 = sphi 0, %s87
    %s90 = sphi 0, %s89
    %s104 = sphi 0, %s90
    %s108 = sphi 0, %s108
    %s110 = sphi 0, %s108
    %s111 = sphi 0, %s110
    %s125 = sphi 0, %s111
    %s131 = sphi 0, %s133
    %s134 = sphi 0, %s131
    %s135 = sphi 0, %s134
    %s151 = sphi 0, %s135
  $region4: #{_stacked2block_forward.1} parent=0 // loop_header_branch
    %14 = sbr.rel (%p12) target = $region8
  $region5: #{_stacked2block_forward.1} parent=0 // loop_body
    %s16 = ssub.s32 %s11, 1
    %s17 = ssub.s32 %s11, 2
    %s18 = sadd.s32 %s11, 1
    %s19 = ssub.s32 %s11, %s18
    %p20 = scmp.eq.s32.totalorder %s19, 0
    %s22 = sadd.s32 %s21, 1
    %s23 = scalar_select %p20, %s21, %s22
    %p26 = pneg %p20
    %p27 = scmp.eq.s32.totalorder %s11, 1
    %p28 = por %p26, %p27
    %p29 = scmp.ne.s32.totalorder %s21, %s24
    %p30 = scmp.eq.s32.totalorder %s11, 0
    %p31 = por %p29, %p30
    %p32 = scmp.ne.s32.totalorder %s21, %s24
    %p33 = scmp.eq.s32.totalorder %s16, 1
    %p34 = por %p32, %p33
    %p35 = scmp.ne.s32.totalorder %s24, %s25
    %p36 = scmp.eq.s32.totalorder %s16, 0
    %p37 = por %p35, %p36
    %p38 = scmp.ne.s32.totalorder %s24, %s25
    %p39 = scmp.eq.s32.totalorder %s17, 1
    %p40 = por %p38, %p39
    %p42 = scmp.ne.s32.totalorder %s25, %s41
    %p43 = scmp.eq.s32.totalorder %s17, 0
    %p44 = por %p42, %p43
    %s46 = sadd.s32 %s45, 1
    %p49 = scmp.eq.s32.totalorder %s11, 1
    %p50 = scmp.ne.s32.totalorder %s45, %s47
    %p51 = scmp.eq.s32.totalorder %s11, 0
    %p52 = por %p50, %p51
    %p53 = scmp.ne.s32.totalorder %s45, %s47
    %p54 = scmp.eq.s32.totalorder %s16, 1
    %p55 = por %p53, %p54
    %p56 = scmp.ne.s32.totalorder %s47, %s48
    %p57 = scmp.eq.s32.totalorder %s16, 0
    %p58 = por %p56, %p57
    %p59 = scmp.ne.s32.totalorder %s47, %s48
    %p60 = scmp.eq.s32.totalorder %s17, 1
    %p61 = por %p59, %p60
    %p63 = scmp.ne.s32.totalorder %s48, %s62
    %p64 = scmp.eq.s32.totalorder %s17, 0
    %p65 = por %p63, %p64
    %s67 = sadd.s32 %s66, 1
    %p70 = scmp.eq.s32.totalorder %s11, 1
    %p71 = scmp.ne.s32.totalorder %s66, %s68
    %p72 = scmp.eq.s32.totalorder %s11, 0
    %p73 = por %p71, %p72
    %p74 = scmp.ne.s32.totalorder %s66, %s68
    %p75 = scmp.eq.s32.totalorder %s16, 1
    %p76 = por %p74, %p75
    %p77 = scmp.ne.s32.totalorder %s68, %s69
    %p78 = scmp.eq.s32.totalorder %s16, 0
    %p79 = por %p77, %p78
    %p80 = scmp.ne.s32.totalorder %s68, %s69
    %p81 = scmp.eq.s32.totalorder %s17, 1
    %p82 = por %p80, %p81
    %p84 = scmp.ne.s32.totalorder %s69, %s83
    %p85 = scmp.eq.s32.totalorder %s17, 0
    %p86 = por %p84, %p85
    %s88 = sadd.s32 %s87, 1
    %p91 = scmp.eq.s32.totalorder %s11, 1
    %p92 = scmp.ne.s32.totalorder %s87, %s89
    %p93 = scmp.eq.s32.totalorder %s11, 0
    %p94 = por %p92, %p93
    %p95 = scmp.ne.s32.totalorder %s87, %s89
    %p96 = scmp.eq.s32.totalorder %s16, 1
    %p97 = por %p95, %p96
    %p98 = scmp.ne.s32.totalorder %s89, %s90
    %p99 = scmp.eq.s32.totalorder %s16, 0
    %p100 = por %p98, %p99
    %p101 = scmp.ne.s32.totalorder %s89, %s90
    %p102 = scmp.eq.s32.totalorder %s17, 1
    %p103 = por %p101, %p102
    %p105 = scmp.ne.s32.totalorder %s90, %s104
    %p106 = scmp.eq.s32.totalorder %s17, 0
    %p107 = por %p105, %p106
    %s109 = sadd.s32 %s108, 1
    %p112 = scmp.eq.s32.totalorder %s11, 1
    %p113 = scmp.ne.s32.totalorder %s108, %s110
    %p114 = scmp.eq.s32.totalorder %s11, 0
    %p115 = por %p113, %p114
    %p116 = scmp.ne.s32.totalorder %s108, %s110
    %p117 = scmp.eq.s32.totalorder %s16, 1
    %p118 = por %p116, %p117
    %p119 = scmp.ne.s32.totalorder %s110, %s111
    %p120 = scmp.eq.s32.totalorder %s16, 0
    %p121 = por %p119, %p120
    %p122 = scmp.ne.s32.totalorder %s110, %s111
    %p123 = scmp.eq.s32.totalorder %s17, 1
    %p124 = por %p122, %p123
    %p126 = scmp.ne.s32.totalorder %s111, %s125
    %p127 = scmp.eq.s32.totalorder %s17, 0
    %p128 = por %p126, %p127
    %s129 = ssub.s32 %s11, %s18
    %p130 = scmp.eq.s32.totalorder %s129, 0
    %s132 = sadd.s32 %s131, 1
    %s133 = scalar_select %p130, %s131, %s132
    %p136 = pneg %p130
    %p137 = scmp.eq.s32.totalorder %s11, 1
    %p138 = por %p136, %p137
    %p139 = scmp.ne.s32.totalorder %s131, %s134
    %p140 = scmp.eq.s32.totalorder %s11, 0
    %p141 = por %p139, %p140
    %p142 = scmp.ne.s32.totalorder %s131, %s134
    %p143 = scmp.eq.s32.totalorder %s16, 1
    %p144 = por %p142, %p143
    %p145 = scmp.ne.s32.totalorder %s134, %s135
    %p146 = scmp.eq.s32.totalorder %s16, 0
    %p147 = por %p145, %p146
    %p148 = scmp.ne.s32.totalorder %s134, %s135
    %p149 = scmp.eq.s32.totalorder %s17, 1
    %p150 = por %p148, %p149
    %p152 = scmp.ne.s32.totalorder %s135, %s151
    %p153 = scmp.eq.s32.totalorder %s17, 0
    %p154 = por %p152, %p153
    %p155 = scmp.le.s32.totalorder 1, %s11
    %p156 = scmp.lt.s32.totalorder %s11, 3
    %p157 = pnand %p155, %p156
    %p158 = pneg %p157
    // Predicated region
    $region9: #{_stacked2block_forward.1} parent=5 // pred_check
      _
    $region10: #{_stacked2block_forward.1} parent=5 // pred_check_branch
      %160 = sbr.rel (%p157) target = $region12
    $region11: #{_stacked2block_forward.1} parent=5 // pred_region
      %s161 = ssub.s32 %s11, 1
      // Predicated region
      $region13: #{_stacked2block_forward.1} parent=11 // pred_check
        %p162 = pneg %p58
      $region14: #{_stacked2block_forward.1} parent=11 // pred_check_branch
        %164 = sbr.rel (%p162) target = $region16
      $region15: #{_stacked2block_forward.1} parent=11 // pred_region
        _
      $region16: #{_stacked2block_forward.1} parent=11 // pred_fallthru
        _
      // Predicated region
      $region17: #{_stacked2block_forward.1} parent=11 // pred_check
        %p165 = pneg %p79
      $region18: #{_stacked2block_forward.1} parent=11 // pred_check_branch
        %167 = sbr.rel (%p165) target = $region20
      $region19: #{_stacked2block_forward.1} parent=11 // pred_region
        _
      $region20: #{_stacked2block_forward.1} parent=11 // pred_fallthru
        _
      // Predicated region
      $region21: #{_stacked2block_forward.1} parent=11 // pred_check
        %p168 = pneg %p100
      $region22: #{_stacked2block_forward.1} parent=11 // pred_check_branch
        %170 = sbr.rel (%p168) target = $region24
      $region23: #{_stacked2block_forward.1} parent=11 // pred_region
        _
      $region24: #{_stacked2block_forward.1} parent=11 // pred_fallthru
        _
      // Predicated region
      $region25: #{_stacked2block_forward.1} parent=11 // pred_check
        %p171 = pneg %p121
      $region26: #{_stacked2block_forward.1} parent=11 // pred_check_branch
        %173 = sbr.rel (%p171) target = $region28
      $region27: #{_stacked2block_forward.1} parent=11 // pred_region
        _
      $region28: #{_stacked2block_forward.1} parent=11 // pred_fallthru
        _
    $region12: #{_stacked2block_forward.1} parent=5 // pred_fallthru
      _
    %p174 = scmp.lt.s32.totalorder %s11, 2
    // Predicated region
    $region29: #{_stacked2block_forward.1} parent=5 // pred_check
      %p175 = pneg %p174
    $region30: #{_stacked2block_forward.1} parent=5 // pred_check_branch
      %177 = sbr.rel (%p175) target = $region32
    $region31: #{_stacked2block_forward.1} parent=5 // pred_region
      // Predicated region
      $region33: #{_stacked2block_forward.1} parent=31 // pred_check
        %p178 = pneg %p31
      $region34: #{_stacked2block_forward.1} parent=31 // pred_check_branch
        %180 = sbr.rel (%p178) target = $region36
      $region35: #{_stacked2block_forward.1} parent=31 // pred_region
        %p181 = scmp.lt.s32.totalorder %s11, 1
        %s182 = scalar_select %p181, %s11, 1
        %s183 = smul.addr %s182, 3
        %s184 = smul.addr %s183, 4
        %s185 = scalar_lea.vmem %s0, %s184
      $region36: #{_stacked2block_forward.1} parent=31 // pred_fallthru
        _
    $region32: #{_stacked2block_forward.1} parent=5 // pred_fallthru
      _
    %p186 = scmp.le.s32.totalorder 1, %s11
    %p187 = scmp.lt.s32.totalorder %s11, 3
    %p188 = pnand %p186, %p187
    %p189 = pneg %p188
    // Predicated region
    $region37: #{_stacked2block_forward.1} parent=5 // pred_check
      _
    $region38: #{_stacked2block_forward.1} parent=5 // pred_check_branch
      %191 = sbr.rel (%p188) target = $region40
    $region39: #{_stacked2block_forward.1} parent=5 // pred_region
      %s192 = ssub.s32 %s11, 1
      %p193 = scmp.lt.s32.totalorder %s16, 1
      %s194 = scalar_select %p193, %s16, 1
      %s195 = smul.addr %s194, 3
      %s196 = smul.addr %s195, 4
      %s197 = scalar_lea.vmem %s0, %s196
      %p198 = pneg %p37
      %p199 = pneg %p34
      %p200 = pneg %p58
      %p201 = pneg %p55
      %p202 = pneg %p79
      %p203 = pneg %p76
      %p204 = pneg %p100
      %p205 = pneg %p97
      %p206 = pneg %p121
      %p207 = pneg %p118
      %p208 = pneg %p147
      %p209 = pneg %p144
      %p210 = scmp.lt.s32.totalorder %s16, 1
      %s211 = scalar_select %p210, %s16, 1
      %s212 = smul.addr %s211, 3
      %s213 = smul.addr %s212, 8
      %s214 = scalar_lea.vmem %s5, %s213
      %p215 = scmp.lt.s32.totalorder %s16, 1
      %s216 = scalar_select %p215, %s16, 1
      %s217 = smul.addr %s216, 3
      %s218 = smul.addr %s217, 4
      %s219 = scalar_lea.vmem %s0, %s218
      %p220 = scmp.lt.s32.totalorder %s16, 1
      %s221 = scalar_select %p220, %s16, 1
      %s222 = smul.addr %s221, 3
      %s223 = smul.addr %s222, 8
      %s224 = scalar_lea.vmem %s5, %s223
      %v225 = vlaneseq
      %v226 = vand.u32 %v225, 127
      %v227 = vadd.s32 %v226, 128
      %v228 = vadd.s32 %v226, 256
      %v229 = vld [vmem:[%s219] sm:$0xff]
      %v230 = vld [vmem:[%s219 + $0x8] sm:$0xf]
      %v233 = vcombine.high %v229, %v229
      %235 = vrot.lane.b32.xlu0 %v229, 25
      %v236 = vpop.permute.xlu0 %235
      %237 = vrot.lane.b32.xlu0 %v233, 25
      %v238 = vpop.permute.xlu0 %237
      %239 = vrot.lane.b32.xlu0 %v230, 25
      %v240 = vpop.permute.xlu0 %239
      %vm241 = vcmp.lt.s32.totalorder %v226, 25
      %v242 = vsel %vm241, %v238, %v240
      %v243 = vsel %vm241, %v236, %v238
      %v244 = vsel %vm241, %v240, %v236
      %vm245 = vcmp.ge.s32.totalorder %v226, 25
      %vm246 = vcmp.ge.s32.totalorder %v227, 25
      %vm247 = vcmp.ge.s32.totalorder %v228, 25
      %v248 = vsel %vm245, 1, 0
      %v249 = vsel %vm246, 1, 0
      %v250 = vsel %vm247, 1, 0
      %vm251 = vcmp.eq.s32.totalorder %v248, 1
      %vm252 = vcmp.eq.s32.totalorder %v249, 1
      %vm253 = vcmp.eq.s32.totalorder %v250, 1
      %v254 = vsel %vm251, %v244, 0.0
      %v255 = vsel %vm252, %v243, 0.0
      %v256 = vsel %vm253, %v242, 0.0
      %v257 = vld [vmem:[%s1] sm:$0xff]
      %258 = vrot.lane.b32.xlu0 %v229, 24
      %v259 = vpop.permute.xlu0 %258
      %260 = vrot.lane.b32.xlu0 %v233, 24
      %v261 = vpop.permute.xlu0 %260
      %262 = vrot.lane.b32.xlu0 %v230, 24
      %v263 = vpop.permute.xlu0 %262
      %vm264 = vcmp.lt.s32.totalorder %v226, 24
      %v265 = vsel %vm264, %v261, %v263
      %v266 = vsel %vm264, %v259, %v261
      %v267 = vsel %vm264, %v263, %v259
      %vm268 = vcmp.ge.s32.totalorder %v226, 24
      %vm269 = vcmp.ge.s32.totalorder %v227, 24
      %vm270 = vcmp.ge.s32.totalorder %v228, 24
      %v271 = vsel %vm268, 1, 0
      %v272 = vsel %vm269, 1, 0
      %v273 = vsel %vm270, 1, 0
      %vm274 = vcmp.eq.s32.totalorder %v271, 1
      %vm275 = vcmp.eq.s32.totalorder %v272, 1
      %vm276 = vcmp.eq.s32.totalorder %v273, 1
      %v277 = vsel %vm274, %v267, 0.0
      %v278 = vsel %vm275, %v266, 0.0
      %v279 = vsel %vm276, %v265, 0.0
      %s280 = scalar_lea.vmem %s1, 8
      %v281 = vld [vmem:[%s280] sm:$0xff]
      %vm282 = vcmask 31744
      %v284 = vsel %vm282, %v281, 0
      %vm286 = vcmask 1043456
      %v288 = vsel %vm286, %v277, 0
      %v291 = vsel %vm286, %v278, 0
      %v294 = vsel %vm286, %v279, 0
      %296 = vmatprep.subr.mxu0 0.0
      %297 = vmatpush1.msra.mxu0 0.0
      %298 = vmatprep.subr.mxu0 0.0
      %299 = vmatpush1.msra.mxu0 0.0
      %300 = vmatprep.subr.mxu0 0.0
      %301 = vmatpush1.msra.mxu0 0.0
      %302 = vmatprep.subr.mxu0 0.0
      %303 = vmatpush1.msra.mxu0 0.0
      %304 = vmatprep.subr.mxu0 0.0
      %305 = vmatpush1.msra.mxu0 0.0
      %306 = vmatprep.subr.mxu0 0.0
      %307 = vmatpush1.msra.mxu0 0.0
      %308 = vmatprep.subr.mxu0 0.0
      %309 = vmatpush1.msra.mxu0 0.0
      %310 = vmatprep.subr.mxu0 0.0
      %311 = vmatpush1.msra.mxu0 0.0
      %312 = vmatprep.subr.mxu0 0.0
      %313 = vmatpush1.msra.mxu0 0.0
      %314 = vmatprep.subr.mxu0 0.0
      %315 = vmatpush1.msra.mxu0 0.0
      %316 = vmatprep.subr.mxu0 0.0
      %317 = vmatpush1.msra.mxu0 0.0
      %318 = vmatprep.subr.mxu0 0.0
      %319 = vmatpush1.msra.mxu0 0.0
      %320 = vmatprep.subr.mxu0 0.0
      %321 = vmatpush1.msra.mxu0 0.0
      %322 = vmatprep.subr.mxu0 0.0
      %323 = vmatpush1.msra.mxu0 0.0
      %324 = vmatprep.subr.mxu0 0.0
      %325 = vmatpush1.msra.mxu0 0.0
      %326 = vmatprep.subr.mxu0 %v291
      %327 = vmatpush1.msra.mxu0 %v288
      %328 = vmatprep.subr.mxu0 0.0
      %329 = vmatpush2.msra.mxu0 0.0
      %330 = vmatprep.subr.mxu0 0.0
      %331 = vmatpush2.msra.mxu0 0.0
      %332 = vmatprep.subr.mxu0 0.0
      %333 = vmatpush2.msra.mxu0 0.0
      %334 = vmatprep.subr.mxu0 0.0
      %335 = vmatpush2.msra.mxu0 0.0
      %336 = vmatprep.subr.mxu0 0.0
      %337 = vmatpush2.msra.mxu0 0.0
      %338 = vmatprep.subr.mxu0 0.0
      %339 = vmatpush2.msra.mxu0 0.0
      %340 = vmatprep.subr.mxu0 0.0
      %341 = vmatpush2.msra.mxu0 0.0
      %342 = vmatprep.subr.mxu0 0.0
      %343 = vmatpush2.msra.mxu0 0.0
      %344 = vmatprep.subr.mxu0 0.0
      %345 = vmatpush2.msra.mxu0 0.0
      %346 = vmatprep.subr.mxu0 0.0
      %347 = vmatpush2.msra.mxu0 0.0
      %348 = vmatprep.subr.mxu0 0.0
      %349 = vmatpush2.msra.mxu0 0.0
      %350 = vmatprep.subr.mxu0 0.0
      %351 = vmatpush2.msra.mxu0 0.0
      %352 = vmatprep.subr.mxu0 0.0
      %353 = vmatpush2.msra.mxu0 0.0
      %354 = vmatprep.subr.mxu0 0.0
      %355 = vmatpush2.msra.mxu0 0.0
      %356 = vmatprep.subr.mxu0 0.0
      %357 = vmatpush2.msra.mxu0 0.0
      %358 = vmatprep.subr.mxu0 0.0
      %359 = vmatpush2.msra.mxu0 0.0
      %360 = vmatprep.mubr.f32.mxu0 0.0
      %361 = vmatmul.mubr.f32.gmra.mxu0 %v284
      %v362 = vpop.f32.mrf.mxu0
      %v363 = vadd.f32 0.0, %v362
      %v364 = vpop.f32.mrf.mxu0
      %v365 = vadd.f32 0.0, %v364
      %366 = vdwg.mxu0
      %367 = vmatprep.subr.mxu0 0.0
      %368 = vmatpush1.msra.mxu0 0.0
      %369 = vmatprep.subr.mxu0 0.0
      %370 = vmatpush1.msra.mxu0 0.0
      %371 = vmatprep.subr.mxu0 0.0
      %372 = vmatpush1.msra.mxu0 0.0
      %373 = vmatprep.subr.mxu0 0.0
      %374 = vmatpush1.msra.mxu0 0.0
      %375 = vmatprep.subr.mxu0 0.0
      %376 = vmatpush1.msra.mxu0 0.0
      %377 = vmatprep.subr.mxu0 0.0
      %378 = vmatpush1.msra.mxu0 0.0
      %379 = vmatprep.subr.mxu0 0.0
      %380 = vmatpush1.msra.mxu0 0.0
      %381 = vmatprep.subr.mxu0 0.0
      %382 = vmatpush1.msra.mxu0 0.0
      %383 = vmatprep.subr.mxu0 0.0
      %384 = vmatpush1.msra.mxu0 0.0
      %385 = vmatprep.subr.mxu0 0.0
      %386 = vmatpush1.msra.mxu0 0.0
      %387 = vmatprep.subr.mxu0 0.0
      %388 = vmatpush1.msra.mxu0 0.0
      %389 = vmatprep.subr.mxu0 0.0
      %390 = vmatpush1.msra.mxu0 0.0
      %391 = vmatprep.subr.mxu0 0.0
      %392 = vmatpush1.msra.mxu0 0.0
      %393 = vmatprep.subr.mxu0 0.0
      %394 = vmatpush1.msra.mxu0 0.0
      %395 = vmatprep.subr.mxu0 0.0
      %396 = vmatpush1.msra.mxu0 0.0
      %397 = vmatprep.subr.mxu0 0.0
      %398 = vmatpush1.msra.mxu0 %v294
      %399 = vmatprep.subr.mxu0 0.0
      %400 = vmatpush2.msra.mxu0 0.0
      %401 = vmatprep.subr.mxu0 0.0
      %402 = vmatpush2.msra.mxu0 0.0
      %403 = vmatprep.subr.mxu0 0.0
      %404 = vmatpush2.msra.mxu0 0.0
      %405 = vmatprep.subr.mxu0 0.0
      %406 = vmatpush2.msra.mxu0 0.0
      %407 = vmatprep.subr.mxu0 0.0
      %408 = vmatpush2.msra.mxu0 0.0
      %409 = vmatprep.subr.mxu0 0.0
      %410 = vmatpush2.msra.mxu0 0.0
      %411 = vmatprep.subr.mxu0 0.0
      %412 = vmatpush2.msra.mxu0 0.0
      %413 = vmatprep.subr.mxu0 0.0
      %414 = vmatpush2.msra.mxu0 0.0
      %415 = vmatprep.subr.mxu0 0.0
      %416 = vmatpush2.msra.mxu0 0.0
      %417 = vmatprep.subr.mxu0 0.0
      %418 = vmatpush2.msra.mxu0 0.0
      %419 = vmatprep.subr.mxu0 0.0
      %420 = vmatpush2.msra.mxu0 0.0
      %421 = vmatprep.subr.mxu0 0.0
      %422 = vmatpush2.msra.mxu0 0.0
      %423 = vmatprep.subr.mxu0 0.0
      %424 = vmatpush2.msra.mxu0 0.0
      %425 = vmatprep.subr.mxu0 0.0
      %426 = vmatpush2.msra.mxu0 0.0
      %427 = vmatprep.subr.mxu0 0.0
      %428 = vmatpush2.msra.mxu0 0.0
      %429 = vmatprep.subr.mxu0 0.0
      %430 = vmatpush2.msra.mxu0 0.0
      %431 = vmatprep.mubr.f32.mxu0 0.0
      %432 = vmatmul.mubr.f32.gmra.mxu0 %v284
      %v433 = vpop.f32.mrf.mxu0
      %v434 = vadd.f32 0.0, %v433
      %v435 = vpop.f32.mrf.mxu0
      %436 = vdwg.mxu0
      %v438 = vsel %vm282, %v257, 0
      %v441 = vsel %vm286, %v254, 0
      %v444 = vsel %vm286, %v255, 0
      %v447 = vsel %vm286, %v256, 0
      %449 = vmatprep.subr.mxu0 0.0
      %450 = vmatpush1.msra.mxu0 0.0
      %451 = vmatprep.subr.mxu0 0.0
      %452 = vmatpush1.msra.mxu0 0.0
      %453 = vmatprep.subr.mxu0 0.0
      %454 = vmatpush1.msra.mxu0 0.0
      %455 = vmatprep.subr.mxu0 0.0
      %456 = vmatpush1.msra.mxu0 0.0
      %457 = vmatprep.subr.mxu0 0.0
      %458 = vmatpush1.msra.mxu0 0.0
      %459 = vmatprep.subr.mxu0 0.0
      %460 = vmatpush1.msra.mxu0 0.0
      %461 = vmatprep.subr.mxu0 0.0
      %462 = vmatpush1.msra.mxu0 0.0
      %463 = vmatprep.subr.mxu0 0.0
      %464 = vmatpush1.msra.mxu0 0.0
      %465 = vmatprep.subr.mxu0 0.0
      %466 = vmatpush1.msra.mxu0 0.0
      %467 = vmatprep.subr.mxu0 0.0
      %468 = vmatpush1.msra.mxu0 0.0
      %469 = vmatprep.subr.mxu0 0.0
      %470 = vmatpush1.msra.mxu0 0.0
      %471 = vmatprep.subr.mxu0 0.0
      %472 = vmatpush1.msra.mxu0 0.0
      %473 = vmatprep.subr.mxu0 0.0
      %474 = vmatpush1.msra.mxu0 0.0
      %475 = vmatprep.subr.mxu0 0.0
      %476 = vmatpush1.msra.mxu0 0.0
      %477 = vmatprep.subr.mxu0 0.0
      %478 = vmatpush1.msra.mxu0 0.0
      %479 = vmatprep.subr.mxu0 %v444
      %480 = vmatpush1.msra.mxu0 %v441
      %481 = vmatprep.subr.mxu0 0.0
      %482 = vmatpush2.msra.mxu0 0.0
      %483 = vmatprep.subr.mxu0 0.0
      %484 = vmatpush2.msra.mxu0 0.0
      %485 = vmatprep.subr.mxu0 0.0
      %486 = vmatpush2.msra.mxu0 0.0
      %487 = vmatprep.subr.mxu0 0.0
      %488 = vmatpush2.msra.mxu0 0.0
      %489 = vmatprep.subr.mxu0 0.0
      %490 = vmatpush2.msra.mxu0 0.0
      %491 = vmatprep.subr.mxu0 0.0
      %492 = vmatpush2.msra.mxu0 0.0
      %493 = vmatprep.subr.mxu0 0.0
      %494 = vmatpush2.msra.mxu0 0.0
      %495 = vmatprep.subr.mxu0 0.0
      %496 = vmatpush2.msra.mxu0 0.0
      %497 = vmatprep.subr.mxu0 0.0
      %498 = vmatpush2.msra.mxu0 0.0
      %499 = vmatprep.subr.mxu0 0.0
      %500 = vmatpush2.msra.mxu0 0.0
      %501 = vmatprep.subr.mxu0 0.0
      %502 = vmatpush2.msra.mxu0 0.0
      %503 = vmatprep.subr.mxu0 0.0
      %504 = vmatpush2.msra.mxu0 0.0
      %505 = vmatprep.subr.mxu0 0.0
      %506 = vmatpush2.msra.mxu0 0.0
      %507 = vmatprep.subr.mxu0 0.0
      %508 = vmatpush2.msra.mxu0 0.0
      %509 = vmatprep.subr.mxu0 0.0
      %510 = vmatpush2.msra.mxu0 0.0
      %511 = vmatprep.subr.mxu0 0.0
      %512 = vmatpush2.msra.mxu0 0.0
      %513 = vmatprep.mubr.f32.mxu0 0.0
      %514 = vmatmul.mubr.f32.gmra.mxu0 %v438
      %v515 = vpop.f32.mrf.mxu0
      %v516 = vadd.f32 %v363, %v515
      %v517 = vpop.f32.mrf.mxu0
      %v518 = vadd.f32 %v365, %v517
      %519 = vdwg.mxu0
      %520 = vmatprep.subr.mxu0 0.0
      %521 = vmatpush1.msra.mxu0 0.0
      %522 = vmatprep.subr.mxu0 0.0
      %523 = vmatpush1.msra.mxu0 0.0
      %524 = vmatprep.subr.mxu0 0.0
      %525 = vmatpush1.msra.mxu0 0.0
      %526 = vmatprep.subr.mxu0 0.0
      %527 = vmatpush1.msra.mxu0 0.0
      %528 = vmatprep.subr.mxu0 0.0
      %529 = vmatpush1.msra.mxu0 0.0
      %530 = vmatprep.subr.mxu0 0.0
      %531 = vmatpush1.msra.mxu0 0.0
      %532 = vmatprep.subr.mxu0 0.0
      %533 = vmatpush1.msra.mxu0 0.0
      %534 = vmatprep.subr.mxu0 0.0
      %535 = vmatpush1.msra.mxu0 0.0
      %536 = vmatprep.subr.mxu0 0.0
      %537 = vmatpush1.msra.mxu0 0.0
      %538 = vmatprep.subr.mxu0 0.0
      %539 = vmatpush1.msra.mxu0 0.0
      %540 = vmatprep.subr.mxu0 0.0
      %541 = vmatpush1.msra.mxu0 0.0
      %542 = vmatprep.subr.mxu0 0.0
      %543 = vmatpush1.msra.mxu0 0.0
      %544 = vmatprep.subr.mxu0 0.0
      %545 = vmatpush1.msra.mxu0 0.0
      %546 = vmatprep.subr.mxu0 0.0
      %547 = vmatpush1.msra.mxu0 0.0
      %548 = vmatprep.subr.mxu0 0.0
      %549 = vmatpush1.msra.mxu0 0.0
      %550 = vmatprep.subr.mxu0 0.0
      %551 = vmatpush1.msra.mxu0 %v447
      %552 = vmatprep.subr.mxu0 0.0
      %553 = vmatpush2.msra.mxu0 0.0
      %554 = vmatprep.subr.mxu0 0.0
      %555 = vmatpush2.msra.mxu0 0.0
      %556 = vmatprep.subr.mxu0 0.0
      %557 = vmatpush2.msra.mxu0 0.0
      %558 = vmatprep.subr.mxu0 0.0
      %559 = vmatpush2.msra.mxu0 0.0
      %560 = vmatprep.subr.mxu0 0.0
      %561 = vmatpush2.msra.mxu0 0.0
      %562 = vmatprep.subr.mxu0 0.0
      %563 = vmatpush2.msra.mxu0 0.0
      %564 = vmatprep.subr.mxu0 0.0
      %565 = vmatpush2.msra.mxu0 0.0
      %566 = vmatprep.subr.mxu0 0.0
      %567 = vmatpush2.msra.mxu0 0.0
      %568 = vmatprep.subr.mxu0 0.0
      %569 = vmatpush2.msra.mxu0 0.0
      %570 = vmatprep.subr.mxu0 0.0
      %571 = vmatpush2.msra.mxu0 0.0
      %572 = vmatprep.subr.mxu0 0.0
      %573 = vmatpush2.msra.mxu0 0.0
      %574 = vmatprep.subr.mxu0 0.0
      %575 = vmatpush2.msra.mxu0 0.0
      %576 = vmatprep.subr.mxu0 0.0
      %577 = vmatpush2.msra.mxu0 0.0
      %578 = vmatprep.subr.mxu0 0.0
      %579 = vmatpush2.msra.mxu0 0.0
      %580 = vmatprep.subr.mxu0 0.0
      %581 = vmatpush2.msra.mxu0 0.0
      %582 = vmatprep.subr.mxu0 0.0
      %583 = vmatpush2.msra.mxu0 0.0
      %584 = vmatprep.mubr.f32.mxu0 0.0
      %585 = vmatmul.mubr.f32.gmra.mxu0 %v438
      %v586 = vpop.f32.mrf.mxu0
      %v587 = vadd.f32 %v434, %v586
      %v588 = vpop.f32.mrf.mxu0
      %589 = vdwg.mxu0
      %590 = vrot.lane.b32.xlu0 %v229, 23
      %v591 = vpop.permute.xlu0 %590
      %592 = vrot.lane.b32.xlu0 %v233, 23
      %v593 = vpop.permute.xlu0 %592
      %594 = vrot.lane.b32.xlu0 %v230, 23
      %v595 = vpop.permute.xlu0 %594
      %vm596 = vcmp.lt.s32.totalorder %v226, 23
      %v597 = vsel %vm596, %v593, %v595
      %v598 = vsel %vm596, %v591, %v593
      %v599 = vsel %vm596, %v595, %v591
      %vm600 = vcmp.ge.s32.totalorder %v226, 23
      %vm601 = vcmp.ge.s32.totalorder %v227, 23
      %vm602 = vcmp.ge.s32.totalorder %v228, 23
      %v603 = vsel %vm600, 1, 0
      %v604 = vsel %vm601, 1, 0
      %v605 = vsel %vm602, 1, 0
      %vm606 = vcmp.eq.s32.totalorder %v603, 1
      %vm607 = vcmp.eq.s32.totalorder %v604, 1
      %vm608 = vcmp.eq.s32.totalorder %v605, 1
      %v609 = vsel %vm606, %v599, 0.0
      %v610 = vsel %vm607, %v598, 0.0
      %v611 = vsel %vm608, %v597, 0.0
      %s612 = scalar_lea.vmem %s1, 16
      %v613 = vld [vmem:[%s612] sm:$0xff]
      %v615 = vsel %vm282, %v613, 0
      %v618 = vsel %vm286, %v609, 0
      %v621 = vsel %vm286, %v610, 0
      %v624 = vsel %vm286, %v611, 0
      %626 = vmatprep.subr.mxu0 0.0
      %627 = vmatpush1.msra.mxu0 0.0
      %628 = vmatprep.subr.mxu0 0.0
      %629 = vmatpush1.msra.mxu0 0.0
      %630 = vmatprep.subr.mxu0 0.0
      %631 = vmatpush1.msra.mxu0 0.0
      %632 = vmatprep.subr.mxu0 0.0
      %633 = vmatpush1.msra.mxu0 0.0
      %634 = vmatprep.subr.mxu0 0.0
      %635 = vmatpush1.msra.mxu0 0.0
      %636 = vmatprep.subr.mxu0 0.0
      %637 = vmatpush1.msra.mxu0 0.0
      %638 = vmatprep.subr.mxu0 0.0
      %639 = vmatpush1.msra.mxu0 0.0
      %640 = vmatprep.subr.mxu0 0.0
      %641 = vmatpush1.msra.mxu0 0.0
      %642 = vmatprep.subr.mxu0 0.0
      %643 = vmatpush1.msra.mxu0 0.0
      %644 = vmatprep.subr.mxu0 0.0
      %645 = vmatpush1.msra.mxu0 0.0
      %646 = vmatprep.subr.mxu0 0.0
      %647 = vmatpush1.msra.mxu0 0.0
      %648 = vmatprep.subr.mxu0 0.0
      %649 = vmatpush1.msra.mxu0 0.0
      %650 = vmatprep.subr.mxu0 0.0
      %651 = vmatpush1.msra.mxu0 0.0
      %652 = vmatprep.subr.mxu0 0.0
      %653 = vmatpush1.msra.mxu0 0.0
      %654 = vmatprep.subr.mxu0 0.0
      %655 = vmatpush1.msra.mxu0 0.0
      %656 = vmatprep.subr.mxu0 %v621
      %657 = vmatpush1.msra.mxu0 %v618
      %658 = vmatprep.subr.mxu0 0.0
      %659 = vmatpush2.msra.mxu0 0.0
      %660 = vmatprep.subr.mxu0 0.0
      %661 = vmatpush2.msra.mxu0 0.0
      %662 = vmatprep.subr.mxu0 0.0
      %663 = vmatpush2.msra.mxu0 0.0
      %664 = vmatprep.subr.mxu0 0.0
      %665 = vmatpush2.msra.mxu0 0.0
      %666 = vmatprep.subr.mxu0 0.0
      %667 = vmatpush2.msra.mxu0 0.0
      %668 = vmatprep.subr.mxu0 0.0
      %669 = vmatpush2.msra.mxu0 0.0
      %670 = vmatprep.subr.mxu0 0.0
      %671 = vmatpush2.msra.mxu0 0.0
      %672 = vmatprep.subr.mxu0 0.0
      %673 = vmatpush2.msra.mxu0 0.0
      %674 = vmatprep.subr.mxu0 0.0
      %675 = vmatpush2.msra.mxu0 0.0
      %676 = vmatprep.subr.mxu0 0.0
      %677 = vmatpush2.msra.mxu0 0.0
      %678 = vmatprep.subr.mxu0 0.0
      %679 = vmatpush2.msra.mxu0 0.0
      %680 = vmatprep.subr.mxu0 0.0
      %681 = vmatpush2.msra.mxu0 0.0
      %682 = vmatprep.subr.mxu0 0.0
      %683 = vmatpush2.msra.mxu0 0.0
      %684 = vmatprep.subr.mxu0 0.0
      %685 = vmatpush2.msra.mxu0 0.0
      %686 = vmatprep.subr.mxu0 0.0
      %687 = vmatpush2.msra.mxu0 0.0
      %688 = vmatprep.subr.mxu0 0.0
      %689 = vmatpush2.msra.mxu0 0.0
      %690 = vmatprep.mubr.f32.mxu0 0.0
      %691 = vmatmul.mubr.f32.gmra.mxu0 %v615
      %v692 = vpop.f32.mrf.mxu0
      %v693 = vadd.f32 0.0, %v692
      %v694 = vpop.f32.mrf.mxu0
      %v695 = vadd.f32 0.0, %v694
      %696 = vdwg.mxu0
      %697 = vmatprep.subr.mxu0 0.0
      %698 = vmatpush1.msra.mxu0 0.0
      %699 = vmatprep.subr.mxu0 0.0
      %700 = vmatpush1.msra.mxu0 0.0
      %701 = vmatprep.subr.mxu0 0.0
      %702 = vmatpush1.msra.mxu0 0.0
      %703 = vmatprep.subr.mxu0 0.0
      %704 = vmatpush1.msra.mxu0 0.0
      %705 = vmatprep.subr.mxu0 0.0
      %706 = vmatpush1.msra.mxu0 0.0
      %707 = vmatprep.subr.mxu0 0.0
      %708 = vmatpush1.msra.mxu0 0.0
      %709 = vmatprep.subr.mxu0 0.0
      %710 = vmatpush1.msra.mxu0 0.0
      %711 = vmatprep.subr.mxu0 0.0
      %712 = vmatpush1.msra.mxu0 0.0
      %713 = vmatprep.subr.mxu0 0.0
      %714 = vmatpush1.msra.mxu0 0.0
      %715 = vmatprep.subr.mxu0 0.0
      %716 = vmatpush1.msra.mxu0 0.0
      %717 = vmatprep.subr.mxu0 0.0
      %718 = vmatpush1.msra.mxu0 0.0
      %719 = vmatprep.subr.mxu0 0.0
      %720 = vmatpush1.msra.mxu0 0.0
      %721 = vmatprep.subr.mxu0 0.0
      %722 = vmatpush1.msra.mxu0 0.0
      %723 = vmatprep.subr.mxu0 0.0
      %724 = vmatpush1.msra.mxu0 0.0
      %725 = vmatprep.subr.mxu0 0.0
      %726 = vmatpush1.msra.mxu0 0.0
      %727 = vmatprep.subr.mxu0 0.0
      %728 = vmatpush1.msra.mxu0 %v624
      %729 = vmatprep.subr.mxu0 0.0
      %730 = vmatpush2.msra.mxu0 0.0
      %731 = vmatprep.subr.mxu0 0.0
      %732 = vmatpush2.msra.mxu0 0.0
      %733 = vmatprep.subr.mxu0 0.0
      %734 = vmatpush2.msra.mxu0 0.0
      %735 = vmatprep.subr.mxu0 0.0
      %736 = vmatpush2.msra.mxu0 0.0
      %737 = vmatprep.subr.mxu0 0.0
      %738 = vmatpush2.msra.mxu0 0.0
      %739 = vmatprep.subr.mxu0 0.0
      %740 = vmatpush2.msra.mxu0 0.0
      %741 = vmatprep.subr.mxu0 0.0
      %742 = vmatpush2.msra.mxu0 0.0
      %743 = vmatprep.subr.mxu0 0.0
      %744 = vmatpush2.msra.mxu0 0.0
      %745 = vmatprep.subr.mxu0 0.0
      %746 = vmatpush2.msra.mxu0 0.0
      %747 = vmatprep.subr.mxu0 0.0
      %748 = vmatpush2.msra.mxu0 0.0
      %749 = vmatprep.subr.mxu0 0.0
      %750 = vmatpush2.msra.mxu0 0.0
      %751 = vmatprep.subr.mxu0 0.0
      %752 = vmatpush2.msra.mxu0 0.0
      %753 = vmatprep.subr.mxu0 0.0
      %754 = vmatpush2.msra.mxu0 0.0
      %755 = vmatprep.subr.mxu0 0.0
      %756 = vmatpush2.msra.mxu0 0.0
      %757 = vmatprep.subr.mxu0 0.0
      %758 = vmatpush2.msra.mxu0 0.0
      %759 = vmatprep.subr.mxu0 0.0
      %760 = vmatpush2.msra.mxu0 0.0
      %761 = vmatprep.mubr.f32.mxu0 0.0
      %762 = vmatmul.mubr.f32.gmra.mxu0 %v615
      %v763 = vpop.f32.mrf.mxu0
      %v764 = vadd.f32 0.0, %v763
      %v765 = vpop.f32.mrf.mxu0
      %766 = vdwg.mxu0
      %v767 = vadd.f32 %v516, %v693
      %v768 = vadd.f32 %v518, %v695
      %v769 = vadd.f32 %v587, %v764
      %770 = vrot.lane.b32.xlu0 %v229, 1
      %v771 = vpop.permute.xlu0 %770
      %772 = vrot.lane.b32.xlu0 %v233, 1
      %v773 = vpop.permute.xlu0 %772
      %774 = vrot.lane.b32.xlu0 %v230, 1
      %v775 = vpop.permute.xlu0 %774
      %vm776 = vcmp.lt.s32.totalorder %v226, 1
      %v777 = vsel %vm776, %v773, %v775
      %v778 = vsel %vm776, %v771, %v773
      %v779 = vsel %vm776, %v775, %v771
      %vm780 = vcmp.ge.s32.totalorder %v226, 1
      %vm781 = vcmp.ge.s32.totalorder %v227, 1
      %vm782 = vcmp.ge.s32.totalorder %v228, 1
      %v783 = vsel %vm780, 1, 0
      %v784 = vsel %vm781, 1, 0
      %v785 = vsel %vm782, 1, 0
      %vm786 = vcmp.eq.s32.totalorder %v783, 1
      %vm787 = vcmp.eq.s32.totalorder %v784, 1
      %vm788 = vcmp.eq.s32.totalorder %v785, 1
      %v789 = vsel %vm786, %v779, 0.0
      %v790 = vsel %vm787, %v778, 0.0
      %v791 = vsel %vm788, %v777, 0.0
      %s792 = scalar_lea.vmem %s1, 24
      %v793 = vld [vmem:[%s792] sm:$0xff]
      %v795 = vsel %vm282, %v793, 0
      %v798 = vsel %vm286, %v789, 0
      %v801 = vsel %vm286, %v790, 0
      %v804 = vsel %vm286, %v791, 0
      %806 = vmatprep.subr.mxu0 0.0
      %807 = vmatpush1.msra.mxu0 0.0
      %808 = vmatprep.subr.mxu0 0.0
      %809 = vmatpush1.msra.mxu0 0.0
      %810 = vmatprep.subr.mxu0 0.0
      %811 = vmatpush1.msra.mxu0 0.0
      %812 = vmatprep.subr.mxu0 0.0
      %813 = vmatpush1.msra.mxu0 0.0
      %814 = vmatprep.subr.mxu0 0.0
      %815 = vmatpush1.msra.mxu0 0.0
      %816 = vmatprep.subr.mxu0 0.0
      %817 = vmatpush1.msra.mxu0 0.0
      %818 = vmatprep.subr.mxu0 0.0
      %819 = vmatpush1.msra.mxu0 0.0
      %820 = vmatprep.subr.mxu0 0.0
      %821 = vmatpush1.msra.mxu0 0.0
      %822 = vmatprep.subr.mxu0 0.0
      %823 = vmatpush1.msra.mxu0 0.0
      %824 = vmatprep.subr.mxu0 0.0
      %825 = vmatpush1.msra.mxu0 0.0
      %826 = vmatprep.subr.mxu0 0.0
      %827 = vmatpush1.msra.mxu0 0.0
      %828 = vmatprep.subr.mxu0 0.0
      %829 = vmatpush1.msra.mxu0 0.0
      %830 = vmatprep.subr.mxu0 0.0
      %831 = vmatpush1.msra.mxu0 0.0
      %832 = vmatprep.subr.mxu0 0.0
      %833 = vmatpush1.msra.mxu0 0.0
      %834 = vmatprep.subr.mxu0 0.0
      %835 = vmatpush1.msra.mxu0 0.0
      %836 = vmatprep.subr.mxu0 %v801
      %837 = vmatpush1.msra.mxu0 %v798
      %838 = vmatprep.subr.mxu0 0.0
      %839 = vmatpush2.msra.mxu0 0.0
      %840 = vmatprep.subr.mxu0 0.0
      %841 = vmatpush2.msra.mxu0 0.0
      %842 = vmatprep.subr.mxu0 0.0
      %843 = vmatpush2.msra.mxu0 0.0
      %844 = vmatprep.subr.mxu0 0.0
      %845 = vmatpush2.msra.mxu0 0.0
      %846 = vmatprep.subr.mxu0 0.0
      %847 = vmatpush2.msra.mxu0 0.0
      %848 = vmatprep.subr.mxu0 0.0
      %849 = vmatpush2.msra.mxu0 0.0
      %850 = vmatprep.subr.mxu0 0.0
      %851 = vmatpush2.msra.mxu0 0.0
      %852 = vmatprep.subr.mxu0 0.0
      %853 = vmatpush2.msra.mxu0 0.0
      %854 = vmatprep.subr.mxu0 0.0
      %855 = vmatpush2.msra.mxu0 0.0
      %856 = vmatprep.subr.mxu0 0.0
      %857 = vmatpush2.msra.mxu0 0.0
      %858 = vmatprep.subr.mxu0 0.0
      %859 = vmatpush2.msra.mxu0 0.0
      %860 = vmatprep.subr.mxu0 0.0
      %861 = vmatpush2.msra.mxu0 0.0
      %862 = vmatprep.subr.mxu0 0.0
      %863 = vmatpush2.msra.mxu0 0.0
      %864 = vmatprep.subr.mxu0 0.0
      %865 = vmatpush2.msra.mxu0 0.0
      %866 = vmatprep.subr.mxu0 0.0
      %867 = vmatpush2.msra.mxu0 0.0
      %868 = vmatprep.subr.mxu0 0.0
      %869 = vmatpush2.msra.mxu0 0.0
      %870 = vmatprep.mubr.f32.mxu0 0.0
      %871 = vmatmul.mubr.f32.gmra.mxu0 %v795
      %v872 = vpop.f32.mrf.mxu0
      %v873 = vadd.f32 0.0, %v872
      %v874 = vpop.f32.mrf.mxu0
      %v875 = vadd.f32 0.0, %v874
      %876 = vdwg.mxu0
      %877 = vmatprep.subr.mxu0 0.0
      %878 = vmatpush1.msra.mxu0 0.0
      %879 = vmatprep.subr.mxu0 0.0
      %880 = vmatpush1.msra.mxu0 0.0
      %881 = vmatprep.subr.mxu0 0.0
      %882 = vmatpush1.msra.mxu0 0.0
      %883 = vmatprep.subr.mxu0 0.0
      %884 = vmatpush1.msra.mxu0 0.0
      %885 = vmatprep.subr.mxu0 0.0
      %886 = vmatpush1.msra.mxu0 0.0
      %887 = vmatprep.subr.mxu0 0.0
      %888 = vmatpush1.msra.mxu0 0.0
      %889 = vmatprep.subr.mxu0 0.0
      %890 = vmatpush1.msra.mxu0 0.0
      %891 = vmatprep.subr.mxu0 0.0
      %892 = vmatpush1.msra.mxu0 0.0
      %893 = vmatprep.subr.mxu0 0.0
      %894 = vmatpush1.msra.mxu0 0.0
      %895 = vmatprep.subr.mxu0 0.0
      %896 = vmatpush1.msra.mxu0 0.0
      %897 = vmatprep.subr.mxu0 0.0
      %898 = vmatpush1.msra.mxu0 0.0
      %899 = vmatprep.subr.mxu0 0.0
      %900 = vmatpush1.msra.mxu0 0.0
      %901 = vmatprep.subr.mxu0 0.0
      %902 = vmatpush1.msra.mxu0 0.0
      %903 = vmatprep.subr.mxu0 0.0
      %904 = vmatpush1.msra.mxu0 0.0
      %905 = vmatprep.subr.mxu0 0.0
      %906 = vmatpush1.msra.mxu0 0.0
      %907 = vmatprep.subr.mxu0 0.0
      %908 = vmatpush1.msra.mxu0 %v804
      %909 = vmatprep.subr.mxu0 0.0
      %910 = vmatpush2.msra.mxu0 0.0
      %911 = vmatprep.subr.mxu0 0.0
      %912 = vmatpush2.msra.mxu0 0.0
      %913 = vmatprep.subr.mxu0 0.0
      %914 = vmatpush2.msra.mxu0 0.0
      %915 = vmatprep.subr.mxu0 0.0
      %916 = vmatpush2.msra.mxu0 0.0
      %917 = vmatprep.subr.mxu0 0.0
      %918 = vmatpush2.msra.mxu0 0.0
      %919 = vmatprep.subr.mxu0 0.0
      %920 = vmatpush2.msra.mxu0 0.0
      %921 = vmatprep.subr.mxu0 0.0
      %922 = vmatpush2.msra.mxu0 0.0
      %923 = vmatprep.subr.mxu0 0.0
      %924 = vmatpush2.msra.mxu0 0.0
      %925 = vmatprep.subr.mxu0 0.0
      %926 = vmatpush2.msra.mxu0 0.0
      %927 = vmatprep.subr.mxu0 0.0
      %928 = vmatpush2.msra.mxu0 0.0
      %929 = vmatprep.subr.mxu0 0.0
      %930 = vmatpush2.msra.mxu0 0.0
      %931 = vmatprep.subr.mxu0 0.0
      %932 = vmatpush2.msra.mxu0 0.0
      %933 = vmatprep.subr.mxu0 0.0
      %934 = vmatpush2.msra.mxu0 0.0
      %935 = vmatprep.subr.mxu0 0.0
      %936 = vmatpush2.msra.mxu0 0.0
      %937 = vmatprep.subr.mxu0 0.0
      %938 = vmatpush2.msra.mxu0 0.0
      %939 = vmatprep.subr.mxu0 0.0
      %940 = vmatpush2.msra.mxu0 0.0
      %941 = vmatprep.mubr.f32.mxu0 0.0
      %942 = vmatmul.mubr.f32.gmra.mxu0 %v795
      %v943 = vpop.f32.mrf.mxu0
      %v944 = vadd.f32 0.0, %v943
      %v945 = vpop.f32.mrf.mxu0
      %946 = vdwg.mxu0
      %v947 = vadd.f32 %v767, %v873
      %v948 = vadd.f32 %v768, %v875
      %v949 = vadd.f32 %v769, %v944
      %s950 = scalar_lea.vmem %s1, 32
      %v951 = vld [vmem:[%s950] sm:$0xff]
      %v953 = vsel %vm282, %v951, 0
      %v955 = vsel %vm286, %v229, 0
      %v957 = vsel %vm286, %v233, 0
      %v959 = vsel %vm286, %v230, 0
      %961 = vmatprep.subr.mxu0 0.0
      %962 = vmatpush1.msra.mxu0 0.0
      %963 = vmatprep.subr.mxu0 0.0
      %964 = vmatpush1.msra.mxu0 0.0
      %965 = vmatprep.subr.mxu0 0.0
      %966 = vmatpush1.msra.mxu0 0.0
      %967 = vmatprep.subr.mxu0 0.0
      %968 = vmatpush1.msra.mxu0 0.0
      %969 = vmatprep.subr.mxu0 0.0
      %970 = vmatpush1.msra.mxu0 0.0
      %971 = vmatprep.subr.mxu0 0.0
      %972 = vmatpush1.msra.mxu0 0.0
      %973 = vmatprep.subr.mxu0 0.0
      %974 = vmatpush1.msra.mxu0 0.0
      %975 = vmatprep.subr.mxu0 0.0
      %976 = vmatpush1.msra.mxu0 0.0
      %977 = vmatprep.subr.mxu0 0.0
      %978 = vmatpush1.msra.mxu0 0.0
      %979 = vmatprep.subr.mxu0 0.0
      %980 = vmatpush1.msra.mxu0 0.0
      %981 = vmatprep.subr.mxu0 0.0
      %982 = vmatpush1.msra.mxu0 0.0
      %983 = vmatprep.subr.mxu0 0.0
      %984 = vmatpush1.msra.mxu0 0.0
      %985 = vmatprep.subr.mxu0 0.0
      %986 = vmatpush1.msra.mxu0 0.0
      %987 = vmatprep.subr.mxu0 0.0
      %988 = vmatpush1.msra.mxu0 0.0
      %989 = vmatprep.subr.mxu0 0.0
      %990 = vmatpush1.msra.mxu0 0.0
      %991 = vmatprep.subr.mxu0 %v957
      %992 = vmatpush1.msra.mxu0 %v955
      %993 = vmatprep.subr.mxu0 0.0
      %994 = vmatpush2.msra.mxu0 0.0
      %995 = vmatprep.subr.mxu0 0.0
      %996 = vmatpush2.msra.mxu0 0.0
      %997 = vmatprep.subr.mxu0 0.0
      %998 = vmatpush2.msra.mxu0 0.0
      %999 = vmatprep.subr.mxu0 0.0
      %1000 = vmatpush2.msra.mxu0 0.0
      %1001 = vmatprep.subr.mxu0 0.0
      %1002 = vmatpush2.msra.mxu0 0.0
      %1003 = vmatprep.subr.mxu0 0.0
      %1004 = vmatpush2.msra.mxu0 0.0
      %1005 = vmatprep.subr.mxu0 0.0
      %1006 = vmatpush2.msra.mxu0 0.0
      %1007 = vmatprep.subr.mxu0 0.0
      %1008 = vmatpush2.msra.mxu0 0.0
      %1009 = vmatprep.subr.mxu0 0.0
      %1010 = vmatpush2.msra.mxu0 0.0
      %1011 = vmatprep.subr.mxu0 0.0
      %1012 = vmatpush2.msra.mxu0 0.0
      %1013 = vmatprep.subr.mxu0 0.0
      %1014 = vmatpush2.msra.mxu0 0.0
      %1015 = vmatprep.subr.mxu0 0.0
      %1016 = vmatpush2.msra.mxu0 0.0
      %1017 = vmatprep.subr.mxu0 0.0
      %1018 = vmatpush2.msra.mxu0 0.0
      %1019 = vmatprep.subr.mxu0 0.0
      %1020 = vmatpush2.msra.mxu0 0.0
      %1021 = vmatprep.subr.mxu0 0.0
      %1022 = vmatpush2.msra.mxu0 0.0
      %1023 = vmatprep.subr.mxu0 0.0
      %1024 = vmatpush2.msra.mxu0 0.0
      %1025 = vmatprep.mubr.f32.mxu0 0.0
      %1026 = vmatmul.mubr.f32.gmra.mxu0 %v953
      %v1027 = vpop.f32.mrf.mxu0
      %v1028 = vadd.f32 0.0, %v1027
      %v1029 = vpop.f32.mrf.mxu0
      %v1030 = vadd.f32 0.0, %v1029
      %1031 = vdwg.mxu0
      %1032 = vmatprep.subr.mxu0 0.0
      %1033 = vmatpush1.msra.mxu0 0.0
      %1034 = vmatprep.subr.mxu0 0.0
      %1035 = vmatpush1.msra.mxu0 0.0
      %1036 = vmatprep.subr.mxu0 0.0
      %1037 = vmatpush1.msra.mxu0 0.0
      %1038 = vmatprep.subr.mxu0 0.0
      %1039 = vmatpush1.msra.mxu0 0.0
      %1040 = vmatprep.subr.mxu0 0.0
      %1041 = vmatpush1.msra.mxu0 0.0
      %1042 = vmatprep.subr.mxu0 0.0
      %1043 = vmatpush1.msra.mxu0 0.0
      %1044 = vmatprep.subr.mxu0 0.0
      %1045 = vmatpush1.msra.mxu0 0.0
      %1046 = vmatprep.subr.mxu0 0.0
      %1047 = vmatpush1.msra.mxu0 0.0
      %1048 = vmatprep.subr.mxu0 0.0
      %1049 = vmatpush1.msra.mxu0 0.0
      %1050 = vmatprep.subr.mxu0 0.0
      %1051 = vmatpush1.msra.mxu0 0.0
      %1052 = vmatprep.subr.mxu0 0.0
      %1053 = vmatpush1.msra.mxu0 0.0
      %1054 = vmatprep.subr.mxu0 0.0
      %1055 = vmatpush1.msra.mxu0 0.0
      %1056 = vmatprep.subr.mxu0 0.0
      %1057 = vmatpush1.msra.mxu0 0.0
      %1058 = vmatprep.subr.mxu0 0.0
      %1059 = vmatpush1.msra.mxu0 0.0
      %1060 = vmatprep.subr.mxu0 0.0
      %1061 = vmatpush1.msra.mxu0 0.0
      %1062 = vmatprep.subr.mxu0 0.0
      %1063 = vmatpush1.msra.mxu0 %v959
      %1064 = vmatprep.subr.mxu0 0.0
      %1065 = vmatpush2.msra.mxu0 0.0
      %1066 = vmatprep.subr.mxu0 0.0
      %1067 = vmatpush2.msra.mxu0 0.0
      %1068 = vmatprep.subr.mxu0 0.0
      %1069 = vmatpush2.msra.mxu0 0.0
      %1070 = vmatprep.subr.mxu0 0.0
      %1071 = vmatpush2.msra.mxu0 0.0
      %1072 = vmatprep.subr.mxu0 0.0
      %1073 = vmatpush2.msra.mxu0 0.0
      %1074 = vmatprep.subr.mxu0 0.0
      %1075 = vmatpush2.msra.mxu0 0.0
      %1076 = vmatprep.subr.mxu0 0.0
      %1077 = vmatpush2.msra.mxu0 0.0
      %1078 = vmatprep.subr.mxu0 0.0
      %1079 = vmatpush2.msra.mxu0 0.0
      %1080 = vmatprep.subr.mxu0 0.0
      %1081 = vmatpush2.msra.mxu0 0.0
      %1082 = vmatprep.subr.mxu0 0.0
      %1083 = vmatpush2.msra.mxu0 0.0
      %1084 = vmatprep.subr.mxu0 0.0
      %1085 = vmatpush2.msra.mxu0 0.0
      %1086 = vmatprep.subr.mxu0 0.0
      %1087 = vmatpush2.msra.mxu0 0.0
      %1088 = vmatprep.subr.mxu0 0.0
      %1089 = vmatpush2.msra.mxu0 0.0
      %1090 = vmatprep.subr.mxu0 0.0
      %1091 = vmatpush2.msra.mxu0 0.0
      %1092 = vmatprep.subr.mxu0 0.0
      %1093 = vmatpush2.msra.mxu0 0.0
      %1094 = vmatprep.subr.mxu0 0.0
      %1095 = vmatpush2.msra.mxu0 0.0
      %1096 = vmatprep.mubr.f32.mxu0 0.0
      %1097 = vmatmul.mubr.f32.gmra.mxu0 %v953
      %v1098 = vpop.f32.mrf.mxu0
      %v1099 = vadd.f32 0.0, %v1098
      %v1100 = vpop.f32.mrf.mxu0
      %1101 = vdwg.mxu0
      %v1102 = vadd.f32 %v947, %v1028
      %v1103 = vadd.f32 %v948, %v1030
      %v1104 = vadd.f32 %v949, %v1099
      %1105 = vrot.lane.b32.xlu0 %v229, 127
      %v1106 = vpop.permute.xlu0 %1105
      %1107 = vrot.lane.b32.xlu0 %v233, 127
      %v1108 = vpop.permute.xlu0 %1107
      %1109 = vrot.lane.b32.xlu0 %v230, 127
      %v1110 = vpop.permute.xlu0 %1109
      %vm1111 = vcmp.lt.s32.totalorder %v226, 127
      %v1112 = vsel %vm1111, %v1108, %v1110
      %v1113 = vsel %vm1111, %v1106, %v1108
      %v1114 = vsel %vm1111, %v1110, %v1106
      %vm1115 = vcmp.lt.s32.totalorder %v226, 383
      %vm1116 = vcmp.lt.s32.totalorder %v227, 383
      %vm1117 = vcmp.lt.s32.totalorder %v228, 383
      %v1118 = vsel %vm1115, 1, 0
      %v1119 = vsel %vm1116, 1, 0
      %v1120 = vsel %vm1117, 1, 0
      %vm1121 = vcmp.eq.s32.totalorder %v1118, 1
      %vm1122 = vcmp.eq.s32.totalorder %v1119, 1
      %vm1123 = vcmp.eq.s32.totalorder %v1120, 1
      %v1124 = vsel %vm1121, %v1113, 0.0
      %v1125 = vsel %vm1122, %v1112, 0.0
      %v1126 = vsel %vm1123, %v1114, 0.0
      %s1127 = scalar_lea.vmem %s1, 40
      %v1128 = vld [vmem:[%s1127] sm:$0xff]
      %v1130 = vsel %vm282, %v1128, 0
      %v1133 = vsel %vm286, %v1124, 0
      %v1136 = vsel %vm286, %v1125, 0
      %v1139 = vsel %vm286, %v1126, 0
      %1141 = vmatprep.subr.mxu0 0.0
      %1142 = vmatpush1.msra.mxu0 0.0
      %1143 = vmatprep.subr.mxu0 0.0
      %1144 = vmatpush1.msra.mxu0 0.0
      %1145 = vmatprep.subr.mxu0 0.0
      %1146 = vmatpush1.msra.mxu0 0.0
      %1147 = vmatprep.subr.mxu0 0.0
      %1148 = vmatpush1.msra.mxu0 0.0
      %1149 = vmatprep.subr.mxu0 0.0
      %1150 = vmatpush1.msra.mxu0 0.0
      %1151 = vmatprep.subr.mxu0 0.0
      %1152 = vmatpush1.msra.mxu0 0.0
      %1153 = vmatprep.subr.mxu0 0.0
      %1154 = vmatpush1.msra.mxu0 0.0
      %1155 = vmatprep.subr.mxu0 0.0
      %1156 = vmatpush1.msra.mxu0 0.0
      %1157 = vmatprep.subr.mxu0 0.0
      %1158 = vmatpush1.msra.mxu0 0.0
      %1159 = vmatprep.subr.mxu0 0.0
      %1160 = vmatpush1.msra.mxu0 0.0
      %1161 = vmatprep.subr.mxu0 0.0
      %1162 = vmatpush1.msra.mxu0 0.0
      %1163 = vmatprep.subr.mxu0 0.0
      %1164 = vmatpush1.msra.mxu0 0.0
      %1165 = vmatprep.subr.mxu0 0.0
      %1166 = vmatpush1.msra.mxu0 0.0
      %1167 = vmatprep.subr.mxu0 0.0
      %1168 = vmatpush1.msra.mxu0 0.0
      %1169 = vmatprep.subr.mxu0 0.0
      %1170 = vmatpush1.msra.mxu0 0.0
      %1171 = vmatprep.subr.mxu0 %v1136
      %1172 = vmatpush1.msra.mxu0 %v1133
      %1173 = vmatprep.subr.mxu0 0.0
      %1174 = vmatpush2.msra.mxu0 0.0
      %1175 = vmatprep.subr.mxu0 0.0
      %1176 = vmatpush2.msra.mxu0 0.0
      %1177 = vmatprep.subr.mxu0 0.0
      %1178 = vmatpush2.msra.mxu0 0.0
      %1179 = vmatprep.subr.mxu0 0.0
      %1180 = vmatpush2.msra.mxu0 0.0
      %1181 = vmatprep.subr.mxu0 0.0
      %1182 = vmatpush2.msra.mxu0 0.0
      %1183 = vmatprep.subr.mxu0 0.0
      %1184 = vmatpush2.msra.mxu0 0.0
      %1185 = vmatprep.subr.mxu0 0.0
      %1186 = vmatpush2.msra.mxu0 0.0
      %1187 = vmatprep.subr.mxu0 0.0
      %1188 = vmatpush2.msra.mxu0 0.0
      %1189 = vmatprep.subr.mxu0 0.0
      %1190 = vmatpush2.msra.mxu0 0.0
      %1191 = vmatprep.subr.mxu0 0.0
      %1192 = vmatpush2.msra.mxu0 0.0
      %1193 = vmatprep.subr.mxu0 0.0
      %1194 = vmatpush2.msra.mxu0 0.0
      %1195 = vmatprep.subr.mxu0 0.0
      %1196 = vmatpush2.msra.mxu0 0.0
      %1197 = vmatprep.subr.mxu0 0.0
      %1198 = vmatpush2.msra.mxu0 0.0
      %1199 = vmatprep.subr.mxu0 0.0
      %1200 = vmatpush2.msra.mxu0 0.0
      %1201 = vmatprep.subr.mxu0 0.0
      %1202 = vmatpush2.msra.mxu0 0.0
      %1203 = vmatprep.subr.mxu0 0.0
      %1204 = vmatpush2.msra.mxu0 0.0
      %1205 = vmatprep.mubr.f32.mxu0 0.0
      %1206 = vmatmul.mubr.f32.gmra.mxu0 %v1130
      %v1207 = vpop.f32.mrf.mxu0
      %v1208 = vadd.f32 0.0, %v1207
      %v1209 = vpop.f32.mrf.mxu0
      %v1210 = vadd.f32 0.0, %v1209
      %1211 = vdwg.mxu0
      %1212 = vmatprep.subr.mxu0 0.0
      %1213 = vmatpush1.msra.mxu0 0.0
      %1214 = vmatprep.subr.mxu0 0.0
      %1215 = vmatpush1.msra.mxu0 0.0
      %1216 = vmatprep.subr.mxu0 0.0
      %1217 = vmatpush1.msra.mxu0 0.0
      %1218 = vmatprep.subr.mxu0 0.0
      %1219 = vmatpush1.msra.mxu0 0.0
      %1220 = vmatprep.subr.mxu0 0.0
      %1221 = vmatpush1.msra.mxu0 0.0
      %1222 = vmatprep.subr.mxu0 0.0
      %1223 = vmatpush1.msra.mxu0 0.0
      %1224 = vmatprep.subr.mxu0 0.0
      %1225 = vmatpush1.msra.mxu0 0.0
      %1226 = vmatprep.subr.mxu0 0.0
      %1227 = vmatpush1.msra.mxu0 0.0
      %1228 = vmatprep.subr.mxu0 0.0
      %1229 = vmatpush1.msra.mxu0 0.0
      %1230 = vmatprep.subr.mxu0 0.0
      %1231 = vmatpush1.msra.mxu0 0.0
      %1232 = vmatprep.subr.mxu0 0.0
      %1233 = vmatpush1.msra.mxu0 0.0
      %1234 = vmatprep.subr.mxu0 0.0
      %1235 = vmatpush1.msra.mxu0 0.0
      %1236 = vmatprep.subr.mxu0 0.0
      %1237 = vmatpush1.msra.mxu0 0.0
      %1238 = vmatprep.subr.mxu0 0.0
      %1239 = vmatpush1.msra.mxu0 0.0
      %1240 = vmatprep.subr.mxu0 0.0
      %1241 = vmatpush1.msra.mxu0 0.0
      %1242 = vmatprep.subr.mxu0 0.0
      %1243 = vmatpush1.msra.mxu0 %v1139
      %1244 = vmatprep.subr.mxu0 0.0
      %1245 = vmatpush2.msra.mxu0 0.0
      %1246 = vmatprep.subr.mxu0 0.0
      %1247 = vmatpush2.msra.mxu0 0.0
      %1248 = vmatprep.subr.mxu0 0.0
      %1249 = vmatpush2.msra.mxu0 0.0
      %1250 = vmatprep.subr.mxu0 0.0
      %1251 = vmatpush2.msra.mxu0 0.0
      %1252 = vmatprep.subr.mxu0 0.0
      %1253 = vmatpush2.msra.mxu0 0.0
      %1254 = vmatprep.subr.mxu0 0.0
      %1255 = vmatpush2.msra.mxu0 0.0
      %1256 = vmatprep.subr.mxu0 0.0
      %1257 = vmatpush2.msra.mxu0 0.0
      %1258 = vmatprep.subr.mxu0 0.0
      %1259 = vmatpush2.msra.mxu0 0.0
      %1260 = vmatprep.subr.mxu0 0.0
      %1261 = vmatpush2.msra.mxu0 0.0
      %1262 = vmatprep.subr.mxu0 0.0
      %1263 = vmatpush2.msra.mxu0 0.0
      %1264 = vmatprep.subr.mxu0 0.0
      %1265 = vmatpush2.msra.mxu0 0.0
      %1266 = vmatprep.subr.mxu0 0.0
      %1267 = vmatpush2.msra.mxu0 0.0
      %1268 = vmatprep.subr.mxu0 0.0
      %1269 = vmatpush2.msra.mxu0 0.0
      %1270 = vmatprep.subr.mxu0 0.0
      %1271 = vmatpush2.msra.mxu0 0.0
      %1272 = vmatprep.subr.mxu0 0.0
      %1273 = vmatpush2.msra.mxu0 0.0
      %1274 = vmatprep.subr.mxu0 0.0
      %1275 = vmatpush2.msra.mxu0 0.0
      %1276 = vmatprep.mubr.f32.mxu0 0.0
      %1277 = vmatmul.mubr.f32.gmra.mxu0 %v1130
      %v1278 = vpop.f32.mrf.mxu0
      %v1279 = vadd.f32 0.0, %v1278
      %v1280 = vpop.f32.mrf.mxu0
      %1281 = vdwg.mxu0
      %v1282 = vadd.f32 %v1102, %v1208
      %v1283 = vadd.f32 %v1103, %v1210
      %v1284 = vadd.f32 %v1104, %v1279
      %1285 = vrot.lane.b32.xlu0 %v229, 105
      %v1286 = vpop.permute.xlu0 %1285
      %1287 = vrot.lane.b32.xlu0 %v233, 105
      %v1288 = vpop.permute.xlu0 %1287
      %1289 = vrot.lane.b32.xlu0 %v230, 105
      %v1290 = vpop.permute.xlu0 %1289
      %vm1291 = vcmp.lt.s32.totalorder %v226, 105
      %v1292 = vsel %vm1291, %v1288, %v1290
      %v1293 = vsel %vm1291, %v1286, %v1288
      %v1294 = vsel %vm1291, %v1290, %v1286
      %vm1295 = vcmp.lt.s32.totalorder %v226, 361
      %vm1296 = vcmp.lt.s32.totalorder %v227, 361
      %vm1297 = vcmp.lt.s32.totalorder %v228, 361
      %v1298 = vsel %vm1295, 1, 0
      %v1299 = vsel %vm1296, 1, 0
      %v1300 = vsel %vm1297, 1, 0
      %vm1301 = vcmp.eq.s32.totalorder %v1298, 1
      %vm1302 = vcmp.eq.s32.totalorder %v1299, 1
      %vm1303 = vcmp.eq.s32.totalorder %v1300, 1
      %v1304 = vsel %vm1301, %v1293, 0.0
      %v1305 = vsel %vm1302, %v1292, 0.0
      %v1306 = vsel %vm1303, %v1294, 0.0
      %s1307 = scalar_lea.vmem %s1, 48
      %v1308 = vld [vmem:[%s1307] sm:$0xff]
      %v1310 = vsel %vm282, %v1308, 0
      %v1313 = vsel %vm286, %v1304, 0
      %v1316 = vsel %vm286, %v1305, 0
      %v1319 = vsel %vm286, %v1306, 0
      %1321 = vmatprep.subr.mxu0 0.0
      %1322 = vmatpush1.msra.mxu0 0.0
      %1323 = vmatprep.subr.mxu0 0.0
      %1324 = vmatpush1.msra.mxu0 0.0
      %1325 = vmatprep.subr.mxu0 0.0
      %1326 = vmatpush1.msra.mxu0 0.0
      %1327 = vmatprep.subr.mxu0 0.0
      %1328 = vmatpush1.msra.mxu0 0.0
      %1329 = vmatprep.subr.mxu0 0.0
      %1330 = vmatpush1.msra.mxu0 0.0
      %1331 = vmatprep.subr.mxu0 0.0
      %1332 = vmatpush1.msra.mxu0 0.0
      %1333 = vmatprep.subr.mxu0 0.0
      %1334 = vmatpush1.msra.mxu0 0.0
      %1335 = vmatprep.subr.mxu0 0.0
      %1336 = vmatpush1.msra.mxu0 0.0
      %1337 = vmatprep.subr.mxu0 0.0
      %1338 = vmatpush1.msra.mxu0 0.0
      %1339 = vmatprep.subr.mxu0 0.0
      %1340 = vmatpush1.msra.mxu0 0.0
      %1341 = vmatprep.subr.mxu0 0.0
      %1342 = vmatpush1.msra.mxu0 0.0
      %1343 = vmatprep.subr.mxu0 0.0
      %1344 = vmatpush1.msra.mxu0 0.0
      %1345 = vmatprep.subr.mxu0 0.0
      %1346 = vmatpush1.msra.mxu0 0.0
      %1347 = vmatprep.subr.mxu0 0.0
      %1348 = vmatpush1.msra.mxu0 0.0
      %1349 = vmatprep.subr.mxu0 0.0
      %1350 = vmatpush1.msra.mxu0 0.0
      %1351 = vmatprep.subr.mxu0 %v1316
      %1352 = vmatpush1.msra.mxu0 %v1313
      %1353 = vmatprep.subr.mxu0 0.0
      %1354 = vmatpush2.msra.mxu0 0.0
      %1355 = vmatprep.subr.mxu0 0.0
      %1356 = vmatpush2.msra.mxu0 0.0
      %1357 = vmatprep.subr.mxu0 0.0
      %1358 = vmatpush2.msra.mxu0 0.0
      %1359 = vmatprep.subr.mxu0 0.0
      %1360 = vmatpush2.msra.mxu0 0.0
      %1361 = vmatprep.subr.mxu0 0.0
      %1362 = vmatpush2.msra.mxu0 0.0
      %1363 = vmatprep.subr.mxu0 0.0
      %1364 = vmatpush2.msra.mxu0 0.0
      %1365 = vmatprep.subr.mxu0 0.0
      %1366 = vmatpush2.msra.mxu0 0.0
      %1367 = vmatprep.subr.mxu0 0.0
      %1368 = vmatpush2.msra.mxu0 0.0
      %1369 = vmatprep.subr.mxu0 0.0
      %1370 = vmatpush2.msra.mxu0 0.0
      %1371 = vmatprep.subr.mxu0 0.0
      %1372 = vmatpush2.msra.mxu0 0.0
      %1373 = vmatprep.subr.mxu0 0.0
      %1374 = vmatpush2.msra.mxu0 0.0
      %1375 = vmatprep.subr.mxu0 0.0
      %1376 = vmatpush2.msra.mxu0 0.0
      %1377 = vmatprep.subr.mxu0 0.0
      %1378 = vmatpush2.msra.mxu0 0.0
      %1379 = vmatprep.subr.mxu0 0.0
      %1380 = vmatpush2.msra.mxu0 0.0
      %1381 = vmatprep.subr.mxu0 0.0
      %1382 = vmatpush2.msra.mxu0 0.0
      %1383 = vmatprep.subr.mxu0 0.0
      %1384 = vmatpush2.msra.mxu0 0.0
      %1385 = vmatprep.mubr.f32.mxu0 0.0
      %1386 = vmatmul.mubr.f32.gmra.mxu0 %v1310
      %v1387 = vpop.f32.mrf.mxu0
      %v1388 = vadd.f32 0.0, %v1387
      %v1389 = vpop.f32.mrf.mxu0
      %v1390 = vadd.f32 0.0, %v1389
      %1391 = vdwg.mxu0
      %1392 = vmatprep.subr.mxu0 0.0
      %1393 = vmatpush1.msra.mxu0 0.0
      %1394 = vmatprep.subr.mxu0 0.0
      %1395 = vmatpush1.msra.mxu0 0.0
      %1396 = vmatprep.subr.mxu0 0.0
      %1397 = vmatpush1.msra.mxu0 0.0
      %1398 = vmatprep.subr.mxu0 0.0
      %1399 = vmatpush1.msra.mxu0 0.0
      %1400 = vmatprep.subr.mxu0 0.0
      %1401 = vmatpush1.msra.mxu0 0.0
      %1402 = vmatprep.subr.mxu0 0.0
      %1403 = vmatpush1.msra.mxu0 0.0
      %1404 = vmatprep.subr.mxu0 0.0
      %1405 = vmatpush1.msra.mxu0 0.0
      %1406 = vmatprep.subr.mxu0 0.0
      %1407 = vmatpush1.msra.mxu0 0.0
      %1408 = vmatprep.subr.mxu0 0.0
      %1409 = vmatpush1.msra.mxu0 0.0
      %1410 = vmatprep.subr.mxu0 0.0
      %1411 = vmatpush1.msra.mxu0 0.0
      %1412 = vmatprep.subr.mxu0 0.0
      %1413 = vmatpush1.msra.mxu0 0.0
      %1414 = vmatprep.subr.mxu0 0.0
      %1415 = vmatpush1.msra.mxu0 0.0
      %1416 = vmatprep.subr.mxu0 0.0
      %1417 = vmatpush1.msra.mxu0 0.0
      %1418 = vmatprep.subr.mxu0 0.0
      %1419 = vmatpush1.msra.mxu0 0.0
      %1420 = vmatprep.subr.mxu0 0.0
      %1421 = vmatpush1.msra.mxu0 0.0
      %1422 = vmatprep.subr.mxu0 0.0
      %1423 = vmatpush1.msra.mxu0 %v1319
      %1424 = vmatprep.subr.mxu0 0.0
      %1425 = vmatpush2.msra.mxu0 0.0
      %1426 = vmatprep.subr.mxu0 0.0
      %1427 = vmatpush2.msra.mxu0 0.0
      %1428 = vmatprep.subr.mxu0 0.0
      %1429 = vmatpush2.msra.mxu0 0.0
      %1430 = vmatprep.subr.mxu0 0.0
      %1431 = vmatpush2.msra.mxu0 0.0
      %1432 = vmatprep.subr.mxu0 0.0
      %1433 = vmatpush2.msra.mxu0 0.0
      %1434 = vmatprep.subr.mxu0 0.0
      %1435 = vmatpush2.msra.mxu0 0.0
      %1436 = vmatprep.subr.mxu0 0.0
      %1437 = vmatpush2.msra.mxu0 0.0
      %1438 = vmatprep.subr.mxu0 0.0
      %1439 = vmatpush2.msra.mxu0 0.0
      %1440 = vmatprep.subr.mxu0 0.0
      %1441 = vmatpush2.msra.mxu0 0.0
      %1442 = vmatprep.subr.mxu0 0.0
      %1443 = vmatpush2.msra.mxu0 0.0
      %1444 = vmatprep.subr.mxu0 0.0
      %1445 = vmatpush2.msra.mxu0 0.0
      %1446 = vmatprep.subr.mxu0 0.0
      %1447 = vmatpush2.msra.mxu0 0.0
      %1448 = vmatprep.subr.mxu0 0.0
      %1449 = vmatpush2.msra.mxu0 0.0
      %1450 = vmatprep.subr.mxu0 0.0
      %1451 = vmatpush2.msra.mxu0 0.0
      %1452 = vmatprep.subr.mxu0 0.0
      %1453 = vmatpush2.msra.mxu0 0.0
      %1454 = vmatprep.subr.mxu0 0.0
      %1455 = vmatpush2.msra.mxu0 0.0
      %1456 = vmatprep.mubr.f32.mxu0 0.0
      %1457 = vmatmul.mubr.f32.gmra.mxu0 %v1310
      %v1458 = vpop.f32.mrf.mxu0
      %v1459 = vadd.f32 0.0, %v1458
      %v1460 = vpop.f32.mrf.mxu0
      %1461 = vdwg.mxu0
      %v1462 = vadd.f32 %v1282, %v1388
      %v1463 = vadd.f32 %v1283, %v1390
      %v1464 = vadd.f32 %v1284, %v1459
      %1465 = vrot.lane.b32.xlu0 %v229, 104
      %v1466 = vpop.permute.xlu0 %1465
      %1467 = vrot.lane.b32.xlu0 %v233, 104
      %v1468 = vpop.permute.xlu0 %1467
      %1469 = vrot.lane.b32.xlu0 %v230, 104
      %v1470 = vpop.permute.xlu0 %1469
      %vm1471 = vcmp.lt.s32.totalorder %v226, 104
      %v1472 = vsel %vm1471, %v1468, %v1470
      %v1473 = vsel %vm1471, %v1466, %v1468
      %v1474 = vsel %vm1471, %v1470, %v1466
      %vm1475 = vcmp.lt.s32.totalorder %v226, 360
      %vm1476 = vcmp.lt.s32.totalorder %v227, 360
      %vm1477 = vcmp.lt.s32.totalorder %v228, 360
      %v1478 = vsel %vm1475, 1, 0
      %v1479 = vsel %vm1476, 1, 0
      %v1480 = vsel %vm1477, 1, 0
      %vm1481 = vcmp.eq.s32.totalorder %v1478, 1
      %vm1482 = vcmp.eq.s32.totalorder %v1479, 1
      %vm1483 = vcmp.eq.s32.totalorder %v1480, 1
      %v1484 = vsel %vm1481, %v1473, 0.0
      %v1485 = vsel %vm1482, %v1472, 0.0
      %v1486 = vsel %vm1483, %v1474, 0.0
      %s1487 = scalar_lea.vmem %s1, 56
      %v1488 = vld [vmem:[%s1487] sm:$0xff]
      %v1490 = vsel %vm282, %v1488, 0
      %v1493 = vsel %vm286, %v1484, 0
      %v1496 = vsel %vm286, %v1485, 0
      %v1499 = vsel %vm286, %v1486, 0
      %1501 = vmatprep.subr.mxu0 0.0
      %1502 = vmatpush1.msra.mxu0 0.0
      %1503 = vmatprep.subr.mxu0 0.0
      %1504 = vmatpush1.msra.mxu0 0.0
      %1505 = vmatprep.subr.mxu0 0.0
      %1506 = vmatpush1.msra.mxu0 0.0
      %1507 = vmatprep.subr.mxu0 0.0
      %1508 = vmatpush1.msra.mxu0 0.0
      %1509 = vmatprep.subr.mxu0 0.0
      %1510 = vmatpush1.msra.mxu0 0.0
      %1511 = vmatprep.subr.mxu0 0.0
      %1512 = vmatpush1.msra.mxu0 0.0
      %1513 = vmatprep.subr.mxu0 0.0
      %1514 = vmatpush1.msra.mxu0 0.0
      %1515 = vmatprep.subr.mxu0 0.0
      %1516 = vmatpush1.msra.mxu0 0.0
      %1517 = vmatprep.subr.mxu0 0.0
      %1518 = vmatpush1.msra.mxu0 0.0
      %1519 = vmatprep.subr.mxu0 0.0
      %1520 = vmatpush1.msra.mxu0 0.0
      %1521 = vmatprep.subr.mxu0 0.0
      %1522 = vmatpush1.msra.mxu0 0.0
      %1523 = vmatprep.subr.mxu0 0.0
      %1524 = vmatpush1.msra.mxu0 0.0
      %1525 = vmatprep.subr.mxu0 0.0
      %1526 = vmatpush1.msra.mxu0 0.0
      %1527 = vmatprep.subr.mxu0 0.0
      %1528 = vmatpush1.msra.mxu0 0.0
      %1529 = vmatprep.subr.mxu0 0.0
      %1530 = vmatpush1.msra.mxu0 0.0
      %1531 = vmatprep.subr.mxu0 %v1496
      %1532 = vmatpush1.msra.mxu0 %v1493
      %1533 = vmatprep.subr.mxu0 0.0
      %1534 = vmatpush2.msra.mxu0 0.0
      %1535 = vmatprep.subr.mxu0 0.0
      %1536 = vmatpush2.msra.mxu0 0.0
      %1537 = vmatprep.subr.mxu0 0.0
      %1538 = vmatpush2.msra.mxu0 0.0
      %1539 = vmatprep.subr.mxu0 0.0
      %1540 = vmatpush2.msra.mxu0 0.0
      %1541 = vmatprep.subr.mxu0 0.0
      %1542 = vmatpush2.msra.mxu0 0.0
      %1543 = vmatprep.subr.mxu0 0.0
      %1544 = vmatpush2.msra.mxu0 0.0
      %1545 = vmatprep.subr.mxu0 0.0
      %1546 = vmatpush2.msra.mxu0 0.0
      %1547 = vmatprep.subr.mxu0 0.0
      %1548 = vmatpush2.msra.mxu0 0.0
      %1549 = vmatprep.subr.mxu0 0.0
      %1550 = vmatpush2.msra.mxu0 0.0
      %1551 = vmatprep.subr.mxu0 0.0
      %1552 = vmatpush2.msra.mxu0 0.0
      %1553 = vmatprep.subr.mxu0 0.0
      %1554 = vmatpush2.msra.mxu0 0.0
      %1555 = vmatprep.subr.mxu0 0.0
      %1556 = vmatpush2.msra.mxu0 0.0
      %1557 = vmatprep.subr.mxu0 0.0
      %1558 = vmatpush2.msra.mxu0 0.0
      %1559 = vmatprep.subr.mxu0 0.0
      %1560 = vmatpush2.msra.mxu0 0.0
      %1561 = vmatprep.subr.mxu0 0.0
      %1562 = vmatpush2.msra.mxu0 0.0
      %1563 = vmatprep.subr.mxu0 0.0
      %1564 = vmatpush2.msra.mxu0 0.0
      %1565 = vmatprep.mubr.f32.mxu0 0.0
      %1566 = vmatmul.mubr.f32.gmra.mxu0 %v1490
      %v1567 = vpop.f32.mrf.mxu0
      %v1568 = vadd.f32 0.0, %v1567
      %v1569 = vpop.f32.mrf.mxu0
      %v1570 = vadd.f32 0.0, %v1569
      %1571 = vdwg.mxu0
      %1572 = vmatprep.subr.mxu0 0.0
      %1573 = vmatpush1.msra.mxu0 0.0
      %1574 = vmatprep.subr.mxu0 0.0
      %1575 = vmatpush1.msra.mxu0 0.0
      %1576 = vmatprep.subr.mxu0 0.0
      %1577 = vmatpush1.msra.mxu0 0.0
      %1578 = vmatprep.subr.mxu0 0.0
      %1579 = vmatpush1.msra.mxu0 0.0
      %1580 = vmatprep.subr.mxu0 0.0
      %1581 = vmatpush1.msra.mxu0 0.0
      %1582 = vmatprep.subr.mxu0 0.0
      %1583 = vmatpush1.msra.mxu0 0.0
      %1584 = vmatprep.subr.mxu0 0.0
      %1585 = vmatpush1.msra.mxu0 0.0
      %1586 = vmatprep.subr.mxu0 0.0
      %1587 = vmatpush1.msra.mxu0 0.0
      %1588 = vmatprep.subr.mxu0 0.0
      %1589 = vmatpush1.msra.mxu0 0.0
      %1590 = vmatprep.subr.mxu0 0.0
      %1591 = vmatpush1.msra.mxu0 0.0
      %1592 = vmatprep.subr.mxu0 0.0
      %1593 = vmatpush1.msra.mxu0 0.0
      %1594 = vmatprep.subr.mxu0 0.0
      %1595 = vmatpush1.msra.mxu0 0.0
      %1596 = vmatprep.subr.mxu0 0.0
      %1597 = vmatpush1.msra.mxu0 0.0
      %1598 = vmatprep.subr.mxu0 0.0
      %1599 = vmatpush1.msra.mxu0 0.0
      %1600 = vmatprep.subr.mxu0 0.0
      %1601 = vmatpush1.msra.mxu0 0.0
      %1602 = vmatprep.subr.mxu0 0.0
      %1603 = vmatpush1.msra.mxu0 %v1499
      %1604 = vmatprep.subr.mxu0 0.0
      %1605 = vmatpush2.msra.mxu0 0.0
      %1606 = vmatprep.subr.mxu0 0.0
      %1607 = vmatpush2.msra.mxu0 0.0
      %1608 = vmatprep.subr.mxu0 0.0
      %1609 = vmatpush2.msra.mxu0 0.0
      %1610 = vmatprep.subr.mxu0 0.0
      %1611 = vmatpush2.msra.mxu0 0.0
      %1612 = vmatprep.subr.mxu0 0.0
      %1613 = vmatpush2.msra.mxu0 0.0
      %1614 = vmatprep.subr.mxu0 0.0
      %1615 = vmatpush2.msra.mxu0 0.0
      %1616 = vmatprep.subr.mxu0 0.0
      %1617 = vmatpush2.msra.mxu0 0.0
      %1618 = vmatprep.subr.mxu0 0.0
      %1619 = vmatpush2.msra.mxu0 0.0
      %1620 = vmatprep.subr.mxu0 0.0
      %1621 = vmatpush2.msra.mxu0 0.0
      %1622 = vmatprep.subr.mxu0 0.0
      %1623 = vmatpush2.msra.mxu0 0.0
      %1624 = vmatprep.subr.mxu0 0.0
      %1625 = vmatpush2.msra.mxu0 0.0
      %1626 = vmatprep.subr.mxu0 0.0
      %1627 = vmatpush2.msra.mxu0 0.0
      %1628 = vmatprep.subr.mxu0 0.0
      %1629 = vmatpush2.msra.mxu0 0.0
      %1630 = vmatprep.subr.mxu0 0.0
      %1631 = vmatpush2.msra.mxu0 0.0
      %1632 = vmatprep.subr.mxu0 0.0
      %1633 = vmatpush2.msra.mxu0 0.0
      %1634 = vmatprep.subr.mxu0 0.0
      %1635 = vmatpush2.msra.mxu0 0.0
      %1636 = vmatprep.mubr.f32.mxu0 0.0
      %1637 = vmatmul.mubr.f32.gmra.mxu0 %v1490
      %v1638 = vpop.f32.mrf.mxu0
      %v1639 = vadd.f32 0.0, %v1638
      %v1640 = vpop.f32.mrf.mxu0
      %1641 = vdwg.mxu0
      %v1642 = vadd.f32 %v1462, %v1568
      %v1643 = vadd.f32 %v1463, %v1570
      %v1644 = vadd.f32 %v1464, %v1639
      %1645 = vrot.lane.b32.xlu0 %v229, 103
      %v1646 = vpop.permute.xlu0 %1645
      %1647 = vrot.lane.b32.xlu0 %v233, 103
      %v1648 = vpop.permute.xlu0 %1647
      %1649 = vrot.lane.b32.xlu0 %v230, 103
      %v1650 = vpop.permute.xlu0 %1649
      %vm1651 = vcmp.lt.s32.totalorder %v226, 103
      %v1652 = vsel %vm1651, %v1648, %v1650
      %v1653 = vsel %vm1651, %v1646, %v1648
      %v1654 = vsel %vm1651, %v1650, %v1646
      %vm1655 = vcmp.lt.s32.totalorder %v226, 359
      %vm1656 = vcmp.lt.s32.totalorder %v227, 359
      %vm1657 = vcmp.lt.s32.totalorder %v228, 359
      %v1658 = vsel %vm1655, 1, 0
      %v1659 = vsel %vm1656, 1, 0
      %v1660 = vsel %vm1657, 1, 0
      %vm1661 = vcmp.eq.s32.totalorder %v1658, 1
      %vm1662 = vcmp.eq.s32.totalorder %v1659, 1
      %vm1663 = vcmp.eq.s32.totalorder %v1660, 1
      %v1664 = vsel %vm1661, %v1653, 0.0
      %v1665 = vsel %vm1662, %v1652, 0.0
      %v1666 = vsel %vm1663, %v1654, 0.0
      %s1667 = scalar_lea.vmem %s1, 64
      %v1668 = vld [vmem:[%s1667] sm:$0xff]
      %v1670 = vsel %vm282, %v1668, 0
      %v1673 = vsel %vm286, %v1664, 0
      %v1676 = vsel %vm286, %v1665, 0
      %v1679 = vsel %vm286, %v1666, 0
      %1681 = vmatprep.subr.mxu0 0.0
      %1682 = vmatpush1.msra.mxu0 0.0
      %1683 = vmatprep.subr.mxu0 0.0
      %1684 = vmatpush1.msra.mxu0 0.0
      %1685 = vmatprep.subr.mxu0 0.0
      %1686 = vmatpush1.msra.mxu0 0.0
      %1687 = vmatprep.subr.mxu0 0.0
      %1688 = vmatpush1.msra.mxu0 0.0
      %1689 = vmatprep.subr.mxu0 0.0
      %1690 = vmatpush1.msra.mxu0 0.0
      %1691 = vmatprep.subr.mxu0 0.0
      %1692 = vmatpush1.msra.mxu0 0.0
      %1693 = vmatprep.subr.mxu0 0.0
      %1694 = vmatpush1.msra.mxu0 0.0
      %1695 = vmatprep.subr.mxu0 0.0
      %1696 = vmatpush1.msra.mxu0 0.0
      %1697 = vmatprep.subr.mxu0 0.0
      %1698 = vmatpush1.msra.mxu0 0.0
      %1699 = vmatprep.subr.mxu0 0.0
      %1700 = vmatpush1.msra.mxu0 0.0
      %1701 = vmatprep.subr.mxu0 0.0
      %1702 = vmatpush1.msra.mxu0 0.0
      %1703 = vmatprep.subr.mxu0 0.0
      %1704 = vmatpush1.msra.mxu0 0.0
      %1705 = vmatprep.subr.mxu0 0.0
      %1706 = vmatpush1.msra.mxu0 0.0
      %1707 = vmatprep.subr.mxu0 0.0
      %1708 = vmatpush1.msra.mxu0 0.0
      %1709 = vmatprep.subr.mxu0 0.0
      %1710 = vmatpush1.msra.mxu0 0.0
      %1711 = vmatprep.subr.mxu0 %v1676
      %1712 = vmatpush1.msra.mxu0 %v1673
      %1713 = vmatprep.subr.mxu0 0.0
      %1714 = vmatpush2.msra.mxu0 0.0
      %1715 = vmatprep.subr.mxu0 0.0
      %1716 = vmatpush2.msra.mxu0 0.0
      %1717 = vmatprep.subr.mxu0 0.0
      %1718 = vmatpush2.msra.mxu0 0.0
      %1719 = vmatprep.subr.mxu0 0.0
      %1720 = vmatpush2.msra.mxu0 0.0
      %1721 = vmatprep.subr.mxu0 0.0
      %1722 = vmatpush2.msra.mxu0 0.0
      %1723 = vmatprep.subr.mxu0 0.0
      %1724 = vmatpush2.msra.mxu0 0.0
      %1725 = vmatprep.subr.mxu0 0.0
      %1726 = vmatpush2.msra.mxu0 0.0
      %1727 = vmatprep.subr.mxu0 0.0
      %1728 = vmatpush2.msra.mxu0 0.0
      %1729 = vmatprep.subr.mxu0 0.0
      %1730 = vmatpush2.msra.mxu0 0.0
      %1731 = vmatprep.subr.mxu0 0.0
      %1732 = vmatpush2.msra.mxu0 0.0
      %1733 = vmatprep.subr.mxu0 0.0
      %1734 = vmatpush2.msra.mxu0 0.0
      %1735 = vmatprep.subr.mxu0 0.0
      %1736 = vmatpush2.msra.mxu0 0.0
      %1737 = vmatprep.subr.mxu0 0.0
      %1738 = vmatpush2.msra.mxu0 0.0
      %1739 = vmatprep.subr.mxu0 0.0
      %1740 = vmatpush2.msra.mxu0 0.0
      %1741 = vmatprep.subr.mxu0 0.0
      %1742 = vmatpush2.msra.mxu0 0.0
      %1743 = vmatprep.subr.mxu0 0.0
      %1744 = vmatpush2.msra.mxu0 0.0
      %1745 = vmatprep.mubr.f32.mxu0 0.0
      %1746 = vmatmul.mubr.f32.gmra.mxu0 %v1670
      %v1747 = vpop.f32.mrf.mxu0
      %v1748 = vadd.f32 0.0, %v1747
      %v1749 = vpop.f32.mrf.mxu0
      %v1750 = vadd.f32 0.0, %v1749
      %1751 = vdwg.mxu0
      %1752 = vmatprep.subr.mxu0 0.0
      %1753 = vmatpush1.msra.mxu0 0.0
      %1754 = vmatprep.subr.mxu0 0.0
      %1755 = vmatpush1.msra.mxu0 0.0
      %1756 = vmatprep.subr.mxu0 0.0
      %1757 = vmatpush1.msra.mxu0 0.0
      %1758 = vmatprep.subr.mxu0 0.0
      %1759 = vmatpush1.msra.mxu0 0.0
      %1760 = vmatprep.subr.mxu0 0.0
      %1761 = vmatpush1.msra.mxu0 0.0
      %1762 = vmatprep.subr.mxu0 0.0
      %1763 = vmatpush1.msra.mxu0 0.0
      %1764 = vmatprep.subr.mxu0 0.0
      %1765 = vmatpush1.msra.mxu0 0.0
      %1766 = vmatprep.subr.mxu0 0.0
      %1767 = vmatpush1.msra.mxu0 0.0
      %1768 = vmatprep.subr.mxu0 0.0
      %1769 = vmatpush1.msra.mxu0 0.0
      %1770 = vmatprep.subr.mxu0 0.0
      %1771 = vmatpush1.msra.mxu0 0.0
      %1772 = vmatprep.subr.mxu0 0.0
      %1773 = vmatpush1.msra.mxu0 0.0
      %1774 = vmatprep.subr.mxu0 0.0
      %1775 = vmatpush1.msra.mxu0 0.0
      %1776 = vmatprep.subr.mxu0 0.0
      %1777 = vmatpush1.msra.mxu0 0.0
      %1778 = vmatprep.subr.mxu0 0.0
      %1779 = vmatpush1.msra.mxu0 0.0
      %1780 = vmatprep.subr.mxu0 0.0
      %1781 = vmatpush1.msra.mxu0 0.0
      %1782 = vmatprep.subr.mxu0 0.0
      %1783 = vmatpush1.msra.mxu0 %v1679
      %1784 = vmatprep.subr.mxu0 0.0
      %1785 = vmatpush2.msra.mxu0 0.0
      %1786 = vmatprep.subr.mxu0 0.0
      %1787 = vmatpush2.msra.mxu0 0.0
      %1788 = vmatprep.subr.mxu0 0.0
      %1789 = vmatpush2.msra.mxu0 0.0
      %1790 = vmatprep.subr.mxu0 0.0
      %1791 = vmatpush2.msra.mxu0 0.0
      %1792 = vmatprep.subr.mxu0 0.0
      %1793 = vmatpush2.msra.mxu0 0.0
      %1794 = vmatprep.subr.mxu0 0.0
      %1795 = vmatpush2.msra.mxu0 0.0
      %1796 = vmatprep.subr.mxu0 0.0
      %1797 = vmatpush2.msra.mxu0 0.0
      %1798 = vmatprep.subr.mxu0 0.0
      %1799 = vmatpush2.msra.mxu0 0.0
      %1800 = vmatprep.subr.mxu0 0.0
      %1801 = vmatpush2.msra.mxu0 0.0
      %1802 = vmatprep.subr.mxu0 0.0
      %1803 = vmatpush2.msra.mxu0 0.0
      %1804 = vmatprep.subr.mxu0 0.0
      %1805 = vmatpush2.msra.mxu0 0.0
      %1806 = vmatprep.subr.mxu0 0.0
      %1807 = vmatpush2.msra.mxu0 0.0
      %1808 = vmatprep.subr.mxu0 0.0
      %1809 = vmatpush2.msra.mxu0 0.0
      %1810 = vmatprep.subr.mxu0 0.0
      %1811 = vmatpush2.msra.mxu0 0.0
      %1812 = vmatprep.subr.mxu0 0.0
      %1813 = vmatpush2.msra.mxu0 0.0
      %1814 = vmatprep.subr.mxu0 0.0
      %1815 = vmatpush2.msra.mxu0 0.0
      %1816 = vmatprep.mubr.f32.mxu0 0.0
      %1817 = vmatmul.mubr.f32.gmra.mxu0 %v1670
      %v1818 = vpop.f32.mrf.mxu0
      %v1819 = vadd.f32 0.0, %v1818
      %v1820 = vpop.f32.mrf.mxu0
      %1821 = vdwg.mxu0
      %v1822 = vadd.f32 %v1642, %v1748
      %v1823 = vadd.f32 %v1643, %v1750
      %v1824 = vadd.f32 %v1644, %v1819
      %v1825 = vld [vmem:[%s2] sm:$0xff]
      %1827 = vset.pattern.permute.xlu0 0
      %1828 = vperm.xlu0 %1827, %v1825
      %v1829 = vpop.permute.xlu0 %1828
      %v1831 = vadd.f32 %v1822, %v1829
      %v1832 = vadd.f32 %v1823, %v1829
      %v1833 = vadd.f32 %v1824, %v1829
      %v1834 = vmax.f32 %v1831, 0.0
      %v1835 = vmax.f32 %v1832, 0.0
      %v1836 = vmax.f32 %v1833, 0.0
      %v1837 = vcvt.s32.f32 %v226
      %v1838 = vcvt.s32.f32 %v227
      %v1839 = vcvt.s32.f32 %v228
      %v1840 = vadd.f32 %v1837, 0.5
      %v1841 = vadd.f32 %v1838, 0.5
      %v1842 = vadd.f32 %v1839, 0.5
      %v1843 = vmul.f32 %v1840, 0.041666668
      %v1844 = vmul.f32 %v1841, 0.041666668
      %v1845 = vmul.f32 %v1842, 0.041666668
      %v1846 = vfloor.f32 %v1843
      %v1847 = vfloor.f32 %v1844
      %v1848 = vfloor.f32 %v1845
      %v1849 = vmul.f32 %v1846, 24.0
      %v1850 = vmul.f32 %v1847, 24.0
      %v1851 = vmul.f32 %v1848, 24.0
      %v1852 = vsub.f32 %v1837, %v1849
      %v1853 = vsub.f32 %v1838, %v1850
      %v1854 = vsub.f32 %v1839, %v1851
      %vm1855 = vcmp.lt.f32.partialorder %v1852, 15.5
      %vm1856 = vcmp.lt.f32.partialorder %v1853, 15.5
      %vm1857 = vcmp.lt.f32.partialorder %v1854, 15.5
      %v1858 = vsel %vm1855, 1, 0
      %v1859 = vsel %vm1856, 1, 0
      %v1860 = vsel %vm1857, 1, 0
      %vm1861 = vcmp.eq.s32.totalorder %v1858, 1
      %vm1862 = vcmp.eq.s32.totalorder %v1859, 1
      %vm1863 = vcmp.eq.s32.totalorder %v1860, 1
      %v1864 = vsel %vm1861, %v1834, 0.0
      %v1865 = vsel %vm1862, %v1835, 0.0
      %v1866 = vsel %vm1863, %v1836, 0.0
      %1867 = vrot.lane.b32.xlu0 %v1864, 25
      %v1868 = vpop.permute.xlu0 %1867
      %1869 = vrot.lane.b32.xlu0 %v1865, 25
      %v1870 = vpop.permute.xlu0 %1869
      %1871 = vrot.lane.b32.xlu0 %v1866, 25
      %v1872 = vpop.permute.xlu0 %1871
      %v1873 = vsel %vm241, %v1870, %v1872
      %v1874 = vsel %vm241, %v1868, %v1870
      %v1875 = vsel %vm241, %v1872, %v1868
      %v1876 = vsel %vm251, %v1875, 0.0
      %v1877 = vsel %vm252, %v1874, 0.0
      %v1878 = vsel %vm253, %v1873, 0.0
      %v1879 = vld [vmem:[%s3] sm:$0xff]
      %1880 = vrot.lane.b32.xlu0 %v1864, 24
      %v1881 = vpop.permute.xlu0 %1880
      %1882 = vrot.lane.b32.xlu0 %v1865, 24
      %v1883 = vpop.permute.xlu0 %1882
      %1884 = vrot.lane.b32.xlu0 %v1866, 24
      %v1885 = vpop.permute.xlu0 %1884
      %v1886 = vsel %vm264, %v1883, %v1885
      %v1887 = vsel %vm264, %v1881, %v1883
      %v1888 = vsel %vm264, %v1885, %v1881
      %v1889 = vsel %vm274, %v1888, 0.0
      %v1890 = vsel %vm275, %v1887, 0.0
      %v1891 = vsel %vm276, %v1886, 0.0
      %s1892 = scalar_lea.vmem %s3, 8
      %v1893 = vld [vmem:[%s1892] sm:$0xff]
      %vm1894 = vcmask 64512
      %v1896 = vsel %vm1894, %v1893, 0
      %1898 = vmatprep.subr.mxu0 0.0
      %1899 = vmatpush1.msra.mxu0 0.0
      %1900 = vmatprep.subr.mxu0 0.0
      %1901 = vmatpush1.msra.mxu0 0.0
      %1902 = vmatprep.subr.mxu0 0.0
      %1903 = vmatpush1.msra.mxu0 0.0
      %1904 = vmatprep.subr.mxu0 0.0
      %1905 = vmatpush1.msra.mxu0 0.0
      %1906 = vmatprep.subr.mxu0 0.0
      %1907 = vmatpush1.msra.mxu0 0.0
      %1908 = vmatprep.subr.mxu0 0.0
      %1909 = vmatpush1.msra.mxu0 0.0
      %1910 = vmatprep.subr.mxu0 0.0
      %1911 = vmatpush1.msra.mxu0 0.0
      %1912 = vmatprep.subr.mxu0 0.0
      %1913 = vmatpush1.msra.mxu0 0.0
      %1914 = vmatprep.subr.mxu0 0.0
      %1915 = vmatpush1.msra.mxu0 0.0
      %1916 = vmatprep.subr.mxu0 0.0
      %1917 = vmatpush1.msra.mxu0 0.0
      %1918 = vmatprep.subr.mxu0 0.0
      %1919 = vmatpush1.msra.mxu0 0.0
      %1920 = vmatprep.subr.mxu0 0.0
      %1921 = vmatpush1.msra.mxu0 0.0
      %1922 = vmatprep.subr.mxu0 0.0
      %1923 = vmatpush1.msra.mxu0 0.0
      %1924 = vmatprep.subr.mxu0 0.0
      %1925 = vmatpush1.msra.mxu0 0.0
      %1926 = vmatprep.subr.mxu0 0.0
      %1927 = vmatpush1.msra.mxu0 0.0
      %1928 = vmatprep.subr.mxu0 %v1890
      %1929 = vmatpush1.msra.mxu0 %v1889
      %1930 = vmatprep.subr.mxu0 0.0
      %1931 = vmatpush2.msra.mxu0 0.0
      %1932 = vmatprep.subr.mxu0 0.0
      %1933 = vmatpush2.msra.mxu0 0.0
      %1934 = vmatprep.subr.mxu0 0.0
      %1935 = vmatpush2.msra.mxu0 0.0
      %1936 = vmatprep.subr.mxu0 0.0
      %1937 = vmatpush2.msra.mxu0 0.0
      %1938 = vmatprep.subr.mxu0 0.0
      %1939 = vmatpush2.msra.mxu0 0.0
      %1940 = vmatprep.subr.mxu0 0.0
      %1941 = vmatpush2.msra.mxu0 0.0
      %1942 = vmatprep.subr.mxu0 0.0
      %1943 = vmatpush2.msra.mxu0 0.0
      %1944 = vmatprep.subr.mxu0 0.0
      %1945 = vmatpush2.msra.mxu0 0.0
      %1946 = vmatprep.subr.mxu0 0.0
      %1947 = vmatpush2.msra.mxu0 0.0
      %1948 = vmatprep.subr.mxu0 0.0
      %1949 = vmatpush2.msra.mxu0 0.0
      %1950 = vmatprep.subr.mxu0 0.0
      %1951 = vmatpush2.msra.mxu0 0.0
      %1952 = vmatprep.subr.mxu0 0.0
      %1953 = vmatpush2.msra.mxu0 0.0
      %1954 = vmatprep.subr.mxu0 0.0
      %1955 = vmatpush2.msra.mxu0 0.0
      %1956 = vmatprep.subr.mxu0 0.0
      %1957 = vmatpush2.msra.mxu0 0.0
      %1958 = vmatprep.subr.mxu0 0.0
      %1959 = vmatpush2.msra.mxu0 0.0
      %1960 = vmatprep.subr.mxu0 0.0
      %1961 = vmatpush2.msra.mxu0 0.0
      %1962 = vmatprep.mubr.f32.mxu0 0.0
      %1963 = vmatmul.mubr.f32.gmra.mxu0 %v1896
      %v1964 = vpop.f32.mrf.mxu0
      %v1965 = vadd.f32 0.0, %v1964
      %v1966 = vpop.f32.mrf.mxu0
      %v1967 = vadd.f32 0.0, %v1966
      %1968 = vdwg.mxu0
      %1969 = vmatprep.subr.mxu0 0.0
      %1970 = vmatpush1.msra.mxu0 0.0
      %1971 = vmatprep.subr.mxu0 0.0
      %1972 = vmatpush1.msra.mxu0 0.0
      %1973 = vmatprep.subr.mxu0 0.0
      %1974 = vmatpush1.msra.mxu0 0.0
      %1975 = vmatprep.subr.mxu0 0.0
      %1976 = vmatpush1.msra.mxu0 0.0
      %1977 = vmatprep.subr.mxu0 0.0
      %1978 = vmatpush1.msra.mxu0 0.0
      %1979 = vmatprep.subr.mxu0 0.0
      %1980 = vmatpush1.msra.mxu0 0.0
      %1981 = vmatprep.subr.mxu0 0.0
      %1982 = vmatpush1.msra.mxu0 0.0
      %1983 = vmatprep.subr.mxu0 0.0
      %1984 = vmatpush1.msra.mxu0 0.0
      %1985 = vmatprep.subr.mxu0 0.0
      %1986 = vmatpush1.msra.mxu0 0.0
      %1987 = vmatprep.subr.mxu0 0.0
      %1988 = vmatpush1.msra.mxu0 0.0
      %1989 = vmatprep.subr.mxu0 0.0
      %1990 = vmatpush1.msra.mxu0 0.0
      %1991 = vmatprep.subr.mxu0 0.0
      %1992 = vmatpush1.msra.mxu0 0.0
      %1993 = vmatprep.subr.mxu0 0.0
      %1994 = vmatpush1.msra.mxu0 0.0
      %1995 = vmatprep.subr.mxu0 0.0
      %1996 = vmatpush1.msra.mxu0 0.0
      %1997 = vmatprep.subr.mxu0 0.0
      %1998 = vmatpush1.msra.mxu0 0.0
      %1999 = vmatprep.subr.mxu0 0.0
      %2000 = vmatpush1.msra.mxu0 %v1891
      %2001 = vmatprep.subr.mxu0 0.0
      %2002 = vmatpush2.msra.mxu0 0.0
      %2003 = vmatprep.subr.mxu0 0.0
      %2004 = vmatpush2.msra.mxu0 0.0
      %2005 = vmatprep.subr.mxu0 0.0
      %2006 = vmatpush2.msra.mxu0 0.0
      %2007 = vmatprep.subr.mxu0 0.0
      %2008 = vmatpush2.msra.mxu0 0.0
      %2009 = vmatprep.subr.mxu0 0.0
      %2010 = vmatpush2.msra.mxu0 0.0
      %2011 = vmatprep.subr.mxu0 0.0
      %2012 = vmatpush2.msra.mxu0 0.0
      %2013 = vmatprep.subr.mxu0 0.0
      %2014 = vmatpush2.msra.mxu0 0.0
      %2015 = vmatprep.subr.mxu0 0.0
      %2016 = vmatpush2.msra.mxu0 0.0
      %2017 = vmatprep.subr.mxu0 0.0
      %2018 = vmatpush2.msra.mxu0 0.0
      %2019 = vmatprep.subr.mxu0 0.0
      %2020 = vmatpush2.msra.mxu0 0.0
      %2021 = vmatprep.subr.mxu0 0.0
      %2022 = vmatpush2.msra.mxu0 0.0
      %2023 = vmatprep.subr.mxu0 0.0
      %2024 = vmatpush2.msra.mxu0 0.0
      %2025 = vmatprep.subr.mxu0 0.0
      %2026 = vmatpush2.msra.mxu0 0.0
      %2027 = vmatprep.subr.mxu0 0.0
      %2028 = vmatpush2.msra.mxu0 0.0
      %2029 = vmatprep.subr.mxu0 0.0
      %2030 = vmatpush2.msra.mxu0 0.0
      %2031 = vmatprep.subr.mxu0 0.0
      %2032 = vmatpush2.msra.mxu0 0.0
      %2033 = vmatprep.mubr.f32.mxu0 0.0
      %2034 = vmatmul.mubr.f32.gmra.mxu0 %v1896
      %v2035 = vpop.f32.mrf.mxu0
      %v2036 = vadd.f32 0.0, %v2035
      %v2037 = vpop.f32.mrf.mxu0
      %2038 = vdwg.mxu0
      %v2040 = vsel %vm1894, %v1879, 0
      %2042 = vmatprep.subr.mxu0 0.0
      %2043 = vmatpush1.msra.mxu0 0.0
      %2044 = vmatprep.subr.mxu0 0.0
      %2045 = vmatpush1.msra.mxu0 0.0
      %2046 = vmatprep.subr.mxu0 0.0
      %2047 = vmatpush1.msra.mxu0 0.0
      %2048 = vmatprep.subr.mxu0 0.0
      %2049 = vmatpush1.msra.mxu0 0.0
      %2050 = vmatprep.subr.mxu0 0.0
      %2051 = vmatpush1.msra.mxu0 0.0
      %2052 = vmatprep.subr.mxu0 0.0
      %2053 = vmatpush1.msra.mxu0 0.0
      %2054 = vmatprep.subr.mxu0 0.0
      %2055 = vmatpush1.msra.mxu0 0.0
      %2056 = vmatprep.subr.mxu0 0.0
      %2057 = vmatpush1.msra.mxu0 0.0
      %2058 = vmatprep.subr.mxu0 0.0
      %2059 = vmatpush1.msra.mxu0 0.0
      %2060 = vmatprep.subr.mxu0 0.0
      %2061 = vmatpush1.msra.mxu0 0.0
      %2062 = vmatprep.subr.mxu0 0.0
      %2063 = vmatpush1.msra.mxu0 0.0
      %2064 = vmatprep.subr.mxu0 0.0
      %2065 = vmatpush1.msra.mxu0 0.0
      %2066 = vmatprep.subr.mxu0 0.0
      %2067 = vmatpush1.msra.mxu0 0.0
      %2068 = vmatprep.subr.mxu0 0.0
      %2069 = vmatpush1.msra.mxu0 0.0
      %2070 = vmatprep.subr.mxu0 0.0
      %2071 = vmatpush1.msra.mxu0 0.0
      %2072 = vmatprep.subr.mxu0 %v1877
      %2073 = vmatpush1.msra.mxu0 %v1876
      %2074 = vmatprep.subr.mxu0 0.0
      %2075 = vmatpush2.msra.mxu0 0.0
      %2076 = vmatprep.subr.mxu0 0.0
      %2077 = vmatpush2.msra.mxu0 0.0
      %2078 = vmatprep.subr.mxu0 0.0
      %2079 = vmatpush2.msra.mxu0 0.0
      %2080 = vmatprep.subr.mxu0 0.0
      %2081 = vmatpush2.msra.mxu0 0.0
      %2082 = vmatprep.subr.mxu0 0.0
      %2083 = vmatpush2.msra.mxu0 0.0
      %2084 = vmatprep.subr.mxu0 0.0
      %2085 = vmatpush2.msra.mxu0 0.0
      %2086 = vmatprep.subr.mxu0 0.0
      %2087 = vmatpush2.msra.mxu0 0.0
      %2088 = vmatprep.subr.mxu0 0.0
      %2089 = vmatpush2.msra.mxu0 0.0
      %2090 = vmatprep.subr.mxu0 0.0
      %2091 = vmatpush2.msra.mxu0 0.0
      %2092 = vmatprep.subr.mxu0 0.0
      %2093 = vmatpush2.msra.mxu0 0.0
      %2094 = vmatprep.subr.mxu0 0.0
      %2095 = vmatpush2.msra.mxu0 0.0
      %2096 = vmatprep.subr.mxu0 0.0
      %2097 = vmatpush2.msra.mxu0 0.0
      %2098 = vmatprep.subr.mxu0 0.0
      %2099 = vmatpush2.msra.mxu0 0.0
      %2100 = vmatprep.subr.mxu0 0.0
      %2101 = vmatpush2.msra.mxu0 0.0
      %2102 = vmatprep.subr.mxu0 0.0
      %2103 = vmatpush2.msra.mxu0 0.0
      %2104 = vmatprep.subr.mxu0 0.0
      %2105 = vmatpush2.msra.mxu0 0.0
      %2106 = vmatprep.mubr.f32.mxu0 0.0
      %2107 = vmatmul.mubr.f32.gmra.mxu0 %v2040
      %v2108 = vpop.f32.mrf.mxu0
      %v2109 = vadd.f32 %v1965, %v2108
      %v2110 = vpop.f32.mrf.mxu0
      %v2111 = vadd.f32 %v1967, %v2110
      %2112 = vdwg.mxu0
      %2113 = vmatprep.subr.mxu0 0.0
      %2114 = vmatpush1.msra.mxu0 0.0
      %2115 = vmatprep.subr.mxu0 0.0
      %2116 = vmatpush1.msra.mxu0 0.0
      %2117 = vmatprep.subr.mxu0 0.0
      %2118 = vmatpush1.msra.mxu0 0.0
      %2119 = vmatprep.subr.mxu0 0.0
      %2120 = vmatpush1.msra.mxu0 0.0
      %2121 = vmatprep.subr.mxu0 0.0
      %2122 = vmatpush1.msra.mxu0 0.0
      %2123 = vmatprep.subr.mxu0 0.0
      %2124 = vmatpush1.msra.mxu0 0.0
      %2125 = vmatprep.subr.mxu0 0.0
      %2126 = vmatpush1.msra.mxu0 0.0
      %2127 = vmatprep.subr.mxu0 0.0
      %2128 = vmatpush1.msra.mxu0 0.0
      %2129 = vmatprep.subr.mxu0 0.0
      %2130 = vmatpush1.msra.mxu0 0.0
      %2131 = vmatprep.subr.mxu0 0.0
      %2132 = vmatpush1.msra.mxu0 0.0
      %2133 = vmatprep.subr.mxu0 0.0
      %2134 = vmatpush1.msra.mxu0 0.0
      %2135 = vmatprep.subr.mxu0 0.0
      %2136 = vmatpush1.msra.mxu0 0.0
      %2137 = vmatprep.subr.mxu0 0.0
      %2138 = vmatpush1.msra.mxu0 0.0
      %2139 = vmatprep.subr.mxu0 0.0
      %2140 = vmatpush1.msra.mxu0 0.0
      %2141 = vmatprep.subr.mxu0 0.0
      %2142 = vmatpush1.msra.mxu0 0.0
      %2143 = vmatprep.subr.mxu0 0.0
      %2144 = vmatpush1.msra.mxu0 %v1878
      %2145 = vmatprep.subr.mxu0 0.0
      %2146 = vmatpush2.msra.mxu0 0.0
      %2147 = vmatprep.subr.mxu0 0.0
      %2148 = vmatpush2.msra.mxu0 0.0
      %2149 = vmatprep.subr.mxu0 0.0
      %2150 = vmatpush2.msra.mxu0 0.0
      %2151 = vmatprep.subr.mxu0 0.0
      %2152 = vmatpush2.msra.mxu0 0.0
      %2153 = vmatprep.subr.mxu0 0.0
      %2154 = vmatpush2.msra.mxu0 0.0
      %2155 = vmatprep.subr.mxu0 0.0
      %2156 = vmatpush2.msra.mxu0 0.0
      %2157 = vmatprep.subr.mxu0 0.0
      %2158 = vmatpush2.msra.mxu0 0.0
      %2159 = vmatprep.subr.mxu0 0.0
      %2160 = vmatpush2.msra.mxu0 0.0
      %2161 = vmatprep.subr.mxu0 0.0
      %2162 = vmatpush2.msra.mxu0 0.0
      %2163 = vmatprep.subr.mxu0 0.0
      %2164 = vmatpush2.msra.mxu0 0.0
      %2165 = vmatprep.subr.mxu0 0.0
      %2166 = vmatpush2.msra.mxu0 0.0
      %2167 = vmatprep.subr.mxu0 0.0
      %2168 = vmatpush2.msra.mxu0 0.0
      %2169 = vmatprep.subr.mxu0 0.0
      %2170 = vmatpush2.msra.mxu0 0.0
      %2171 = vmatprep.subr.mxu0 0.0
      %2172 = vmatpush2.msra.mxu0 0.0
      %2173 = vmatprep.subr.mxu0 0.0
      %2174 = vmatpush2.msra.mxu0 0.0
      %2175 = vmatprep.subr.mxu0 0.0
      %2176 = vmatpush2.msra.mxu0 0.0
      %2177 = vmatprep.mubr.f32.mxu0 0.0
      %2178 = vmatmul.mubr.f32.gmra.mxu0 %v2040
      %v2179 = vpop.f32.mrf.mxu0
      %v2180 = vadd.f32 %v2036, %v2179
      %v2181 = vpop.f32.mrf.mxu0
      %2182 = vdwg.mxu0
      %2183 = vrot.lane.b32.xlu0 %v1864, 23
      %v2184 = vpop.permute.xlu0 %2183
      %2185 = vrot.lane.b32.xlu0 %v1865, 23
      %v2186 = vpop.permute.xlu0 %2185
      %2187 = vrot.lane.b32.xlu0 %v1866, 23
      %v2188 = vpop.permute.xlu0 %2187
      %v2189 = vsel %vm596, %v2186, %v2188
      %v2190 = vsel %vm596, %v2184, %v2186
      %v2191 = vsel %vm596, %v2188, %v2184
      %v2192 = vsel %vm606, %v2191, 0.0
      %v2193 = vsel %vm607, %v2190, 0.0
      %v2194 = vsel %vm608, %v2189, 0.0
      %s2195 = scalar_lea.vmem %s3, 16
      %v2196 = vld [vmem:[%s2195] sm:$0xff]
      %v2198 = vsel %vm1894, %v2196, 0
      %2200 = vmatprep.subr.mxu0 0.0
      %2201 = vmatpush1.msra.mxu0 0.0
      %2202 = vmatprep.subr.mxu0 0.0
      %2203 = vmatpush1.msra.mxu0 0.0
      %2204 = vmatprep.subr.mxu0 0.0
      %2205 = vmatpush1.msra.mxu0 0.0
      %2206 = vmatprep.subr.mxu0 0.0
      %2207 = vmatpush1.msra.mxu0 0.0
      %2208 = vmatprep.subr.mxu0 0.0
      %2209 = vmatpush1.msra.mxu0 0.0
      %2210 = vmatprep.subr.mxu0 0.0
      %2211 = vmatpush1.msra.mxu0 0.0
      %2212 = vmatprep.subr.mxu0 0.0
      %2213 = vmatpush1.msra.mxu0 0.0
      %2214 = vmatprep.subr.mxu0 0.0
      %2215 = vmatpush1.msra.mxu0 0.0
      %2216 = vmatprep.subr.mxu0 0.0
      %2217 = vmatpush1.msra.mxu0 0.0
      %2218 = vmatprep.subr.mxu0 0.0
      %2219 = vmatpush1.msra.mxu0 0.0
      %2220 = vmatprep.subr.mxu0 0.0
      %2221 = vmatpush1.msra.mxu0 0.0
      %2222 = vmatprep.subr.mxu0 0.0
      %2223 = vmatpush1.msra.mxu0 0.0
      %2224 = vmatprep.subr.mxu0 0.0
      %2225 = vmatpush1.msra.mxu0 0.0
      %2226 = vmatprep.subr.mxu0 0.0
      %2227 = vmatpush1.msra.mxu0 0.0
      %2228 = vmatprep.subr.mxu0 0.0
      %2229 = vmatpush1.msra.mxu0 0.0
      %2230 = vmatprep.subr.mxu0 %v2193
      %2231 = vmatpush1.msra.mxu0 %v2192
      %2232 = vmatprep.subr.mxu0 0.0
      %2233 = vmatpush2.msra.mxu0 0.0
      %2234 = vmatprep.subr.mxu0 0.0
      %2235 = vmatpush2.msra.mxu0 0.0
      %2236 = vmatprep.subr.mxu0 0.0
      %2237 = vmatpush2.msra.mxu0 0.0
      %2238 = vmatprep.subr.mxu0 0.0
      %2239 = vmatpush2.msra.mxu0 0.0
      %2240 = vmatprep.subr.mxu0 0.0
      %2241 = vmatpush2.msra.mxu0 0.0
      %2242 = vmatprep.subr.mxu0 0.0
      %2243 = vmatpush2.msra.mxu0 0.0
      %2244 = vmatprep.subr.mxu0 0.0
      %2245 = vmatpush2.msra.mxu0 0.0
      %2246 = vmatprep.subr.mxu0 0.0
      %2247 = vmatpush2.msra.mxu0 0.0
      %2248 = vmatprep.subr.mxu0 0.0
      %2249 = vmatpush2.msra.mxu0 0.0
      %2250 = vmatprep.subr.mxu0 0.0
      %2251 = vmatpush2.msra.mxu0 0.0
      %2252 = vmatprep.subr.mxu0 0.0
      %2253 = vmatpush2.msra.mxu0 0.0
      %2254 = vmatprep.subr.mxu0 0.0
      %2255 = vmatpush2.msra.mxu0 0.0
      %2256 = vmatprep.subr.mxu0 0.0
      %2257 = vmatpush2.msra.mxu0 0.0
      %2258 = vmatprep.subr.mxu0 0.0
      %2259 = vmatpush2.msra.mxu0 0.0
      %2260 = vmatprep.subr.mxu0 0.0
      %2261 = vmatpush2.msra.mxu0 0.0
      %2262 = vmatprep.subr.mxu0 0.0
      %2263 = vmatpush2.msra.mxu0 0.0
      %2264 = vmatprep.mubr.f32.mxu0 0.0
      %2265 = vmatmul.mubr.f32.gmra.mxu0 %v2198
      %v2266 = vpop.f32.mrf.mxu0
      %v2267 = vadd.f32 0.0, %v2266
      %v2268 = vpop.f32.mrf.mxu0
      %v2269 = vadd.f32 0.0, %v2268
      %2270 = vdwg.mxu0
      %2271 = vmatprep.subr.mxu0 0.0
      %2272 = vmatpush1.msra.mxu0 0.0
      %2273 = vmatprep.subr.mxu0 0.0
      %2274 = vmatpush1.msra.mxu0 0.0
      %2275 = vmatprep.subr.mxu0 0.0
      %2276 = vmatpush1.msra.mxu0 0.0
      %2277 = vmatprep.subr.mxu0 0.0
      %2278 = vmatpush1.msra.mxu0 0.0
      %2279 = vmatprep.subr.mxu0 0.0
      %2280 = vmatpush1.msra.mxu0 0.0
      %2281 = vmatprep.subr.mxu0 0.0
      %2282 = vmatpush1.msra.mxu0 0.0
      %2283 = vmatprep.subr.mxu0 0.0
      %2284 = vmatpush1.msra.mxu0 0.0
      %2285 = vmatprep.subr.mxu0 0.0
      %2286 = vmatpush1.msra.mxu0 0.0
      %2287 = vmatprep.subr.mxu0 0.0
      %2288 = vmatpush1.msra.mxu0 0.0
      %2289 = vmatprep.subr.mxu0 0.0
      %2290 = vmatpush1.msra.mxu0 0.0
      %2291 = vmatprep.subr.mxu0 0.0
      %2292 = vmatpush1.msra.mxu0 0.0
      %2293 = vmatprep.subr.mxu0 0.0
      %2294 = vmatpush1.msra.mxu0 0.0
      %2295 = vmatprep.subr.mxu0 0.0
      %2296 = vmatpush1.msra.mxu0 0.0
      %2297 = vmatprep.subr.mxu0 0.0
      %2298 = vmatpush1.msra.mxu0 0.0
      %2299 = vmatprep.subr.mxu0 0.0
      %2300 = vmatpush1.msra.mxu0 0.0
      %2301 = vmatprep.subr.mxu0 0.0
      %2302 = vmatpush1.msra.mxu0 %v2194
      %2303 = vmatprep.subr.mxu0 0.0
      %2304 = vmatpush2.msra.mxu0 0.0
      %2305 = vmatprep.subr.mxu0 0.0
      %2306 = vmatpush2.msra.mxu0 0.0
      %2307 = vmatprep.subr.mxu0 0.0
      %2308 = vmatpush2.msra.mxu0 0.0
      %2309 = vmatprep.subr.mxu0 0.0
      %2310 = vmatpush2.msra.mxu0 0.0
      %2311 = vmatprep.subr.mxu0 0.0
      %2312 = vmatpush2.msra.mxu0 0.0
      %2313 = vmatprep.subr.mxu0 0.0
      %2314 = vmatpush2.msra.mxu0 0.0
      %2315 = vmatprep.subr.mxu0 0.0
      %2316 = vmatpush2.msra.mxu0 0.0
      %2317 = vmatprep.subr.mxu0 0.0
      %2318 = vmatpush2.msra.mxu0 0.0
      %2319 = vmatprep.subr.mxu0 0.0
      %2320 = vmatpush2.msra.mxu0 0.0
      %2321 = vmatprep.subr.mxu0 0.0
      %2322 = vmatpush2.msra.mxu0 0.0
      %2323 = vmatprep.subr.mxu0 0.0
      %2324 = vmatpush2.msra.mxu0 0.0
      %2325 = vmatprep.subr.mxu0 0.0
      %2326 = vmatpush2.msra.mxu0 0.0
      %2327 = vmatprep.subr.mxu0 0.0
      %2328 = vmatpush2.msra.mxu0 0.0
      %2329 = vmatprep.subr.mxu0 0.0
      %2330 = vmatpush2.msra.mxu0 0.0
      %2331 = vmatprep.subr.mxu0 0.0
      %2332 = vmatpush2.msra.mxu0 0.0
      %2333 = vmatprep.subr.mxu0 0.0
      %2334 = vmatpush2.msra.mxu0 0.0
      %2335 = vmatprep.mubr.f32.mxu0 0.0
      %2336 = vmatmul.mubr.f32.gmra.mxu0 %v2198
      %v2337 = vpop.f32.mrf.mxu0
      %v2338 = vadd.f32 0.0, %v2337
      %v2339 = vpop.f32.mrf.mxu0
      %2340 = vdwg.mxu0
      %v2341 = vadd.f32 %v2109, %v2267
      %v2342 = vadd.f32 %v2111, %v2269
      %v2343 = vadd.f32 %v2180, %v2338
      %2344 = vrot.lane.b32.xlu0 %v1864, 1
      %v2345 = vpop.permute.xlu0 %2344
      %2346 = vrot.lane.b32.xlu0 %v1865, 1
      %v2347 = vpop.permute.xlu0 %2346
      %2348 = vrot.lane.b32.xlu0 %v1866, 1
      %v2349 = vpop.permute.xlu0 %2348
      %v2350 = vsel %vm776, %v2347, %v2349
      %v2351 = vsel %vm776, %v2345, %v2347
      %v2352 = vsel %vm776, %v2349, %v2345
      %v2353 = vsel %vm786, %v2352, 0.0
      %v2354 = vsel %vm787, %v2351, 0.0
      %v2355 = vsel %vm788, %v2350, 0.0
      %s2356 = scalar_lea.vmem %s3, 24
      %v2357 = vld [vmem:[%s2356] sm:$0xff]
      %v2359 = vsel %vm1894, %v2357, 0
      %2361 = vmatprep.subr.mxu0 0.0
      %2362 = vmatpush1.msra.mxu0 0.0
      %2363 = vmatprep.subr.mxu0 0.0
      %2364 = vmatpush1.msra.mxu0 0.0
      %2365 = vmatprep.subr.mxu0 0.0
      %2366 = vmatpush1.msra.mxu0 0.0
      %2367 = vmatprep.subr.mxu0 0.0
      %2368 = vmatpush1.msra.mxu0 0.0
      %2369 = vmatprep.subr.mxu0 0.0
      %2370 = vmatpush1.msra.mxu0 0.0
      %2371 = vmatprep.subr.mxu0 0.0
      %2372 = vmatpush1.msra.mxu0 0.0
      %2373 = vmatprep.subr.mxu0 0.0
      %2374 = vmatpush1.msra.mxu0 0.0
      %2375 = vmatprep.subr.mxu0 0.0
      %2376 = vmatpush1.msra.mxu0 0.0
      %2377 = vmatprep.subr.mxu0 0.0
      %2378 = vmatpush1.msra.mxu0 0.0
      %2379 = vmatprep.subr.mxu0 0.0
      %2380 = vmatpush1.msra.mxu0 0.0
      %2381 = vmatprep.subr.mxu0 0.0
      %2382 = vmatpush1.msra.mxu0 0.0
      %2383 = vmatprep.subr.mxu0 0.0
      %2384 = vmatpush1.msra.mxu0 0.0
      %2385 = vmatprep.subr.mxu0 0.0
      %2386 = vmatpush1.msra.mxu0 0.0
      %2387 = vmatprep.subr.mxu0 0.0
      %2388 = vmatpush1.msra.mxu0 0.0
      %2389 = vmatprep.subr.mxu0 0.0
      %2390 = vmatpush1.msra.mxu0 0.0
      %2391 = vmatprep.subr.mxu0 %v2354
      %2392 = vmatpush1.msra.mxu0 %v2353
      %2393 = vmatprep.subr.mxu0 0.0
      %2394 = vmatpush2.msra.mxu0 0.0
      %2395 = vmatprep.subr.mxu0 0.0
      %2396 = vmatpush2.msra.mxu0 0.0
      %2397 = vmatprep.subr.mxu0 0.0
      %2398 = vmatpush2.msra.mxu0 0.0
      %2399 = vmatprep.subr.mxu0 0.0
      %2400 = vmatpush2.msra.mxu0 0.0
      %2401 = vmatprep.subr.mxu0 0.0
      %2402 = vmatpush2.msra.mxu0 0.0
      %2403 = vmatprep.subr.mxu0 0.0
      %2404 = vmatpush2.msra.mxu0 0.0
      %2405 = vmatprep.subr.mxu0 0.0
      %2406 = vmatpush2.msra.mxu0 0.0
      %2407 = vmatprep.subr.mxu0 0.0
      %2408 = vmatpush2.msra.mxu0 0.0
      %2409 = vmatprep.subr.mxu0 0.0
      %2410 = vmatpush2.msra.mxu0 0.0
      %2411 = vmatprep.subr.mxu0 0.0
      %2412 = vmatpush2.msra.mxu0 0.0
      %2413 = vmatprep.subr.mxu0 0.0
      %2414 = vmatpush2.msra.mxu0 0.0
      %2415 = vmatprep.subr.mxu0 0.0
      %2416 = vmatpush2.msra.mxu0 0.0
      %2417 = vmatprep.subr.mxu0 0.0
      %2418 = vmatpush2.msra.mxu0 0.0
      %2419 = vmatprep.subr.mxu0 0.0
      %2420 = vmatpush2.msra.mxu0 0.0
      %2421 = vmatprep.subr.mxu0 0.0
      %2422 = vmatpush2.msra.mxu0 0.0
      %2423 = vmatprep.subr.mxu0 0.0
      %2424 = vmatpush2.msra.mxu0 0.0
      %2425 = vmatprep.mubr.f32.mxu0 0.0
      %2426 = vmatmul.mubr.f32.gmra.mxu0 %v2359
      %v2427 = vpop.f32.mrf.mxu0
      %v2428 = vadd.f32 0.0, %v2427
      %v2429 = vpop.f32.mrf.mxu0
      %v2430 = vadd.f32 0.0, %v2429
      %2431 = vdwg.mxu0
      %2432 = vmatprep.subr.mxu0 0.0
      %2433 = vmatpush1.msra.mxu0 0.0
      %2434 = vmatprep.subr.mxu0 0.0
      %2435 = vmatpush1.msra.mxu0 0.0
      %2436 = vmatprep.subr.mxu0 0.0
      %2437 = vmatpush1.msra.mxu0 0.0
      %2438 = vmatprep.subr.mxu0 0.0
      %2439 = vmatpush1.msra.mxu0 0.0
      %2440 = vmatprep.subr.mxu0 0.0
      %2441 = vmatpush1.msra.mxu0 0.0
      %2442 = vmatprep.subr.mxu0 0.0
      %2443 = vmatpush1.msra.mxu0 0.0
      %2444 = vmatprep.subr.mxu0 0.0
      %2445 = vmatpush1.msra.mxu0 0.0
      %2446 = vmatprep.subr.mxu0 0.0
      %2447 = vmatpush1.msra.mxu0 0.0
      %2448 = vmatprep.subr.mxu0 0.0
      %2449 = vmatpush1.msra.mxu0 0.0
      %2450 = vmatprep.subr.mxu0 0.0
      %2451 = vmatpush1.msra.mxu0 0.0
      %2452 = vmatprep.subr.mxu0 0.0
      %2453 = vmatpush1.msra.mxu0 0.0
      %2454 = vmatprep.subr.mxu0 0.0
      %2455 = vmatpush1.msra.mxu0 0.0
      %2456 = vmatprep.subr.mxu0 0.0
      %2457 = vmatpush1.msra.mxu0 0.0
      %2458 = vmatprep.subr.mxu0 0.0
      %2459 = vmatpush1.msra.mxu0 0.0
      %2460 = vmatprep.subr.mxu0 0.0
      %2461 = vmatpush1.msra.mxu0 0.0
      %2462 = vmatprep.subr.mxu0 0.0
      %2463 = vmatpush1.msra.mxu0 %v2355
      %2464 = vmatprep.subr.mxu0 0.0
      %2465 = vmatpush2.msra.mxu0 0.0
      %2466 = vmatprep.subr.mxu0 0.0
      %2467 = vmatpush2.msra.mxu0 0.0
      %2468 = vmatprep.subr.mxu0 0.0
      %2469 = vmatpush2.msra.mxu0 0.0
      %2470 = vmatprep.subr.mxu0 0.0
      %2471 = vmatpush2.msra.mxu0 0.0
      %2472 = vmatprep.subr.mxu0 0.0
      %2473 = vmatpush2.msra.mxu0 0.0
      %2474 = vmatprep.subr.mxu0 0.0
      %2475 = vmatpush2.msra.mxu0 0.0
      %2476 = vmatprep.subr.mxu0 0.0
      %2477 = vmatpush2.msra.mxu0 0.0
      %2478 = vmatprep.subr.mxu0 0.0
      %2479 = vmatpush2.msra.mxu0 0.0
      %2480 = vmatprep.subr.mxu0 0.0
      %2481 = vmatpush2.msra.mxu0 0.0
      %2482 = vmatprep.subr.mxu0 0.0
      %2483 = vmatpush2.msra.mxu0 0.0
      %2484 = vmatprep.subr.mxu0 0.0
      %2485 = vmatpush2.msra.mxu0 0.0
      %2486 = vmatprep.subr.mxu0 0.0
      %2487 = vmatpush2.msra.mxu0 0.0
      %2488 = vmatprep.subr.mxu0 0.0
      %2489 = vmatpush2.msra.mxu0 0.0
      %2490 = vmatprep.subr.mxu0 0.0
      %2491 = vmatpush2.msra.mxu0 0.0
      %2492 = vmatprep.subr.mxu0 0.0
      %2493 = vmatpush2.msra.mxu0 0.0
      %2494 = vmatprep.subr.mxu0 0.0
      %2495 = vmatpush2.msra.mxu0 0.0
      %2496 = vmatprep.mubr.f32.mxu0 0.0
      %2497 = vmatmul.mubr.f32.gmra.mxu0 %v2359
      %v2498 = vpop.f32.mrf.mxu0
      %v2499 = vadd.f32 0.0, %v2498
      %v2500 = vpop.f32.mrf.mxu0
      %2501 = vdwg.mxu0
      %v2502 = vadd.f32 %v2341, %v2428
      %v2503 = vadd.f32 %v2342, %v2430
      %v2504 = vadd.f32 %v2343, %v2499
      %s2505 = scalar_lea.vmem %s3, 32
      %v2506 = vld [vmem:[%s2505] sm:$0xff]
      %v2508 = vsel %vm1894, %v2506, 0
      %2510 = vmatprep.subr.mxu0 0.0
      %2511 = vmatpush1.msra.mxu0 0.0
      %2512 = vmatprep.subr.mxu0 0.0
      %2513 = vmatpush1.msra.mxu0 0.0
      %2514 = vmatprep.subr.mxu0 0.0
      %2515 = vmatpush1.msra.mxu0 0.0
      %2516 = vmatprep.subr.mxu0 0.0
      %2517 = vmatpush1.msra.mxu0 0.0
      %2518 = vmatprep.subr.mxu0 0.0
      %2519 = vmatpush1.msra.mxu0 0.0
      %2520 = vmatprep.subr.mxu0 0.0
      %2521 = vmatpush1.msra.mxu0 0.0
      %2522 = vmatprep.subr.mxu0 0.0
      %2523 = vmatpush1.msra.mxu0 0.0
      %2524 = vmatprep.subr.mxu0 0.0
      %2525 = vmatpush1.msra.mxu0 0.0
      %2526 = vmatprep.subr.mxu0 0.0
      %2527 = vmatpush1.msra.mxu0 0.0
      %2528 = vmatprep.subr.mxu0 0.0
      %2529 = vmatpush1.msra.mxu0 0.0
      %2530 = vmatprep.subr.mxu0 0.0
      %2531 = vmatpush1.msra.mxu0 0.0
      %2532 = vmatprep.subr.mxu0 0.0
      %2533 = vmatpush1.msra.mxu0 0.0
      %2534 = vmatprep.subr.mxu0 0.0
      %2535 = vmatpush1.msra.mxu0 0.0
      %2536 = vmatprep.subr.mxu0 0.0
      %2537 = vmatpush1.msra.mxu0 0.0
      %2538 = vmatprep.subr.mxu0 0.0
      %2539 = vmatpush1.msra.mxu0 0.0
      %2540 = vmatprep.subr.mxu0 %v1865
      %2541 = vmatpush1.msra.mxu0 %v1864
      %2542 = vmatprep.subr.mxu0 0.0
      %2543 = vmatpush2.msra.mxu0 0.0
      %2544 = vmatprep.subr.mxu0 0.0
      %2545 = vmatpush2.msra.mxu0 0.0
      %2546 = vmatprep.subr.mxu0 0.0
      %2547 = vmatpush2.msra.mxu0 0.0
      %2548 = vmatprep.subr.mxu0 0.0
      %2549 = vmatpush2.msra.mxu0 0.0
      %2550 = vmatprep.subr.mxu0 0.0
      %2551 = vmatpush2.msra.mxu0 0.0
      %2552 = vmatprep.subr.mxu0 0.0
      %2553 = vmatpush2.msra.mxu0 0.0
      %2554 = vmatprep.subr.mxu0 0.0
      %2555 = vmatpush2.msra.mxu0 0.0
      %2556 = vmatprep.subr.mxu0 0.0
      %2557 = vmatpush2.msra.mxu0 0.0
      %2558 = vmatprep.subr.mxu0 0.0
      %2559 = vmatpush2.msra.mxu0 0.0
      %2560 = vmatprep.subr.mxu0 0.0
      %2561 = vmatpush2.msra.mxu0 0.0
      %2562 = vmatprep.subr.mxu0 0.0
      %2563 = vmatpush2.msra.mxu0 0.0
      %2564 = vmatprep.subr.mxu0 0.0
      %2565 = vmatpush2.msra.mxu0 0.0
      %2566 = vmatprep.subr.mxu0 0.0
      %2567 = vmatpush2.msra.mxu0 0.0
      %2568 = vmatprep.subr.mxu0 0.0
      %2569 = vmatpush2.msra.mxu0 0.0
      %2570 = vmatprep.subr.mxu0 0.0
      %2571 = vmatpush2.msra.mxu0 0.0
      %2572 = vmatprep.subr.mxu0 0.0
      %2573 = vmatpush2.msra.mxu0 0.0
      %2574 = vmatprep.mubr.f32.mxu0 0.0
      %2575 = vmatmul.mubr.f32.gmra.mxu0 %v2508
      %v2576 = vpop.f32.mrf.mxu0
      %v2577 = vadd.f32 0.0, %v2576
      %v2578 = vpop.f32.mrf.mxu0
      %v2579 = vadd.f32 0.0, %v2578
      %2580 = vdwg.mxu0
      %2581 = vmatprep.subr.mxu0 0.0
      %2582 = vmatpush1.msra.mxu0 0.0
      %2583 = vmatprep.subr.mxu0 0.0
      %2584 = vmatpush1.msra.mxu0 0.0
      %2585 = vmatprep.subr.mxu0 0.0
      %2586 = vmatpush1.msra.mxu0 0.0
      %2587 = vmatprep.subr.mxu0 0.0
      %2588 = vmatpush1.msra.mxu0 0.0
      %2589 = vmatprep.subr.mxu0 0.0
      %2590 = vmatpush1.msra.mxu0 0.0
      %2591 = vmatprep.subr.mxu0 0.0
      %2592 = vmatpush1.msra.mxu0 0.0
      %2593 = vmatprep.subr.mxu0 0.0
      %2594 = vmatpush1.msra.mxu0 0.0
      %2595 = vmatprep.subr.mxu0 0.0
      %2596 = vmatpush1.msra.mxu0 0.0
      %2597 = vmatprep.subr.mxu0 0.0
      %2598 = vmatpush1.msra.mxu0 0.0
      %2599 = vmatprep.subr.mxu0 0.0
      %2600 = vmatpush1.msra.mxu0 0.0
      %2601 = vmatprep.subr.mxu0 0.0
      %2602 = vmatpush1.msra.mxu0 0.0
      %2603 = vmatprep.subr.mxu0 0.0
      %2604 = vmatpush1.msra.mxu0 0.0
      %2605 = vmatprep.subr.mxu0 0.0
      %2606 = vmatpush1.msra.mxu0 0.0
      %2607 = vmatprep.subr.mxu0 0.0
      %2608 = vmatpush1.msra.mxu0 0.0
      %2609 = vmatprep.subr.mxu0 0.0
      %2610 = vmatpush1.msra.mxu0 0.0
      %2611 = vmatprep.subr.mxu0 0.0
      %2612 = vmatpush1.msra.mxu0 %v1866
      %2613 = vmatprep.subr.mxu0 0.0
      %2614 = vmatpush2.msra.mxu0 0.0
      %2615 = vmatprep.subr.mxu0 0.0
      %2616 = vmatpush2.msra.mxu0 0.0
      %2617 = vmatprep.subr.mxu0 0.0
      %2618 = vmatpush2.msra.mxu0 0.0
      %2619 = vmatprep.subr.mxu0 0.0
      %2620 = vmatpush2.msra.mxu0 0.0
      %2621 = vmatprep.subr.mxu0 0.0
      %2622 = vmatpush2.msra.mxu0 0.0
      %2623 = vmatprep.subr.mxu0 0.0
      %2624 = vmatpush2.msra.mxu0 0.0
      %2625 = vmatprep.subr.mxu0 0.0
      %2626 = vmatpush2.msra.mxu0 0.0
      %2627 = vmatprep.subr.mxu0 0.0
      %2628 = vmatpush2.msra.mxu0 0.0
      %2629 = vmatprep.subr.mxu0 0.0
      %2630 = vmatpush2.msra.mxu0 0.0
      %2631 = vmatprep.subr.mxu0 0.0
      %2632 = vmatpush2.msra.mxu0 0.0
      %2633 = vmatprep.subr.mxu0 0.0
      %2634 = vmatpush2.msra.mxu0 0.0
      %2635 = vmatprep.subr.mxu0 0.0
      %2636 = vmatpush2.msra.mxu0 0.0
      %2637 = vmatprep.subr.mxu0 0.0
      %2638 = vmatpush2.msra.mxu0 0.0
      %2639 = vmatprep.subr.mxu0 0.0
      %2640 = vmatpush2.msra.mxu0 0.0
      %2641 = vmatprep.subr.mxu0 0.0
      %2642 = vmatpush2.msra.mxu0 0.0
      %2643 = vmatprep.subr.mxu0 0.0
      %2644 = vmatpush2.msra.mxu0 0.0
      %2645 = vmatprep.mubr.f32.mxu0 0.0
      %2646 = vmatmul.mubr.f32.gmra.mxu0 %v2508
      %v2647 = vpop.f32.mrf.mxu0
      %v2648 = vadd.f32 0.0, %v2647
      %v2649 = vpop.f32.mrf.mxu0
      %2650 = vdwg.mxu0
      %v2651 = vadd.f32 %v2502, %v2577
      %v2652 = vadd.f32 %v2503, %v2579
      %v2653 = vadd.f32 %v2504, %v2648
      %2654 = vrot.lane.b32.xlu0 %v1864, 127
      %v2655 = vpop.permute.xlu0 %2654
      %2656 = vrot.lane.b32.xlu0 %v1865, 127
      %v2657 = vpop.permute.xlu0 %2656
      %2658 = vrot.lane.b32.xlu0 %v1866, 127
      %v2659 = vpop.permute.xlu0 %2658
      %v2660 = vsel %vm1111, %v2657, %v2659
      %v2661 = vsel %vm1111, %v2655, %v2657
      %v2662 = vsel %vm1111, %v2659, %v2655
      %v2663 = vsel %vm1121, %v2661, 0.0
      %v2664 = vsel %vm1122, %v2660, 0.0
      %v2665 = vsel %vm1123, %v2662, 0.0
      %s2666 = scalar_lea.vmem %s3, 40
      %v2667 = vld [vmem:[%s2666] sm:$0xff]
      %v2669 = vsel %vm1894, %v2667, 0
      %2671 = vmatprep.subr.mxu0 0.0
      %2672 = vmatpush1.msra.mxu0 0.0
      %2673 = vmatprep.subr.mxu0 0.0
      %2674 = vmatpush1.msra.mxu0 0.0
      %2675 = vmatprep.subr.mxu0 0.0
      %2676 = vmatpush1.msra.mxu0 0.0
      %2677 = vmatprep.subr.mxu0 0.0
      %2678 = vmatpush1.msra.mxu0 0.0
      %2679 = vmatprep.subr.mxu0 0.0
      %2680 = vmatpush1.msra.mxu0 0.0
      %2681 = vmatprep.subr.mxu0 0.0
      %2682 = vmatpush1.msra.mxu0 0.0
      %2683 = vmatprep.subr.mxu0 0.0
      %2684 = vmatpush1.msra.mxu0 0.0
      %2685 = vmatprep.subr.mxu0 0.0
      %2686 = vmatpush1.msra.mxu0 0.0
      %2687 = vmatprep.subr.mxu0 0.0
      %2688 = vmatpush1.msra.mxu0 0.0
      %2689 = vmatprep.subr.mxu0 0.0
      %2690 = vmatpush1.msra.mxu0 0.0
      %2691 = vmatprep.subr.mxu0 0.0
      %2692 = vmatpush1.msra.mxu0 0.0
      %2693 = vmatprep.subr.mxu0 0.0
      %2694 = vmatpush1.msra.mxu0 0.0
      %2695 = vmatprep.subr.mxu0 0.0
      %2696 = vmatpush1.msra.mxu0 0.0
      %2697 = vmatprep.subr.mxu0 0.0
      %2698 = vmatpush1.msra.mxu0 0.0
      %2699 = vmatprep.subr.mxu0 0.0
      %2700 = vmatpush1.msra.mxu0 0.0
      %2701 = vmatprep.subr.mxu0 %v2664
      %2702 = vmatpush1.msra.mxu0 %v2663
      %2703 = vmatprep.subr.mxu0 0.0
      %2704 = vmatpush2.msra.mxu0 0.0
      %2705 = vmatprep.subr.mxu0 0.0
      %2706 = vmatpush2.msra.mxu0 0.0
      %2707 = vmatprep.subr.mxu0 0.0
      %2708 = vmatpush2.msra.mxu0 0.0
      %2709 = vmatprep.subr.mxu0 0.0
      %2710 = vmatpush2.msra.mxu0 0.0
      %2711 = vmatprep.subr.mxu0 0.0
      %2712 = vmatpush2.msra.mxu0 0.0
      %2713 = vmatprep.subr.mxu0 0.0
      %2714 = vmatpush2.msra.mxu0 0.0
      %2715 = vmatprep.subr.mxu0 0.0
      %2716 = vmatpush2.msra.mxu0 0.0
      %2717 = vmatprep.subr.mxu0 0.0
      %2718 = vmatpush2.msra.mxu0 0.0
      %2719 = vmatprep.subr.mxu0 0.0
      %2720 = vmatpush2.msra.mxu0 0.0
      %2721 = vmatprep.subr.mxu0 0.0
      %2722 = vmatpush2.msra.mxu0 0.0
      %2723 = vmatprep.subr.mxu0 0.0
      %2724 = vmatpush2.msra.mxu0 0.0
      %2725 = vmatprep.subr.mxu0 0.0
      %2726 = vmatpush2.msra.mxu0 0.0
      %2727 = vmatprep.subr.mxu0 0.0
      %2728 = vmatpush2.msra.mxu0 0.0
      %2729 = vmatprep.subr.mxu0 0.0
      %2730 = vmatpush2.msra.mxu0 0.0
      %2731 = vmatprep.subr.mxu0 0.0
      %2732 = vmatpush2.msra.mxu0 0.0
      %2733 = vmatprep.subr.mxu0 0.0
      %2734 = vmatpush2.msra.mxu0 0.0
      %2735 = vmatprep.mubr.f32.mxu0 0.0
      %2736 = vmatmul.mubr.f32.gmra.mxu0 %v2669
      %v2737 = vpop.f32.mrf.mxu0
      %v2738 = vadd.f32 0.0, %v2737
      %v2739 = vpop.f32.mrf.mxu0
      %v2740 = vadd.f32 0.0, %v2739
      %2741 = vdwg.mxu0
      %2742 = vmatprep.subr.mxu0 0.0
      %2743 = vmatpush1.msra.mxu0 0.0
      %2744 = vmatprep.subr.mxu0 0.0
      %2745 = vmatpush1.msra.mxu0 0.0
      %2746 = vmatprep.subr.mxu0 0.0
      %2747 = vmatpush1.msra.mxu0 0.0
      %2748 = vmatprep.subr.mxu0 0.0
      %2749 = vmatpush1.msra.mxu0 0.0
      %2750 = vmatprep.subr.mxu0 0.0
      %2751 = vmatpush1.msra.mxu0 0.0
      %2752 = vmatprep.subr.mxu0 0.0
      %2753 = vmatpush1.msra.mxu0 0.0
      %2754 = vmatprep.subr.mxu0 0.0
      %2755 = vmatpush1.msra.mxu0 0.0
      %2756 = vmatprep.subr.mxu0 0.0
      %2757 = vmatpush1.msra.mxu0 0.0
      %2758 = vmatprep.subr.mxu0 0.0
      %2759 = vmatpush1.msra.mxu0 0.0
      %2760 = vmatprep.subr.mxu0 0.0
      %2761 = vmatpush1.msra.mxu0 0.0
      %2762 = vmatprep.subr.mxu0 0.0
      %2763 = vmatpush1.msra.mxu0 0.0
      %2764 = vmatprep.subr.mxu0 0.0
      %2765 = vmatpush1.msra.mxu0 0.0
      %2766 = vmatprep.subr.mxu0 0.0
      %2767 = vmatpush1.msra.mxu0 0.0
      %2768 = vmatprep.subr.mxu0 0.0
      %2769 = vmatpush1.msra.mxu0 0.0
      %2770 = vmatprep.subr.mxu0 0.0
      %2771 = vmatpush1.msra.mxu0 0.0
      %2772 = vmatprep.subr.mxu0 0.0
      %2773 = vmatpush1.msra.mxu0 %v2665
      %2774 = vmatprep.subr.mxu0 0.0
      %2775 = vmatpush2.msra.mxu0 0.0
      %2776 = vmatprep.subr.mxu0 0.0
      %2777 = vmatpush2.msra.mxu0 0.0
      %2778 = vmatprep.subr.mxu0 0.0
      %2779 = vmatpush2.msra.mxu0 0.0
      %2780 = vmatprep.subr.mxu0 0.0
      %2781 = vmatpush2.msra.mxu0 0.0
      %2782 = vmatprep.subr.mxu0 0.0
      %2783 = vmatpush2.msra.mxu0 0.0
      %2784 = vmatprep.subr.mxu0 0.0
      %2785 = vmatpush2.msra.mxu0 0.0
      %2786 = vmatprep.subr.mxu0 0.0
      %2787 = vmatpush2.msra.mxu0 0.0
      %2788 = vmatprep.subr.mxu0 0.0
      %2789 = vmatpush2.msra.mxu0 0.0
      %2790 = vmatprep.subr.mxu0 0.0
      %2791 = vmatpush2.msra.mxu0 0.0
      %2792 = vmatprep.subr.mxu0 0.0
      %2793 = vmatpush2.msra.mxu0 0.0
      %2794 = vmatprep.subr.mxu0 0.0
      %2795 = vmatpush2.msra.mxu0 0.0
      %2796 = vmatprep.subr.mxu0 0.0
      %2797 = vmatpush2.msra.mxu0 0.0
      %2798 = vmatprep.subr.mxu0 0.0
      %2799 = vmatpush2.msra.mxu0 0.0
      %2800 = vmatprep.subr.mxu0 0.0
      %2801 = vmatpush2.msra.mxu0 0.0
      %2802 = vmatprep.subr.mxu0 0.0
      %2803 = vmatpush2.msra.mxu0 0.0
      %2804 = vmatprep.subr.mxu0 0.0
      %2805 = vmatpush2.msra.mxu0 0.0
      %2806 = vmatprep.mubr.f32.mxu0 0.0
      %2807 = vmatmul.mubr.f32.gmra.mxu0 %v2669
      %v2808 = vpop.f32.mrf.mxu0
      %v2809 = vadd.f32 0.0, %v2808
      %v2810 = vpop.f32.mrf.mxu0
      %2811 = vdwg.mxu0
      %v2812 = vadd.f32 %v2651, %v2738
      %v2813 = vadd.f32 %v2652, %v2740
      %v2814 = vadd.f32 %v2653, %v2809
      %2815 = vrot.lane.b32.xlu0 %v1864, 105
      %v2816 = vpop.permute.xlu0 %2815
      %2817 = vrot.lane.b32.xlu0 %v1865, 105
      %v2818 = vpop.permute.xlu0 %2817
      %2819 = vrot.lane.b32.xlu0 %v1866, 105
      %v2820 = vpop.permute.xlu0 %2819
      %v2821 = vsel %vm1291, %v2818, %v2820
      %v2822 = vsel %vm1291, %v2816, %v2818
      %v2823 = vsel %vm1291, %v2820, %v2816
      %v2824 = vsel %vm1301, %v2822, 0.0
      %v2825 = vsel %vm1302, %v2821, 0.0
      %v2826 = vsel %vm1303, %v2823, 0.0
      %s2827 = scalar_lea.vmem %s3, 48
      %v2828 = vld [vmem:[%s2827] sm:$0xff]
      %v2830 = vsel %vm1894, %v2828, 0
      %2832 = vmatprep.subr.mxu0 0.0
      %2833 = vmatpush1.msra.mxu0 0.0
      %2834 = vmatprep.subr.mxu0 0.0
      %2835 = vmatpush1.msra.mxu0 0.0
      %2836 = vmatprep.subr.mxu0 0.0
      %2837 = vmatpush1.msra.mxu0 0.0
      %2838 = vmatprep.subr.mxu0 0.0
      %2839 = vmatpush1.msra.mxu0 0.0
      %2840 = vmatprep.subr.mxu0 0.0
      %2841 = vmatpush1.msra.mxu0 0.0
      %2842 = vmatprep.subr.mxu0 0.0
      %2843 = vmatpush1.msra.mxu0 0.0
      %2844 = vmatprep.subr.mxu0 0.0
      %2845 = vmatpush1.msra.mxu0 0.0
      %2846 = vmatprep.subr.mxu0 0.0
      %2847 = vmatpush1.msra.mxu0 0.0
      %2848 = vmatprep.subr.mxu0 0.0
      %2849 = vmatpush1.msra.mxu0 0.0
      %2850 = vmatprep.subr.mxu0 0.0
      %2851 = vmatpush1.msra.mxu0 0.0
      %2852 = vmatprep.subr.mxu0 0.0
      %2853 = vmatpush1.msra.mxu0 0.0
      %2854 = vmatprep.subr.mxu0 0.0
      %2855 = vmatpush1.msra.mxu0 0.0
      %2856 = vmatprep.subr.mxu0 0.0
      %2857 = vmatpush1.msra.mxu0 0.0
      %2858 = vmatprep.subr.mxu0 0.0
      %2859 = vmatpush1.msra.mxu0 0.0
      %2860 = vmatprep.subr.mxu0 0.0
      %2861 = vmatpush1.msra.mxu0 0.0
      %2862 = vmatprep.subr.mxu0 %v2825
      %2863 = vmatpush1.msra.mxu0 %v2824
      %2864 = vmatprep.subr.mxu0 0.0
      %2865 = vmatpush2.msra.mxu0 0.0
      %2866 = vmatprep.subr.mxu0 0.0
      %2867 = vmatpush2.msra.mxu0 0.0
      %2868 = vmatprep.subr.mxu0 0.0
      %2869 = vmatpush2.msra.mxu0 0.0
      %2870 = vmatprep.subr.mxu0 0.0
      %2871 = vmatpush2.msra.mxu0 0.0
      %2872 = vmatprep.subr.mxu0 0.0
      %2873 = vmatpush2.msra.mxu0 0.0
      %2874 = vmatprep.subr.mxu0 0.0
      %2875 = vmatpush2.msra.mxu0 0.0
      %2876 = vmatprep.subr.mxu0 0.0
      %2877 = vmatpush2.msra.mxu0 0.0
      %2878 = vmatprep.subr.mxu0 0.0
      %2879 = vmatpush2.msra.mxu0 0.0
      %2880 = vmatprep.subr.mxu0 0.0
      %2881 = vmatpush2.msra.mxu0 0.0
      %2882 = vmatprep.subr.mxu0 0.0
      %2883 = vmatpush2.msra.mxu0 0.0
      %2884 = vmatprep.subr.mxu0 0.0
      %2885 = vmatpush2.msra.mxu0 0.0
      %2886 = vmatprep.subr.mxu0 0.0
      %2887 = vmatpush2.msra.mxu0 0.0
      %2888 = vmatprep.subr.mxu0 0.0
      %2889 = vmatpush2.msra.mxu0 0.0
      %2890 = vmatprep.subr.mxu0 0.0
      %2891 = vmatpush2.msra.mxu0 0.0
      %2892 = vmatprep.subr.mxu0 0.0
      %2893 = vmatpush2.msra.mxu0 0.0
      %2894 = vmatprep.subr.mxu0 0.0
      %2895 = vmatpush2.msra.mxu0 0.0
      %2896 = vmatprep.mubr.f32.mxu0 0.0
      %2897 = vmatmul.mubr.f32.gmra.mxu0 %v2830
      %v2898 = vpop.f32.mrf.mxu0
      %v2899 = vadd.f32 0.0, %v2898
      %v2900 = vpop.f32.mrf.mxu0
      %v2901 = vadd.f32 0.0, %v2900
      %2902 = vdwg.mxu0
      %2903 = vmatprep.subr.mxu0 0.0
      %2904 = vmatpush1.msra.mxu0 0.0
      %2905 = vmatprep.subr.mxu0 0.0
      %2906 = vmatpush1.msra.mxu0 0.0
      %2907 = vmatprep.subr.mxu0 0.0
      %2908 = vmatpush1.msra.mxu0 0.0
      %2909 = vmatprep.subr.mxu0 0.0
      %2910 = vmatpush1.msra.mxu0 0.0
      %2911 = vmatprep.subr.mxu0 0.0
      %2912 = vmatpush1.msra.mxu0 0.0
      %2913 = vmatprep.subr.mxu0 0.0
      %2914 = vmatpush1.msra.mxu0 0.0
      %2915 = vmatprep.subr.mxu0 0.0
      %2916 = vmatpush1.msra.mxu0 0.0
      %2917 = vmatprep.subr.mxu0 0.0
      %2918 = vmatpush1.msra.mxu0 0.0
      %2919 = vmatprep.subr.mxu0 0.0
      %2920 = vmatpush1.msra.mxu0 0.0
      %2921 = vmatprep.subr.mxu0 0.0
      %2922 = vmatpush1.msra.mxu0 0.0
      %2923 = vmatprep.subr.mxu0 0.0
      %2924 = vmatpush1.msra.mxu0 0.0
      %2925 = vmatprep.subr.mxu0 0.0
      %2926 = vmatpush1.msra.mxu0 0.0
      %2927 = vmatprep.subr.mxu0 0.0
      %2928 = vmatpush1.msra.mxu0 0.0
      %2929 = vmatprep.subr.mxu0 0.0
      %2930 = vmatpush1.msra.mxu0 0.0
      %2931 = vmatprep.subr.mxu0 0.0
      %2932 = vmatpush1.msra.mxu0 0.0
      %2933 = vmatprep.subr.mxu0 0.0
      %2934 = vmatpush1.msra.mxu0 %v2826
      %2935 = vmatprep.subr.mxu0 0.0
      %2936 = vmatpush2.msra.mxu0 0.0
      %2937 = vmatprep.subr.mxu0 0.0
      %2938 = vmatpush2.msra.mxu0 0.0
      %2939 = vmatprep.subr.mxu0 0.0
      %2940 = vmatpush2.msra.mxu0 0.0
      %2941 = vmatprep.subr.mxu0 0.0
      %2942 = vmatpush2.msra.mxu0 0.0
      %2943 = vmatprep.subr.mxu0 0.0
      %2944 = vmatpush2.msra.mxu0 0.0
      %2945 = vmatprep.subr.mxu0 0.0
      %2946 = vmatpush2.msra.mxu0 0.0
      %2947 = vmatprep.subr.mxu0 0.0
      %2948 = vmatpush2.msra.mxu0 0.0
      %2949 = vmatprep.subr.mxu0 0.0
      %2950 = vmatpush2.msra.mxu0 0.0
      %2951 = vmatprep.subr.mxu0 0.0
      %2952 = vmatpush2.msra.mxu0 0.0
      %2953 = vmatprep.subr.mxu0 0.0
      %2954 = vmatpush2.msra.mxu0 0.0
      %2955 = vmatprep.subr.mxu0 0.0
      %2956 = vmatpush2.msra.mxu0 0.0
      %2957 = vmatprep.subr.mxu0 0.0
      %2958 = vmatpush2.msra.mxu0 0.0
      %2959 = vmatprep.subr.mxu0 0.0
      %2960 = vmatpush2.msra.mxu0 0.0
      %2961 = vmatprep.subr.mxu0 0.0
      %2962 = vmatpush2.msra.mxu0 0.0
      %2963 = vmatprep.subr.mxu0 0.0
      %2964 = vmatpush2.msra.mxu0 0.0
      %2965 = vmatprep.subr.mxu0 0.0
      %2966 = vmatpush2.msra.mxu0 0.0
      %2967 = vmatprep.mubr.f32.mxu0 0.0
      %2968 = vmatmul.mubr.f32.gmra.mxu0 %v2830
      %v2969 = vpop.f32.mrf.mxu0
      %v2970 = vadd.f32 0.0, %v2969
      %v2971 = vpop.f32.mrf.mxu0
      %2972 = vdwg.mxu0
      %v2973 = vadd.f32 %v2812, %v2899
      %v2974 = vadd.f32 %v2813, %v2901
      %v2975 = vadd.f32 %v2814, %v2970
      %2976 = vrot.lane.b32.xlu0 %v1864, 104
      %v2977 = vpop.permute.xlu0 %2976
      %2978 = vrot.lane.b32.xlu0 %v1865, 104
      %v2979 = vpop.permute.xlu0 %2978
      %2980 = vrot.lane.b32.xlu0 %v1866, 104
      %v2981 = vpop.permute.xlu0 %2980
      %v2982 = vsel %vm1471, %v2979, %v2981
      %v2983 = vsel %vm1471, %v2977, %v2979
      %v2984 = vsel %vm1471, %v2981, %v2977
      %v2985 = vsel %vm1481, %v2983, 0.0
      %v2986 = vsel %vm1482, %v2982, 0.0
      %v2987 = vsel %vm1483, %v2984, 0.0
      %s2988 = scalar_lea.vmem %s3, 56
      %v2989 = vld [vmem:[%s2988] sm:$0xff]
      %v2991 = vsel %vm1894, %v2989, 0
      %2993 = vmatprep.subr.mxu0 0.0
      %2994 = vmatpush1.msra.mxu0 0.0
      %2995 = vmatprep.subr.mxu0 0.0
      %2996 = vmatpush1.msra.mxu0 0.0
      %2997 = vmatprep.subr.mxu0 0.0
      %2998 = vmatpush1.msra.mxu0 0.0
      %2999 = vmatprep.subr.mxu0 0.0
      %3000 = vmatpush1.msra.mxu0 0.0
      %3001 = vmatprep.subr.mxu0 0.0
      %3002 = vmatpush1.msra.mxu0 0.0
      %3003 = vmatprep.subr.mxu0 0.0
      %3004 = vmatpush1.msra.mxu0 0.0
      %3005 = vmatprep.subr.mxu0 0.0
      %3006 = vmatpush1.msra.mxu0 0.0
      %3007 = vmatprep.subr.mxu0 0.0
      %3008 = vmatpush1.msra.mxu0 0.0
      %3009 = vmatprep.subr.mxu0 0.0
      %3010 = vmatpush1.msra.mxu0 0.0
      %3011 = vmatprep.subr.mxu0 0.0
      %3012 = vmatpush1.msra.mxu0 0.0
      %3013 = vmatprep.subr.mxu0 0.0
      %3014 = vmatpush1.msra.mxu0 0.0
      %3015 = vmatprep.subr.mxu0 0.0
      %3016 = vmatpush1.msra.mxu0 0.0
      %3017 = vmatprep.subr.mxu0 0.0
      %3018 = vmatpush1.msra.mxu0 0.0
      %3019 = vmatprep.subr.mxu0 0.0
      %3020 = vmatpush1.msra.mxu0 0.0
      %3021 = vmatprep.subr.mxu0 0.0
      %3022 = vmatpush1.msra.mxu0 0.0
      %3023 = vmatprep.subr.mxu0 %v2986
      %3024 = vmatpush1.msra.mxu0 %v2985
      %3025 = vmatprep.subr.mxu0 0.0
      %3026 = vmatpush2.msra.mxu0 0.0
      %3027 = vmatprep.subr.mxu0 0.0
      %3028 = vmatpush2.msra.mxu0 0.0
      %3029 = vmatprep.subr.mxu0 0.0
      %3030 = vmatpush2.msra.mxu0 0.0
      %3031 = vmatprep.subr.mxu0 0.0
      %3032 = vmatpush2.msra.mxu0 0.0
      %3033 = vmatprep.subr.mxu0 0.0
      %3034 = vmatpush2.msra.mxu0 0.0
      %3035 = vmatprep.subr.mxu0 0.0
      %3036 = vmatpush2.msra.mxu0 0.0
      %3037 = vmatprep.subr.mxu0 0.0
      %3038 = vmatpush2.msra.mxu0 0.0
      %3039 = vmatprep.subr.mxu0 0.0
      %3040 = vmatpush2.msra.mxu0 0.0
      %3041 = vmatprep.subr.mxu0 0.0
      %3042 = vmatpush2.msra.mxu0 0.0
      %3043 = vmatprep.subr.mxu0 0.0
      %3044 = vmatpush2.msra.mxu0 0.0
      %3045 = vmatprep.subr.mxu0 0.0
      %3046 = vmatpush2.msra.mxu0 0.0
      %3047 = vmatprep.subr.mxu0 0.0
      %3048 = vmatpush2.msra.mxu0 0.0
      %3049 = vmatprep.subr.mxu0 0.0
      %3050 = vmatpush2.msra.mxu0 0.0
      %3051 = vmatprep.subr.mxu0 0.0
      %3052 = vmatpush2.msra.mxu0 0.0
      %3053 = vmatprep.subr.mxu0 0.0
      %3054 = vmatpush2.msra.mxu0 0.0
      %3055 = vmatprep.subr.mxu0 0.0
      %3056 = vmatpush2.msra.mxu0 0.0
      %3057 = vmatprep.mubr.f32.mxu0 0.0
      %3058 = vmatmul.mubr.f32.gmra.mxu0 %v2991
      %v3059 = vpop.f32.mrf.mxu0
      %v3060 = vadd.f32 0.0, %v3059
      %v3061 = vpop.f32.mrf.mxu0
      %v3062 = vadd.f32 0.0, %v3061
      %3063 = vdwg.mxu0
      %3064 = vmatprep.subr.mxu0 0.0
      %3065 = vmatpush1.msra.mxu0 0.0
      %3066 = vmatprep.subr.mxu0 0.0
      %3067 = vmatpush1.msra.mxu0 0.0
      %3068 = vmatprep.subr.mxu0 0.0
      %3069 = vmatpush1.msra.mxu0 0.0
      %3070 = vmatprep.subr.mxu0 0.0
      %3071 = vmatpush1.msra.mxu0 0.0
      %3072 = vmatprep.subr.mxu0 0.0
      %3073 = vmatpush1.msra.mxu0 0.0
      %3074 = vmatprep.subr.mxu0 0.0
      %3075 = vmatpush1.msra.mxu0 0.0
      %3076 = vmatprep.subr.mxu0 0.0
      %3077 = vmatpush1.msra.mxu0 0.0
      %3078 = vmatprep.subr.mxu0 0.0
      %3079 = vmatpush1.msra.mxu0 0.0
      %3080 = vmatprep.subr.mxu0 0.0
      %3081 = vmatpush1.msra.mxu0 0.0
      %3082 = vmatprep.subr.mxu0 0.0
      %3083 = vmatpush1.msra.mxu0 0.0
      %3084 = vmatprep.subr.mxu0 0.0
      %3085 = vmatpush1.msra.mxu0 0.0
      %3086 = vmatprep.subr.mxu0 0.0
      %3087 = vmatpush1.msra.mxu0 0.0
      %3088 = vmatprep.subr.mxu0 0.0
      %3089 = vmatpush1.msra.mxu0 0.0
      %3090 = vmatprep.subr.mxu0 0.0
      %3091 = vmatpush1.msra.mxu0 0.0
      %3092 = vmatprep.subr.mxu0 0.0
      %3093 = vmatpush1.msra.mxu0 0.0
      %3094 = vmatprep.subr.mxu0 0.0
      %3095 = vmatpush1.msra.mxu0 %v2987
      %3096 = vmatprep.subr.mxu0 0.0
      %3097 = vmatpush2.msra.mxu0 0.0
      %3098 = vmatprep.subr.mxu0 0.0
      %3099 = vmatpush2.msra.mxu0 0.0
      %3100 = vmatprep.subr.mxu0 0.0
      %3101 = vmatpush2.msra.mxu0 0.0
      %3102 = vmatprep.subr.mxu0 0.0
      %3103 = vmatpush2.msra.mxu0 0.0
      %3104 = vmatprep.subr.mxu0 0.0
      %3105 = vmatpush2.msra.mxu0 0.0
      %3106 = vmatprep.subr.mxu0 0.0
      %3107 = vmatpush2.msra.mxu0 0.0
      %3108 = vmatprep.subr.mxu0 0.0
      %3109 = vmatpush2.msra.mxu0 0.0
      %3110 = vmatprep.subr.mxu0 0.0
      %3111 = vmatpush2.msra.mxu0 0.0
      %3112 = vmatprep.subr.mxu0 0.0
      %3113 = vmatpush2.msra.mxu0 0.0
      %3114 = vmatprep.subr.mxu0 0.0
      %3115 = vmatpush2.msra.mxu0 0.0
      %3116 = vmatprep.subr.mxu0 0.0
      %3117 = vmatpush2.msra.mxu0 0.0
      %3118 = vmatprep.subr.mxu0 0.0
      %3119 = vmatpush2.msra.mxu0 0.0
      %3120 = vmatprep.subr.mxu0 0.0
      %3121 = vmatpush2.msra.mxu0 0.0
      %3122 = vmatprep.subr.mxu0 0.0
      %3123 = vmatpush2.msra.mxu0 0.0
      %3124 = vmatprep.subr.mxu0 0.0
      %3125 = vmatpush2.msra.mxu0 0.0
      %3126 = vmatprep.subr.mxu0 0.0
      %3127 = vmatpush2.msra.mxu0 0.0
      %3128 = vmatprep.mubr.f32.mxu0 0.0
      %3129 = vmatmul.mubr.f32.gmra.mxu0 %v2991
      %v3130 = vpop.f32.mrf.mxu0
      %v3131 = vadd.f32 0.0, %v3130
      %v3132 = vpop.f32.mrf.mxu0
      %3133 = vdwg.mxu0
      %v3134 = vadd.f32 %v2973, %v3060
      %v3135 = vadd.f32 %v2974, %v3062
      %v3136 = vadd.f32 %v2975, %v3131
      %3137 = vrot.lane.b32.xlu0 %v1864, 103
      %v3138 = vpop.permute.xlu0 %3137
      %3139 = vrot.lane.b32.xlu0 %v1865, 103
      %v3140 = vpop.permute.xlu0 %3139
      %3141 = vrot.lane.b32.xlu0 %v1866, 103
      %v3142 = vpop.permute.xlu0 %3141
      %v3143 = vsel %vm1651, %v3140, %v3142
      %v3144 = vsel %vm1651, %v3138, %v3140
      %v3145 = vsel %vm1651, %v3142, %v3138
      %v3146 = vsel %vm1661, %v3144, 0.0
      %v3147 = vsel %vm1662, %v3143, 0.0
      %v3148 = vsel %vm1663, %v3145, 0.0
      %s3149 = scalar_lea.vmem %s3, 64
      %v3150 = vld [vmem:[%s3149] sm:$0xff]
      %v3152 = vsel %vm1894, %v3150, 0
      %3154 = vmatprep.subr.mxu0 0.0
      %3155 = vmatpush1.msra.mxu0 0.0
      %3156 = vmatprep.subr.mxu0 0.0
      %3157 = vmatpush1.msra.mxu0 0.0
      %3158 = vmatprep.subr.mxu0 0.0
      %3159 = vmatpush1.msra.mxu0 0.0
      %3160 = vmatprep.subr.mxu0 0.0
      %3161 = vmatpush1.msra.mxu0 0.0
      %3162 = vmatprep.subr.mxu0 0.0
      %3163 = vmatpush1.msra.mxu0 0.0
      %3164 = vmatprep.subr.mxu0 0.0
      %3165 = vmatpush1.msra.mxu0 0.0
      %3166 = vmatprep.subr.mxu0 0.0
      %3167 = vmatpush1.msra.mxu0 0.0
      %3168 = vmatprep.subr.mxu0 0.0
      %3169 = vmatpush1.msra.mxu0 0.0
      %3170 = vmatprep.subr.mxu0 0.0
      %3171 = vmatpush1.msra.mxu0 0.0
      %3172 = vmatprep.subr.mxu0 0.0
      %3173 = vmatpush1.msra.mxu0 0.0
      %3174 = vmatprep.subr.mxu0 0.0
      %3175 = vmatpush1.msra.mxu0 0.0
      %3176 = vmatprep.subr.mxu0 0.0
      %3177 = vmatpush1.msra.mxu0 0.0
      %3178 = vmatprep.subr.mxu0 0.0
      %3179 = vmatpush1.msra.mxu0 0.0
      %3180 = vmatprep.subr.mxu0 0.0
      %3181 = vmatpush1.msra.mxu0 0.0
      %3182 = vmatprep.subr.mxu0 0.0
      %3183 = vmatpush1.msra.mxu0 0.0
      %3184 = vmatprep.subr.mxu0 %v3147
      %3185 = vmatpush1.msra.mxu0 %v3146
      %3186 = vmatprep.subr.mxu0 0.0
      %3187 = vmatpush2.msra.mxu0 0.0
      %3188 = vmatprep.subr.mxu0 0.0
      %3189 = vmatpush2.msra.mxu0 0.0
      %3190 = vmatprep.subr.mxu0 0.0
      %3191 = vmatpush2.msra.mxu0 0.0
      %3192 = vmatprep.subr.mxu0 0.0
      %3193 = vmatpush2.msra.mxu0 0.0
      %3194 = vmatprep.subr.mxu0 0.0
      %3195 = vmatpush2.msra.mxu0 0.0
      %3196 = vmatprep.subr.mxu0 0.0
      %3197 = vmatpush2.msra.mxu0 0.0
      %3198 = vmatprep.subr.mxu0 0.0
      %3199 = vmatpush2.msra.mxu0 0.0
      %3200 = vmatprep.subr.mxu0 0.0
      %3201 = vmatpush2.msra.mxu0 0.0
      %3202 = vmatprep.subr.mxu0 0.0
      %3203 = vmatpush2.msra.mxu0 0.0
      %3204 = vmatprep.subr.mxu0 0.0
      %3205 = vmatpush2.msra.mxu0 0.0
      %3206 = vmatprep.subr.mxu0 0.0
      %3207 = vmatpush2.msra.mxu0 0.0
      %3208 = vmatprep.subr.mxu0 0.0
      %3209 = vmatpush2.msra.mxu0 0.0
      %3210 = vmatprep.subr.mxu0 0.0
      %3211 = vmatpush2.msra.mxu0 0.0
      %3212 = vmatprep.subr.mxu0 0.0
      %3213 = vmatpush2.msra.mxu0 0.0
      %3214 = vmatprep.subr.mxu0 0.0
      %3215 = vmatpush2.msra.mxu0 0.0
      %3216 = vmatprep.subr.mxu0 0.0
      %3217 = vmatpush2.msra.mxu0 0.0
      %3218 = vmatprep.mubr.f32.mxu0 0.0
      %3219 = vmatmul.mubr.f32.gmra.mxu0 %v3152
      %v3220 = vpop.f32.mrf.mxu0
      %v3221 = vadd.f32 0.0, %v3220
      %v3222 = vpop.f32.mrf.mxu0
      %v3223 = vadd.f32 0.0, %v3222
      %3224 = vdwg.mxu0
      %3225 = vmatprep.subr.mxu0 0.0
      %3226 = vmatpush1.msra.mxu0 0.0
      %3227 = vmatprep.subr.mxu0 0.0
      %3228 = vmatpush1.msra.mxu0 0.0
      %3229 = vmatprep.subr.mxu0 0.0
      %3230 = vmatpush1.msra.mxu0 0.0
      %3231 = vmatprep.subr.mxu0 0.0
      %3232 = vmatpush1.msra.mxu0 0.0
      %3233 = vmatprep.subr.mxu0 0.0
      %3234 = vmatpush1.msra.mxu0 0.0
      %3235 = vmatprep.subr.mxu0 0.0
      %3236 = vmatpush1.msra.mxu0 0.0
      %3237 = vmatprep.subr.mxu0 0.0
      %3238 = vmatpush1.msra.mxu0 0.0
      %3239 = vmatprep.subr.mxu0 0.0
      %3240 = vmatpush1.msra.mxu0 0.0
      %3241 = vmatprep.subr.mxu0 0.0
      %3242 = vmatpush1.msra.mxu0 0.0
      %3243 = vmatprep.subr.mxu0 0.0
      %3244 = vmatpush1.msra.mxu0 0.0
      %3245 = vmatprep.subr.mxu0 0.0
      %3246 = vmatpush1.msra.mxu0 0.0
      %3247 = vmatprep.subr.mxu0 0.0
      %3248 = vmatpush1.msra.mxu0 0.0
      %3249 = vmatprep.subr.mxu0 0.0
      %3250 = vmatpush1.msra.mxu0 0.0
      %3251 = vmatprep.subr.mxu0 0.0
      %3252 = vmatpush1.msra.mxu0 0.0
      %3253 = vmatprep.subr.mxu0 0.0
      %3254 = vmatpush1.msra.mxu0 0.0
      %3255 = vmatprep.subr.mxu0 0.0
      %3256 = vmatpush1.msra.mxu0 %v3148
      %3257 = vmatprep.subr.mxu0 0.0
      %3258 = vmatpush2.msra.mxu0 0.0
      %3259 = vmatprep.subr.mxu0 0.0
      %3260 = vmatpush2.msra.mxu0 0.0
      %3261 = vmatprep.subr.mxu0 0.0
      %3262 = vmatpush2.msra.mxu0 0.0
      %3263 = vmatprep.subr.mxu0 0.0
      %3264 = vmatpush2.msra.mxu0 0.0
      %3265 = vmatprep.subr.mxu0 0.0
      %3266 = vmatpush2.msra.mxu0 0.0
      %3267 = vmatprep.subr.mxu0 0.0
      %3268 = vmatpush2.msra.mxu0 0.0
      %3269 = vmatprep.subr.mxu0 0.0
      %3270 = vmatpush2.msra.mxu0 0.0
      %3271 = vmatprep.subr.mxu0 0.0
      %3272 = vmatpush2.msra.mxu0 0.0
      %3273 = vmatprep.subr.mxu0 0.0
      %3274 = vmatpush2.msra.mxu0 0.0
      %3275 = vmatprep.subr.mxu0 0.0
      %3276 = vmatpush2.msra.mxu0 0.0
      %3277 = vmatprep.subr.mxu0 0.0
      %3278 = vmatpush2.msra.mxu0 0.0
      %3279 = vmatprep.subr.mxu0 0.0
      %3280 = vmatpush2.msra.mxu0 0.0
      %3281 = vmatprep.subr.mxu0 0.0
      %3282 = vmatpush2.msra.mxu0 0.0
      %3283 = vmatprep.subr.mxu0 0.0
      %3284 = vmatpush2.msra.mxu0 0.0
      %3285 = vmatprep.subr.mxu0 0.0
      %3286 = vmatpush2.msra.mxu0 0.0
      %3287 = vmatprep.subr.mxu0 0.0
      %3288 = vmatpush2.msra.mxu0 0.0
      %3289 = vmatprep.mubr.f32.mxu0 0.0
      %3290 = vmatmul.mubr.f32.gmra.mxu0 %v3152
      %v3291 = vpop.f32.mrf.mxu0
      %v3292 = vadd.f32 0.0, %v3291
      %v3293 = vpop.f32.mrf.mxu0
      %3294 = vdwg.mxu0
      %v3295 = vadd.f32 %v3134, %v3221
      %v3296 = vadd.f32 %v3135, %v3223
      %v3297 = vadd.f32 %v3136, %v3292
      %v3298 = vld [vmem:[%s4] sm:$0xff]
      %3300 = vset.pattern.permute.xlu0 0
      %3301 = vperm.xlu0 %3300, %v3298
      %v3302 = vpop.permute.xlu0 %3301
      %v3304 = vadd.f32 %v3295, %v3302
      %v3305 = vadd.f32 %v3296, %v3302
      %v3306 = vadd.f32 %v3297, %v3302
      %v3307 = vmax.f32 %v3304, 0.0
      %v3308 = vmax.f32 %v3305, 0.0
      %v3309 = vmax.f32 %v3306, 0.0
      %3310 = vst [vmem:[%s224] sm:$0xff] %v3307
      %3311 = vst [vmem:[%s224 + $0x8] sm:$0xff] %v3308
      %3312 = vst [vmem:[%s224 + $0x10] sm:$0xff] %v3309
      %p3313 = scmp.lt.s32.totalorder %s16, 1
      %s3314 = scalar_select %p3313, %s16, 1
      %s3315 = smul.addr %s3314, 3
      %s3316 = smul.addr %s3315, 8
      %s3317 = scalar_lea.vmem %s5, %s3316
      // Predicated region
      $region41: #{_stacked2block_forward.1} parent=39 // pred_check
        %p3318 = pneg %p144
      $region42: #{_stacked2block_forward.1} parent=39 // pred_check_branch
        %3320 = sbr.rel (%p3318) target = $region44
      $region43: #{_stacked2block_forward.1} parent=39 // pred_region
        _
      $region44: #{_stacked2block_forward.1} parent=39 // pred_fallthru
        _
    $region40: #{_stacked2block_forward.1} parent=5 // pred_fallthru
      _
    %p3321 = scmp.le.s32.totalorder 2, %s11
    // Predicated region
    $region45: #{_stacked2block_forward.1} parent=5 // pred_check
      %p3322 = pneg %p3321
    $region46: #{_stacked2block_forward.1} parent=5 // pred_check_branch
      %3324 = sbr.rel (%p3322) target = $region48
    $region47: #{_stacked2block_forward.1} parent=5 // pred_region
      %s3325 = ssub.s32 %s11, 2
      // Predicated region
      $region49: #{_stacked2block_forward.1} parent=47 // pred_check
        %p3326 = pneg %p150
      $region50: #{_stacked2block_forward.1} parent=47 // pred_check_branch
        %3328 = sbr.rel (%p3326) target = $region52
      $region51: #{_stacked2block_forward.1} parent=47 // pred_region
        %p3329 = scmp.lt.s32.totalorder %s17, 1
        %s3330 = scalar_select %p3329, %s17, 1
        %s3331 = smul.addr %s3330, 3
        %s3332 = smul.addr %s3331, 8
        %s3333 = scalar_lea.vmem %s5, %s3332
      $region52: #{_stacked2block_forward.1} parent=47 // pred_fallthru
        _
    $region48: #{_stacked2block_forward.1} parent=5 // pred_fallthru
      _
  $region6: #{_stacked2block_forward.1} parent=0 // loop_footer
    %s15 = sadd.s32 1, %s11
  $region7: #{_stacked2block_forward.1} parent=0 // loop_footer_branch
    %10 = sbr.rel target = $region3
  $region8: #{_stacked2block_forward.1} parent=0 // loop_exit
    _

</llo_original>
